<compile_context>
chip_gen: v5e
topology: v5e:2x2
jax: 0.10.0
libtpu: 0.0.40
codegen_flags: <defaults>
</compile_context>

<pallas_src>
import functools
import math

import jax
import jax.numpy as jnp
from jax import lax
from jax.experimental import pallas as pl
from jax.experimental.pallas import tpu as pltpu


_LN_EPS = 1e-5   # PyTorch nn.LayerNorm default
_CHUNK = 8       # samples per inner attention chunk (sublane-aligned slices)


def _layer_norm(z, gamma, beta):
    mu = jnp.mean(z, axis=-1, keepdims=True)
    zc = z - mu
    var = jnp.mean(zc * zc, axis=-1, keepdims=True)
    return zc * lax.rsqrt(var + _LN_EPS) * gamma + beta


def _encoder_kernel(x_ref,
                    g1_ref, be1_ref,
                    wq_ref, bq_ref, wk_ref, bk_ref, wv_ref, bv_ref,
                    g2_ref, be2_ref,
                    w1_ref, b1_ref, w2_ref, b2_ref,
                    g3_ref, be3_ref,
                    o_ref,
                    q_sc, k_sc, v_sc, r_sc):
    x = x_ref[...].astype(jnp.float32)            # (TB, D)
    TB, D = x.shape
    scale = 1.0 / math.sqrt(D)

    # ---- sublayer 1: pre-LN + QKV projections (MXU, M = TB).
    h = _layer_norm(x, g1_ref[...], be1_ref[...])
    q_sc[...] = (jnp.dot(h, wq_ref[...], preferred_element_type=jnp.float32)
                 + bq_ref[...]) * scale           # fold 1/sqrt(D) into q
    k_sc[...] = jnp.dot(h, wk_ref[...], preferred_element_type=jnp.float32) + bk_ref[...]
    v_sc[...] = jnp.dot(h, wv_ref[...], preferred_element_type=jnp.float32) + bv_ref[...]

    # ---- feature-axis softmax attention, streamed sample-by-sample so each
    #      (D, D) score tile stays in vregs and never round-trips VMEM.
    #      scores[b,i,j] = q[b,i]*k[b,j]/sqrt(D); softmax over j; r = attn @ v
    row_iota = lax.broadcasted_iota(jnp.int32, (_CHUNK, 1), 0)   # hoisted

    def chunk_body(c, carry):
        row0 = pl.multiple_of(c * _CHUNK, _CHUNK)
        qc = q_sc[pl.ds(row0, _CHUNK), :]                 # (CH, D), pre-scaled
        kc = k_sc[pl.ds(row0, _CHUNK), :]
        vc = v_sc[pl.ds(row0, _CHUNK), :]
        kmx = jnp.max(kc, axis=-1, keepdims=True)         # (CH, 1)
        kmn = jnp.min(kc, axis=-1, keepdims=True)
        kcT = kc.T                                        # (D, CH): k as columns
        vcT = vc.T                                        # (D, CH): v as columns
        acc = jnp.zeros((_CHUNK, D), jnp.float32)
        for t in range(_CHUNK):                           # static unroll, 1 sample each
            q_row = qc[t:t + 1, :]                        # (1, D)
            # analytic row max: max_j q_i*k_j = q_i * (kmax if q_i >= 0 else kmin)
            m_row = q_row * jnp.where(q_row >= 0.0, kmx[t:t + 1], kmn[t:t + 1])
            k_col = kcT[:, t:t + 1]                       # (D, 1)
            v_col = vcT[:, t:t + 1]                       # (D, 1)
            e = jnp.exp(k_col * q_row - m_row)            # (D_j, D_i), 16 vregs
            num = jnp.sum(e * v_col, axis=0, keepdims=True)   # (1, D)
            den = jnp.sum(e, axis=0, keepdims=True)           # (1, D), >= 1
            r_row = num * pl.reciprocal(den, approx=True)
            acc = acc + jnp.where(row_iota == t, r_row, 0.0)  # place row t
        r_sc[pl.ds(row0, _CHUNK), :] = acc
        return carry

    lax.fori_loop(0, TB // _CHUNK, chunk_body, 0)

    x1 = x + r_sc[...]                                    # dropout = identity (eval)

    # ---- sublayer 2: pre-LN + FFN (Linear -> ReLU -> Linear) + residual
    h2 = _layer_norm(x1, g2_ref[...], be2_ref[...])
    f = jnp.dot(h2, w1_ref[...], preferred_element_type=jnp.float32) + b1_ref[...]
    f = jnp.maximum(f, 0.0)
    f = jnp.dot(f, w2_ref[...], preferred_element_type=jnp.float32) + b2_ref[...]
    x2 = x1 + f

    # ---- final LayerNorm
    o_ref[...] = _layer_norm(x2, g3_ref[...], be3_ref[...]).astype(o_ref.dtype)


@functools.partial(jax.jit, static_argnames=("block_rows",))
def transformer_encoder_forward(x, params, *, block_rows=128):
    """x: (B, D); params: dict of LN / linear weights (PyTorch layout)."""
    B, D = x.shape
    F = params["w1"].shape[0]
    TB = min(block_rows, B)
    if B % TB != 0 or TB % _CHUNK != 0:
        raise ValueError(f"batch {B} must be a multiple of the row tile {TB}, "
                         f"and the row tile a multiple of {_CHUNK}")
    grid = (B // TB,)

    # Pre-transpose weights so the hot path is plain row-major matmuls.
    wq_t = params["wq"].T                         # (D, D)
    wk_t = params["wk"].T                         # (D, D)
    wv_t = params["wv"].T                         # (D, D)
    w1_t = params["w1"].T                         # (D, F)
    w2_t = params["w2"].T                         # (F, D)

    def row(a):
        return a.reshape(1, -1)

    const = lambda i: (0, 0)
    tile = lambda i: (i, 0)

    flops = int(B * (11 * D * D + 4 * D * F + 40 * D))
    transcendentals = int(B * D * D)
    bytes_accessed = int(4 * (2 * B * D + 3 * D * D + 2 * D * F + 10 * D + 2 * F))

    out = pl.pallas_call(
        _encoder_kernel,
        out_shape=jax.ShapeDtypeStruct((B, D), x.dtype),
        grid_spec=pltpu.PrefetchScalarGridSpec(
            num_scalar_prefetch=0,
            grid=grid,
            in_specs=[
                pl.BlockSpec((TB, D), tile),      # x tile
                pl.BlockSpec((1, D), const),      # LN1 gamma
                pl.BlockSpec((1, D), const),      # LN1 beta
                pl.BlockSpec((D, D), const),      # Wq^T
                pl.BlockSpec((1, D), const),      # bq
                pl.BlockSpec((D, D), const),      # Wk^T
                pl.BlockSpec((1, D), const),      # bk
                pl.BlockSpec((D, D), const),      # Wv^T
                pl.BlockSpec((1, D), const),      # bv
                pl.BlockSpec((1, D), const),      # LN2 gamma
                pl.BlockSpec((1, D), const),      # LN2 beta
                pl.BlockSpec((D, F), const),      # W1^T
                pl.BlockSpec((1, F), const),      # b1
                pl.BlockSpec((F, D), const),      # W2^T
                pl.BlockSpec((1, D), const),      # b2
                pl.BlockSpec((1, D), const),      # LN3 gamma
                pl.BlockSpec((1, D), const),      # LN3 beta
            ],
            out_specs=pl.BlockSpec((TB, D), tile),
            scratch_shapes=[
                pltpu.VMEM((TB, D), jnp.float32),   # q (pre-scaled)
                pltpu.VMEM((TB, D), jnp.float32),   # k
                pltpu.VMEM((TB, D), jnp.float32),   # v
                pltpu.VMEM((TB, D), jnp.float32),   # attention output r
            ],
        ),
        compiler_params=pltpu.CompilerParams(
            dimension_semantics=("parallel",),
            vmem_limit_bytes=32 * 1024 * 1024,
        ),
        cost_estimate=pl.CostEstimate(
            flops=flops,
            transcendentals=transcendentals,
            bytes_accessed=bytes_accessed,
        ),
    )(
        x,
        row(params["ln1_g"]), row(params["ln1_b"]),
        wq_t, row(params["bq"]),
        wk_t, row(params["bk"]),
        wv_t, row(params["bv"]),
        row(params["ln2_g"]), row(params["ln2_b"]),
        w1_t, row(params["b1"]),
        w2_t, row(params["b2"]),
        row(params["ln3_g"]), row(params["ln3_b"]),
    )
    return out


def _reference(x, p):
    """Pure-JAX mirror of the PyTorch TransformerEncoder forward (eval mode)."""
    hp = jax.lax.Precision.HIGHEST

    def ln(z, g, b):
        mu = jnp.mean(z, axis=-1, keepdims=True)
        var = jnp.mean((z - mu) ** 2, axis=-1, keepdims=True)
        return (z - mu) / jnp.sqrt(var + _LN_EPS) * g + b

    D = x.shape[-1]
    h = ln(x, p["ln1_g"], p["ln1_b"])
    q = jnp.dot(h, p["wq"].T, precision=hp) + p["bq"]
    k = jnp.dot(h, p["wk"].T, precision=hp) + p["bk"]
    v = jnp.dot(h, p["wv"].T, precision=hp) + p["bv"]

    s = q[:, :, None] * k[:, None, :] / jnp.sqrt(jnp.float32(D))
    attn = jax.nn.softmax(s, axis=-1)
    r = jnp.einsum("bij,bj->bi", attn, v, precision=hp)
    x1 = x + r

    h2 = ln(x1, p["ln2_g"], p["ln2_b"])
    f = jnp.maximum(jnp.dot(h2, p["w1"].T, precision=hp) + p["b1"], 0.0)
    f = jnp.dot(f, p["w2"].T, precision=hp) + p["b2"]
    x2 = x1 + f
    return ln(x2, p["ln3_g"], p["ln3_b"])


if __name__ == "__main__":
    # size (model dim) = 128, ff_size = 256, head = 1, batch = 256 rows.
    B, D, F = 256, 128, 256
    key = jax.random.PRNGKey(0)
    keys = jax.random.split(key, 18)

    x = jax.random.normal(keys[0], (B, D), dtype=jnp.float32)

    lim_d = 1.0 / math.sqrt(D)
    lim_f = 1.0 / math.sqrt(F)
    params = dict(
        ln1_g=1.0 + 0.1 * jax.random.normal(keys[1], (D,), jnp.float32),
        ln1_b=0.1 * jax.random.normal(keys[2], (D,), jnp.float32),
        wq=jax.random.uniform(keys[3], (D, D), jnp.float32, -lim_d, lim_d),
        bq=jax.random.uniform(keys[4], (D,), jnp.float32, -lim_d, lim_d),
        wk=jax.random.uniform(keys[5], (D, D), jnp.float32, -lim_d, lim_d),
        bk=jax.random.uniform(keys[6], (D,), jnp.float32, -lim_d, lim_d),
        wv=jax.random.uniform(keys[7], (D, D), jnp.float32, -lim_d, lim_d),
        bv=jax.random.uniform(keys[8], (D,), jnp.float32, -lim_d, lim_d),
        ln2_g=1.0 + 0.1 * jax.random.normal(keys[9], (D,), jnp.float32),
        ln2_b=0.1 * jax.random.normal(keys[10], (D,), jnp.float32),
        w1=jax.random.uniform(keys[11], (F, D), jnp.float32, -lim_d, lim_d),
        b1=jax.random.uniform(keys[12], (F,), jnp.float32, -lim_d, lim_d),
        w2=jax.random.uniform(keys[13], (D, F), jnp.float32, -lim_f, lim_f),
        b2=jax.random.uniform(keys[14], (D,), jnp.float32, -lim_f, lim_f),
        ln3_g=1.0 + 0.1 * jax.random.normal(keys[15], (D,), jnp.float32),
        ln3_b=0.1 * jax.random.normal(keys[16], (D,), jnp.float32),
    )

    out = transformer_encoder_forward(x, params)
    out = jax.block_until_ready(out)

    ref = _reference(x, params)
    assert out.shape == (B, D)
    max_err = float(jnp.max(jnp.abs(out - ref)))
    assert jnp.allclose(out, ref, atol=3e-3, rtol=3e-3), (
        f"mismatch vs reference, max abs err = {max_err}")

    print("KERNEL_OK")
</pallas_src>

<mosaic_0001>
module attributes {stable_mosaic.version = 11 : i64} {
  func.func @_encoder_kernel(%arg0: i32, %arg1: memref<128x128xf32, #tpu.memory_space<vmem>>, %arg2: memref<1x128xf32, #tpu.memory_space<vmem>>, %arg3: memref<1x128xf32, #tpu.memory_space<vmem>>, %arg4: memref<128x128xf32, #tpu.memory_space<vmem>>, %arg5: memref<1x128xf32, #tpu.memory_space<vmem>>, %arg6: memref<128x128xf32, #tpu.memory_space<vmem>>, %arg7: memref<1x128xf32, #tpu.memory_space<vmem>>, %arg8: memref<128x128xf32, #tpu.memory_space<vmem>>, %arg9: memref<1x128xf32, #tpu.memory_space<vmem>>, %arg10: memref<1x128xf32, #tpu.memory_space<vmem>>, %arg11: memref<1x128xf32, #tpu.memory_space<vmem>>, %arg12: memref<128x256xf32, #tpu.memory_space<vmem>>, %arg13: memref<1x256xf32, #tpu.memory_space<vmem>>, %arg14: memref<256x128xf32, #tpu.memory_space<vmem>>, %arg15: memref<1x128xf32, #tpu.memory_space<vmem>>, %arg16: memref<1x128xf32, #tpu.memory_space<vmem>>, %arg17: memref<1x128xf32, #tpu.memory_space<vmem>>, %arg18: memref<128x128xf32, #tpu.memory_space<vmem>>, %arg19: memref<128x128xf32, #tpu.memory_space<vmem>>, %arg20: memref<128x128xf32, #tpu.memory_space<vmem>>, %arg21: memref<128x128xf32, #tpu.memory_space<vmem>>, %arg22: memref<128x128xf32, #tpu.memory_space<vmem>>) attributes {dimension_semantics = [#tpu.dimension_semantics<parallel>], iteration_bounds = array<i64: 2>, scalar_prefetch = 0 : i64, scratch_operands = 4 : i64, tpu.core_type = #tpu.core_type<tc>, window_params = [{transform_indices = @transform_0, window_bounds = array<i64: 128, 128>}, {pipeline_mode = #tpu.pipeline_mode<synchronous>, transform_indices = @transform_1, window_bounds = array<i64: 1, 128>}, {pipeline_mode = #tpu.pipeline_mode<synchronous>, transform_indices = @transform_2, window_bounds = array<i64: 1, 128>}, {pipeline_mode = #tpu.pipeline_mode<synchronous>, transform_indices = @transform_3, window_bounds = array<i64: 128, 128>}, {pipeline_mode = #tpu.pipeline_mode<synchronous>, transform_indices = @transform_4, window_bounds = array<i64: 1, 128>}, {pipeline_mode = #tpu.pipeline_mode<synchronous>, transform_indices = @transform_5, window_bounds = array<i64: 128, 128>}, {pipeline_mode = #tpu.pipeline_mode<synchronous>, transform_indices = @transform_6, window_bounds = array<i64: 1, 128>}, {pipeline_mode = #tpu.pipeline_mode<synchronous>, transform_indices = @transform_7, window_bounds = array<i64: 128, 128>}, {pipeline_mode = #tpu.pipeline_mode<synchronous>, transform_indices = @transform_8, window_bounds = array<i64: 1, 128>}, {pipeline_mode = #tpu.pipeline_mode<synchronous>, transform_indices = @transform_9, window_bounds = array<i64: 1, 128>}, {pipeline_mode = #tpu.pipeline_mode<synchronous>, transform_indices = @transform_10, window_bounds = array<i64: 1, 128>}, {pipeline_mode = #tpu.pipeline_mode<synchronous>, transform_indices = @transform_11, window_bounds = array<i64: 128, 256>}, {pipeline_mode = #tpu.pipeline_mode<synchronous>, transform_indices = @transform_12, window_bounds = array<i64: 1, 256>}, {pipeline_mode = #tpu.pipeline_mode<synchronous>, transform_indices = @transform_13, window_bounds = array<i64: 256, 128>}, {pipeline_mode = #tpu.pipeline_mode<synchronous>, transform_indices = @transform_14, window_bounds = array<i64: 1, 128>}, {pipeline_mode = #tpu.pipeline_mode<synchronous>, transform_indices = @transform_15, window_bounds = array<i64: 1, 128>}, {pipeline_mode = #tpu.pipeline_mode<synchronous>, transform_indices = @transform_16, window_bounds = array<i64: 1, 128>}, {transform_indices = @transform_17, window_bounds = array<i64: 128, 128>}]} {
    %c0 = arith.constant 0 : index
    %c0_0 = arith.constant 0 : index
    %0 = vector.load %arg1[%c0, %c0_0] : memref<128x128xf32, #tpu.memory_space<vmem>>, vector<128x128xf32>
    %c0_1 = arith.constant 0 : index
    %c0_2 = arith.constant 0 : index
    %1 = vector.load %arg2[%c0_1, %c0_2] : memref<1x128xf32, #tpu.memory_space<vmem>>, vector<1x128xf32>
    %c0_3 = arith.constant 0 : index
    %c0_4 = arith.constant 0 : index
    %2 = vector.load %arg3[%c0_3, %c0_4] : memref<1x128xf32, #tpu.memory_space<vmem>>, vector<1x128xf32>
    %cst = arith.constant dense<0.000000e+00> : vector<128xf32>
    %3 = vector.multi_reduction <add>, %0, %cst [1] : vector<128x128xf32> to vector<128xf32>
    %4 = vector.shape_cast %3 : vector<128xf32> to vector<128x1xf32>
    %cst_5 = arith.constant 1.280000e+02 : f32
    %5 = vector.broadcast %cst_5 : f32 to vector<128x1xf32>
    %6 = arith.divf %4, %5 : vector<128x1xf32>
    %7 = vector.broadcast %6 : vector<128x1xf32> to vector<128x128xf32>
    %8 = arith.subf %0, %7 : vector<128x128xf32>
    %9 = arith.mulf %8, %8 : vector<128x128xf32>
    %cst_6 = arith.constant dense<0.000000e+00> : vector<128xf32>
    %10 = vector.multi_reduction <add>, %9, %cst_6 [1] : vector<128x128xf32> to vector<128xf32>
    %11 = vector.shape_cast %10 : vector<128xf32> to vector<128x1xf32>
    %cst_7 = arith.constant 1.280000e+02 : f32
    %12 = vector.broadcast %cst_7 : f32 to vector<128x1xf32>
    %13 = arith.divf %11, %12 : vector<128x1xf32>
    %cst_8 = arith.constant 9.99999974E-6 : f32
    %14 = vector.broadcast %cst_8 : f32 to vector<128x1xf32>
    %15 = arith.addf %13, %14 : vector<128x1xf32>
    %16 = math.rsqrt %15 : vector<128x1xf32>
    %17 = vector.broadcast %16 : vector<128x1xf32> to vector<128x128xf32>
    %18 = arith.mulf %8, %17 : vector<128x128xf32>
    %19 = vector.broadcast %1 : vector<1x128xf32> to vector<128x128xf32>
    %20 = arith.mulf %18, %19 : vector<128x128xf32>
    %21 = vector.broadcast %2 : vector<1x128xf32> to vector<128x128xf32>
    %22 = arith.addf %20, %21 : vector<128x128xf32>
    %c0_9 = arith.constant 0 : index
    %c0_10 = arith.constant 0 : index
    %23 = vector.load %arg4[%c0_9, %c0_10] : memref<128x128xf32, #tpu.memory_space<vmem>>, vector<128x128xf32>
    %cst_11 = arith.constant dense<0.000000e+00> : vector<128x128xf32>
    %24 = tpu.matmul %22, %23, %cst_11 {dimension_numbers = #tpu.dot_dimension_numbers<[1], [0], [0], [1], [0, 0, 1, 1], [], []>} : vector<128x128xf32>, vector<128x128xf32>, vector<128x128xf32> -> vector<128x128xf32>
    %c0_12 = arith.constant 0 : index
    %c0_13 = arith.constant 0 : index
    %25 = vector.load %arg5[%c0_12, %c0_13] : memref<1x128xf32, #tpu.memory_space<vmem>>, vector<1x128xf32>
    %26 = vector.broadcast %25 : vector<1x128xf32> to vector<128x128xf32>
    %27 = arith.addf %24, %26 : vector<128x128xf32>
    %cst_14 = arith.constant 0.0883883461 : f32
    %28 = vector.broadcast %cst_14 : f32 to vector<128x128xf32>
    %29 = arith.mulf %27, %28 : vector<128x128xf32>
    %c0_15 = arith.constant 0 : index
    %c0_16 = arith.constant 0 : index
    %30 = vector.load %arg19[%c0_15, %c0_16] : memref<128x128xf32, #tpu.memory_space<vmem>>, vector<128x128xf32>
    tpu.vector_store %arg19[%c0_15, %c0_16], %29 {strides = array<i32>} : memref<128x128xf32, #tpu.memory_space<vmem>>, vector<128x128xf32>,
    %c0_17 = arith.constant 0 : index
    %c0_18 = arith.constant 0 : index
    %31 = vector.load %arg6[%c0_17, %c0_18] : memref<128x128xf32, #tpu.memory_space<vmem>>, vector<128x128xf32>
    %cst_19 = arith.constant dense<0.000000e+00> : vector<128x128xf32>
    %32 = tpu.matmul %22, %31, %cst_19 {dimension_numbers = #tpu.dot_dimension_numbers<[1], [0], [0], [1], [0, 0, 1, 1], [], []>} : vector<128x128xf32>, vector<128x128xf32>, vector<128x128xf32> -> vector<128x128xf32>
    %c0_20 = arith.constant 0 : index
    %c0_21 = arith.constant 0 : index
    %33 = vector.load %arg7[%c0_20, %c0_21] : memref<1x128xf32, #tpu.memory_space<vmem>>, vector<1x128xf32>
    %34 = vector.broadcast %33 : vector<1x128xf32> to vector<128x128xf32>
    %35 = arith.addf %32, %34 : vector<128x128xf32>
    %c0_22 = arith.constant 0 : index
    %c0_23 = arith.constant 0 : index
    %36 = vector.load %arg20[%c0_22, %c0_23] : memref<128x128xf32, #tpu.memory_space<vmem>>, vector<128x128xf32>
    tpu.vector_store %arg20[%c0_22, %c0_23], %35 {strides = array<i32>} : memref<128x128xf32, #tpu.memory_space<vmem>>, vector<128x128xf32>,
    %c0_24 = arith.constant 0 : index
    %c0_25 = arith.constant 0 : index
    %37 = vector.load %arg8[%c0_24, %c0_25] : memref<128x128xf32, #tpu.memory_space<vmem>>, vector<128x128xf32>
    %cst_26 = arith.constant dense<0.000000e+00> : vector<128x128xf32>
    %38 = tpu.matmul %22, %37, %cst_26 {dimension_numbers = #tpu.dot_dimension_numbers<[1], [0], [0], [1], [0, 0, 1, 1], [], []>} : vector<128x128xf32>, vector<128x128xf32>, vector<128x128xf32> -> vector<128x128xf32>
    %c0_27 = arith.constant 0 : index
    %c0_28 = arith.constant 0 : index
    %39 = vector.load %arg9[%c0_27, %c0_28] : memref<1x128xf32, #tpu.memory_space<vmem>>, vector<1x128xf32>
    %40 = vector.broadcast %39 : vector<1x128xf32> to vector<128x128xf32>
    %41 = arith.addf %38, %40 : vector<128x128xf32>
    %c0_29 = arith.constant 0 : index
    %c0_30 = arith.constant 0 : index
    %42 = vector.load %arg21[%c0_29, %c0_30] : memref<128x128xf32, #tpu.memory_space<vmem>>, vector<128x128xf32>
    tpu.vector_store %arg21[%c0_29, %c0_30], %41 {strides = array<i32>} : memref<128x128xf32, #tpu.memory_space<vmem>>, vector<128x128xf32>,
    %43 = tpu.iota {dimensions = array<i32: 0>} : vector<8x1xi32>
    %c0_i32 = arith.constant 0 : i32
    %c16_i32 = arith.constant 16 : i32
    %44 = arith.addi %c0_i32, %c16_i32 : i32
    %c1_i32 = arith.constant 1 : i32
    scf.for %arg23 = %c0_i32 to %44 step %c1_i32  : i32 {
      %c8_i32 = arith.constant 8 : i32
      %105 = arith.muli %arg23, %c8_i32 : i32
      %106 = tpu.assume_multiple %105, 8 : i32
      %107 = arith.index_cast %106 : i32 to index
      %c0_65 = arith.constant 0 : index
      %108 = vector.load %arg19[%107, %c0_65] : memref<128x128xf32, #tpu.memory_space<vmem>>, vector<8x128xf32>
      %109 = arith.index_cast %106 : i32 to index
      %c0_66 = arith.constant 0 : index
      %110 = vector.load %arg20[%109, %c0_66] : memref<128x128xf32, #tpu.memory_space<vmem>>, vector<8x128xf32>
      %111 = arith.index_cast %106 : i32 to index
      %c0_67 = arith.constant 0 : index
      %112 = vector.load %arg21[%111, %c0_67] : memref<128x128xf32, #tpu.memory_space<vmem>>, vector<8x128xf32>
      %cst_68 = arith.constant dense<0xFF800000> : vector<8xf32>
      %113 = vector.multi_reduction <maximumf>, %110, %cst_68 [1] : vector<8x128xf32> to vector<8xf32>
      %114 = vector.shape_cast %113 : vector<8xf32> to vector<8x1xf32>
      %cst_69 = arith.constant dense<0x7F800000> : vector<8xf32>
      %115 = vector.multi_reduction <minimumf>, %110, %cst_69 [1] : vector<8x128xf32> to vector<8xf32>
      %116 = vector.shape_cast %115 : vector<8xf32> to vector<8x1xf32>
      %117 = tpu.transpose %110, [1, 0] : vector<8x128xf32> -> vector<128x8xf32>
      %118 = tpu.transpose %112, [1, 0] : vector<8x128xf32> -> vector<128x8xf32>
      %cst_70 = arith.constant 0.000000e+00 : f32
      %119 = vector.broadcast %cst_70 : f32 to vector<8x128xf32>
      %120 = vector.extract_strided_slice %108 {offsets = [0, 0], sizes = [1, 128], strides = [1, 1]} : vector<8x128xf32> to vector<1x128xf32>
      %cst_71 = arith.constant 0.000000e+00 : f32
      %121 = vector.broadcast %cst_71 : f32 to vector<1x128xf32>
      %122 = arith.cmpf oge, %120, %121 : vector<1x128xf32>
      %123 = vector.extract_strided_slice %114 {offsets = [0, 0], sizes = [1, 1], strides = [1, 1]} : vector<8x1xf32> to vector<1x1xf32>
      %124 = vector.extract_strided_slice %116 {offsets = [0, 0], sizes = [1, 1], strides = [1, 1]} : vector<8x1xf32> to vector<1x1xf32>
      %125 = vector.shape_cast %123 : vector<1x1xf32> to vector<1x1xf32>
      %126 = vector.broadcast %125 : vector<1x1xf32> to vector<1x128xf32>
      %127 = vector.shape_cast %124 : vector<1x1xf32> to vector<1x1xf32>
      %128 = vector.broadcast %127 : vector<1x1xf32> to vector<1x128xf32>
      %129 = arith.select %122, %126, %128 : vector<1x128xi1>, vector<1x128xf32>
      %130 = arith.mulf %120, %129 : vector<1x128xf32>
      %131 = vector.extract_strided_slice %117 {offsets = [0, 0], sizes = [128, 1], strides = [1, 1]} : vector<128x8xf32> to vector<128x1xf32>
      %132 = vector.extract_strided_slice %118 {offsets = [0, 0], sizes = [128, 1], strides = [1, 1]} : vector<128x8xf32> to vector<128x1xf32>
      %133 = vector.broadcast %131 : vector<128x1xf32> to vector<128x128xf32>
      %134 = vector.broadcast %120 : vector<1x128xf32> to vector<128x128xf32>
      %135 = arith.mulf %133, %134 : vector<128x128xf32>
      %136 = vector.broadcast %130 : vector<1x128xf32> to vector<128x128xf32>
      %137 = arith.subf %135, %136 : vector<128x128xf32>
      %138 = math.exp %137 : vector<128x128xf32>
      %139 = vector.broadcast %132 : vector<128x1xf32> to vector<128x128xf32>
      %140 = arith.mulf %138, %139 : vector<128x128xf32>
      %cst_72 = arith.constant dense<0.000000e+00> : vector<128xf32>
      %141 = vector.multi_reduction <add>, %140, %cst_72 [0] : vector<128x128xf32> to vector<128xf32>
      %142 = vector.shape_cast %141 : vector<128xf32> to vector<1x128xf32>
      %cst_73 = arith.constant dense<0.000000e+00> : vector<128xf32>
      %143 = vector.multi_reduction <add>, %138, %cst_73 [0] : vector<128x128xf32> to vector<128xf32>
      %144 = vector.shape_cast %143 : vector<128xf32> to vector<1x128xf32>
      %145 = tpu.reciprocal %144 {approx = true} : vector<1x128xf32> -> vector<1x128xf32>
      %146 = arith.mulf %142, %145 : vector<1x128xf32>
      %c0_i32_74 = arith.constant 0 : i32
      %147 = vector.broadcast %c0_i32_74 : i32 to vector<8x1xi32>
      %148 = arith.cmpi eq, %43, %147 : vector<8x1xi32>
      %cst_75 = arith.constant 0.000000e+00 : f32
      %149 = vector.shape_cast %148 : vector<8x1xi1> to vector<8x1xi1>
      %150 = vector.broadcast %149 : vector<8x1xi1> to vector<8x128xi1>
      %151 = vector.shape_cast %146 : vector<1x128xf32> to vector<1x128xf32>
      %152 = vector.broadcast %151 : vector<1x128xf32> to vector<8x128xf32>
      %153 = vector.broadcast %cst_75 : f32 to vector<8x128xf32>
      %154 = arith.select %150, %152, %153 : vector<8x128xi1>, vector<8x128xf32>
      %155 = arith.addf %119, %154 : vector<8x128xf32>
      %156 = vector.extract_strided_slice %108 {offsets = [1, 0], sizes = [1, 128], strides = [1, 1]} : vector<8x128xf32> to vector<1x128xf32>
      %cst_76 = arith.constant 0.000000e+00 : f32
      %157 = vector.broadcast %cst_76 : f32 to vector<1x128xf32>
      %158 = arith.cmpf oge, %156, %157 : vector<1x128xf32>
      %159 = vector.extract_strided_slice %114 {offsets = [1, 0], sizes = [1, 1], strides = [1, 1]} : vector<8x1xf32> to vector<1x1xf32>
      %160 = vector.extract_strided_slice %116 {offsets = [1, 0], sizes = [1, 1], strides = [1, 1]} : vector<8x1xf32> to vector<1x1xf32>
      %161 = vector.shape_cast %159 : vector<1x1xf32> to vector<1x1xf32>
      %162 = vector.broadcast %161 : vector<1x1xf32> to vector<1x128xf32>
      %163 = vector.shape_cast %160 : vector<1x1xf32> to vector<1x1xf32>
      %164 = vector.broadcast %163 : vector<1x1xf32> to vector<1x128xf32>
      %165 = arith.select %158, %162, %164 : vector<1x128xi1>, vector<1x128xf32>
      %166 = arith.mulf %156, %165 : vector<1x128xf32>
      %167 = vector.extract_strided_slice %117 {offsets = [0, 1], sizes = [128, 1], strides = [1, 1]} : vector<128x8xf32> to vector<128x1xf32>
      %168 = vector.extract_strided_slice %118 {offsets = [0, 1], sizes = [128, 1], strides = [1, 1]} : vector<128x8xf32> to vector<128x1xf32>
      %169 = vector.broadcast %167 : vector<128x1xf32> to vector<128x128xf32>
      %170 = vector.broadcast %156 : vector<1x128xf32> to vector<128x128xf32>
      %171 = arith.mulf %169, %170 : vector<128x128xf32>
      %172 = vector.broadcast %166 : vector<1x128xf32> to vector<128x128xf32>
      %173 = arith.subf %171, %172 : vector<128x128xf32>
      %174 = math.exp %173 : vector<128x128xf32>
      %175 = vector.broadcast %168 : vector<128x1xf32> to vector<128x128xf32>
      %176 = arith.mulf %174, %175 : vector<128x128xf32>
      %cst_77 = arith.constant dense<0.000000e+00> : vector<128xf32>
      %177 = vector.multi_reduction <add>, %176, %cst_77 [0] : vector<128x128xf32> to vector<128xf32>
      %178 = vector.shape_cast %177 : vector<128xf32> to vector<1x128xf32>
      %cst_78 = arith.constant dense<0.000000e+00> : vector<128xf32>
      %179 = vector.multi_reduction <add>, %174, %cst_78 [0] : vector<128x128xf32> to vector<128xf32>
      %180 = vector.shape_cast %179 : vector<128xf32> to vector<1x128xf32>
      %181 = tpu.reciprocal %180 {approx = true} : vector<1x128xf32> -> vector<1x128xf32>
      %182 = arith.mulf %178, %181 : vector<1x128xf32>
      %c1_i32_79 = arith.constant 1 : i32
      %183 = vector.broadcast %c1_i32_79 : i32 to vector<8x1xi32>
      %184 = arith.cmpi eq, %43, %183 : vector<8x1xi32>
      %cst_80 = arith.constant 0.000000e+00 : f32
      %185 = vector.shape_cast %184 : vector<8x1xi1> to vector<8x1xi1>
      %186 = vector.broadcast %185 : vector<8x1xi1> to vector<8x128xi1>
      %187 = vector.shape_cast %182 : vector<1x128xf32> to vector<1x128xf32>
      %188 = vector.broadcast %187 : vector<1x128xf32> to vector<8x128xf32>
      %189 = vector.broadcast %cst_80 : f32 to vector<8x128xf32>
      %190 = arith.select %186, %188, %189 : vector<8x128xi1>, vector<8x128xf32>
      %191 = arith.addf %155, %190 : vector<8x128xf32>
      %192 = vector.extract_strided_slice %108 {offsets = [2, 0], sizes = [1, 128], strides = [1, 1]} : vector<8x128xf32> to vector<1x128xf32>
      %cst_81 = arith.constant 0.000000e+00 : f32
      %193 = vector.broadcast %cst_81 : f32 to vector<1x128xf32>
      %194 = arith.cmpf oge, %192, %193 : vector<1x128xf32>
      %195 = vector.extract_strided_slice %114 {offsets = [2, 0], sizes = [1, 1], strides = [1, 1]} : vector<8x1xf32> to vector<1x1xf32>
      %196 = vector.extract_strided_slice %116 {offsets = [2, 0], sizes = [1, 1], strides = [1, 1]} : vector<8x1xf32> to vector<1x1xf32>
      %197 = vector.shape_cast %195 : vector<1x1xf32> to vector<1x1xf32>
      %198 = vector.broadcast %197 : vector<1x1xf32> to vector<1x128xf32>
      %199 = vector.shape_cast %196 : vector<1x1xf32> to vector<1x1xf32>
      %200 = vector.broadcast %199 : vector<1x1xf32> to vector<1x128xf32>
      %201 = arith.select %194, %198, %200 : vector<1x128xi1>, vector<1x128xf32>
      %202 = arith.mulf %192, %201 : vector<1x128xf32>
      %203 = vector.extract_strided_slice %117 {offsets = [0, 2], sizes = [128, 1], strides = [1, 1]} : vector<128x8xf32> to vector<128x1xf32>
      %204 = vector.extract_strided_slice %118 {offsets = [0, 2], sizes = [128, 1], strides = [1, 1]} : vector<128x8xf32> to vector<128x1xf32>
      %205 = vector.broadcast %203 : vector<128x1xf32> to vector<128x128xf32>
      %206 = vector.broadcast %192 : vector<1x128xf32> to vector<128x128xf32>
      %207 = arith.mulf %205, %206 : vector<128x128xf32>
      %208 = vector.broadcast %202 : vector<1x128xf32> to vector<128x128xf32>
      %209 = arith.subf %207, %208 : vector<128x128xf32>
      %210 = math.exp %209 : vector<128x128xf32>
      %211 = vector.broadcast %204 : vector<128x1xf32> to vector<128x128xf32>
      %212 = arith.mulf %210, %211 : vector<128x128xf32>
      %cst_82 = arith.constant dense<0.000000e+00> : vector<128xf32>
      %213 = vector.multi_reduction <add>, %212, %cst_82 [0] : vector<128x128xf32> to vector<128xf32>
      %214 = vector.shape_cast %213 : vector<128xf32> to vector<1x128xf32>
      %cst_83 = arith.constant dense<0.000000e+00> : vector<128xf32>
      %215 = vector.multi_reduction <add>, %210, %cst_83 [0] : vector<128x128xf32> to vector<128xf32>
      %216 = vector.shape_cast %215 : vector<128xf32> to vector<1x128xf32>
      %217 = tpu.reciprocal %216 {approx = true} : vector<1x128xf32> -> vector<1x128xf32>
      %218 = arith.mulf %214, %217 : vector<1x128xf32>
      %c2_i32 = arith.constant 2 : i32
      %219 = vector.broadcast %c2_i32 : i32 to vector<8x1xi32>
      %220 = arith.cmpi eq, %43, %219 : vector<8x1xi32>
      %cst_84 = arith.constant 0.000000e+00 : f32
      %221 = vector.shape_cast %220 : vector<8x1xi1> to vector<8x1xi1>
      %222 = vector.broadcast %221 : vector<8x1xi1> to vector<8x128xi1>
      %223 = vector.shape_cast %218 : vector<1x128xf32> to vector<1x128xf32>
      %224 = vector.broadcast %223 : vector<1x128xf32> to vector<8x128xf32>
      %225 = vector.broadcast %cst_84 : f32 to vector<8x128xf32>
      %226 = arith.select %222, %224, %225 : vector<8x128xi1>, vector<8x128xf32>
      %227 = arith.addf %191, %226 : vector<8x128xf32>
      %228 = vector.extract_strided_slice %108 {offsets = [3, 0], sizes = [1, 128], strides = [1, 1]} : vector<8x128xf32> to vector<1x128xf32>
      %cst_85 = arith.constant 0.000000e+00 : f32
      %229 = vector.broadcast %cst_85 : f32 to vector<1x128xf32>
      %230 = arith.cmpf oge, %228, %229 : vector<1x128xf32>
      %231 = vector.extract_strided_slice %114 {offsets = [3, 0], sizes = [1, 1], strides = [1, 1]} : vector<8x1xf32> to vector<1x1xf32>
      %232 = vector.extract_strided_slice %116 {offsets = [3, 0], sizes = [1, 1], strides = [1, 1]} : vector<8x1xf32> to vector<1x1xf32>
      %233 = vector.shape_cast %231 : vector<1x1xf32> to vector<1x1xf32>
      %234 = vector.broadcast %233 : vector<1x1xf32> to vector<1x128xf32>
      %235 = vector.shape_cast %232 : vector<1x1xf32> to vector<1x1xf32>
      %236 = vector.broadcast %235 : vector<1x1xf32> to vector<1x128xf32>
      %237 = arith.select %230, %234, %236 : vector<1x128xi1>, vector<1x128xf32>
      %238 = arith.mulf %228, %237 : vector<1x128xf32>
      %239 = vector.extract_strided_slice %117 {offsets = [0, 3], sizes = [128, 1], strides = [1, 1]} : vector<128x8xf32> to vector<128x1xf32>
      %240 = vector.extract_strided_slice %118 {offsets = [0, 3], sizes = [128, 1], strides = [1, 1]} : vector<128x8xf32> to vector<128x1xf32>
      %241 = vector.broadcast %239 : vector<128x1xf32> to vector<128x128xf32>
      %242 = vector.broadcast %228 : vector<1x128xf32> to vector<128x128xf32>
      %243 = arith.mulf %241, %242 : vector<128x128xf32>
      %244 = vector.broadcast %238 : vector<1x128xf32> to vector<128x128xf32>
      %245 = arith.subf %243, %244 : vector<128x128xf32>
      %246 = math.exp %245 : vector<128x128xf32>
      %247 = vector.broadcast %240 : vector<128x1xf32> to vector<128x128xf32>
      %248 = arith.mulf %246, %247 : vector<128x128xf32>
      %cst_86 = arith.constant dense<0.000000e+00> : vector<128xf32>
      %249 = vector.multi_reduction <add>, %248, %cst_86 [0] : vector<128x128xf32> to vector<128xf32>
      %250 = vector.shape_cast %249 : vector<128xf32> to vector<1x128xf32>
      %cst_87 = arith.constant dense<0.000000e+00> : vector<128xf32>
      %251 = vector.multi_reduction <add>, %246, %cst_87 [0] : vector<128x128xf32> to vector<128xf32>
      %252 = vector.shape_cast %251 : vector<128xf32> to vector<1x128xf32>
      %253 = tpu.reciprocal %252 {approx = true} : vector<1x128xf32> -> vector<1x128xf32>
      %254 = arith.mulf %250, %253 : vector<1x128xf32>
      %c3_i32 = arith.constant 3 : i32
      %255 = vector.broadcast %c3_i32 : i32 to vector<8x1xi32>
      %256 = arith.cmpi eq, %43, %255 : vector<8x1xi32>
      %cst_88 = arith.constant 0.000000e+00 : f32
      %257 = vector.shape_cast %256 : vector<8x1xi1> to vector<8x1xi1>
      %258 = vector.broadcast %257 : vector<8x1xi1> to vector<8x128xi1>
      %259 = vector.shape_cast %254 : vector<1x128xf32> to vector<1x128xf32>
      %260 = vector.broadcast %259 : vector<1x128xf32> to vector<8x128xf32>
      %261 = vector.broadcast %cst_88 : f32 to vector<8x128xf32>
      %262 = arith.select %258, %260, %261 : vector<8x128xi1>, vector<8x128xf32>
      %263 = arith.addf %227, %262 : vector<8x128xf32>
      %264 = vector.extract_strided_slice %108 {offsets = [4, 0], sizes = [1, 128], strides = [1, 1]} : vector<8x128xf32> to vector<1x128xf32>
      %cst_89 = arith.constant 0.000000e+00 : f32
      %265 = vector.broadcast %cst_89 : f32 to vector<1x128xf32>
      %266 = arith.cmpf oge, %264, %265 : vector<1x128xf32>
      %267 = vector.extract_strided_slice %114 {offsets = [4, 0], sizes = [1, 1], strides = [1, 1]} : vector<8x1xf32> to vector<1x1xf32>
      %268 = vector.extract_strided_slice %116 {offsets = [4, 0], sizes = [1, 1], strides = [1, 1]} : vector<8x1xf32> to vector<1x1xf32>
      %269 = vector.shape_cast %267 : vector<1x1xf32> to vector<1x1xf32>
      %270 = vector.broadcast %269 : vector<1x1xf32> to vector<1x128xf32>
      %271 = vector.shape_cast %268 : vector<1x1xf32> to vector<1x1xf32>
      %272 = vector.broadcast %271 : vector<1x1xf32> to vector<1x128xf32>
      %273 = arith.select %266, %270, %272 : vector<1x128xi1>, vector<1x128xf32>
      %274 = arith.mulf %264, %273 : vector<1x128xf32>
      %275 = vector.extract_strided_slice %117 {offsets = [0, 4], sizes = [128, 1], strides = [1, 1]} : vector<128x8xf32> to vector<128x1xf32>
      %276 = vector.extract_strided_slice %118 {offsets = [0, 4], sizes = [128, 1], strides = [1, 1]} : vector<128x8xf32> to vector<128x1xf32>
      %277 = vector.broadcast %275 : vector<128x1xf32> to vector<128x128xf32>
      %278 = vector.broadcast %264 : vector<1x128xf32> to vector<128x128xf32>
      %279 = arith.mulf %277, %278 : vector<128x128xf32>
      %280 = vector.broadcast %274 : vector<1x128xf32> to vector<128x128xf32>
      %281 = arith.subf %279, %280 : vector<128x128xf32>
      %282 = math.exp %281 : vector<128x128xf32>
      %283 = vector.broadcast %276 : vector<128x1xf32> to vector<128x128xf32>
      %284 = arith.mulf %282, %283 : vector<128x128xf32>
      %cst_90 = arith.constant dense<0.000000e+00> : vector<128xf32>
      %285 = vector.multi_reduction <add>, %284, %cst_90 [0] : vector<128x128xf32> to vector<128xf32>
      %286 = vector.shape_cast %285 : vector<128xf32> to vector<1x128xf32>
      %cst_91 = arith.constant dense<0.000000e+00> : vector<128xf32>
      %287 = vector.multi_reduction <add>, %282, %cst_91 [0] : vector<128x128xf32> to vector<128xf32>
      %288 = vector.shape_cast %287 : vector<128xf32> to vector<1x128xf32>
      %289 = tpu.reciprocal %288 {approx = true} : vector<1x128xf32> -> vector<1x128xf32>
      %290 = arith.mulf %286, %289 : vector<1x128xf32>
      %c4_i32 = arith.constant 4 : i32
      %291 = vector.broadcast %c4_i32 : i32 to vector<8x1xi32>
      %292 = arith.cmpi eq, %43, %291 : vector<8x1xi32>
      %cst_92 = arith.constant 0.000000e+00 : f32
      %293 = vector.shape_cast %292 : vector<8x1xi1> to vector<8x1xi1>
      %294 = vector.broadcast %293 : vector<8x1xi1> to vector<8x128xi1>
      %295 = vector.shape_cast %290 : vector<1x128xf32> to vector<1x128xf32>
      %296 = vector.broadcast %295 : vector<1x128xf32> to vector<8x128xf32>
      %297 = vector.broadcast %cst_92 : f32 to vector<8x128xf32>
      %298 = arith.select %294, %296, %297 : vector<8x128xi1>, vector<8x128xf32>
      %299 = arith.addf %263, %298 : vector<8x128xf32>
      %300 = vector.extract_strided_slice %108 {offsets = [5, 0], sizes = [1, 128], strides = [1, 1]} : vector<8x128xf32> to vector<1x128xf32>
      %cst_93 = arith.constant 0.000000e+00 : f32
      %301 = vector.broadcast %cst_93 : f32 to vector<1x128xf32>
      %302 = arith.cmpf oge, %300, %301 : vector<1x128xf32>
      %303 = vector.extract_strided_slice %114 {offsets = [5, 0], sizes = [1, 1], strides = [1, 1]} : vector<8x1xf32> to vector<1x1xf32>
      %304 = vector.extract_strided_slice %116 {offsets = [5, 0], sizes = [1, 1], strides = [1, 1]} : vector<8x1xf32> to vector<1x1xf32>
      %305 = vector.shape_cast %303 : vector<1x1xf32> to vector<1x1xf32>
      %306 = vector.broadcast %305 : vector<1x1xf32> to vector<1x128xf32>
      %307 = vector.shape_cast %304 : vector<1x1xf32> to vector<1x1xf32>
      %308 = vector.broadcast %307 : vector<1x1xf32> to vector<1x128xf32>
      %309 = arith.select %302, %306, %308 : vector<1x128xi1>, vector<1x128xf32>
      %310 = arith.mulf %300, %309 : vector<1x128xf32>
      %311 = vector.extract_strided_slice %117 {offsets = [0, 5], sizes = [128, 1], strides = [1, 1]} : vector<128x8xf32> to vector<128x1xf32>
      %312 = vector.extract_strided_slice %118 {offsets = [0, 5], sizes = [128, 1], strides = [1, 1]} : vector<128x8xf32> to vector<128x1xf32>
      %313 = vector.broadcast %311 : vector<128x1xf32> to vector<128x128xf32>
      %314 = vector.broadcast %300 : vector<1x128xf32> to vector<128x128xf32>
      %315 = arith.mulf %313, %314 : vector<128x128xf32>
      %316 = vector.broadcast %310 : vector<1x128xf32> to vector<128x128xf32>
      %317 = arith.subf %315, %316 : vector<128x128xf32>
      %318 = math.exp %317 : vector<128x128xf32>
      %319 = vector.broadcast %312 : vector<128x1xf32> to vector<128x128xf32>
      %320 = arith.mulf %318, %319 : vector<128x128xf32>
      %cst_94 = arith.constant dense<0.000000e+00> : vector<128xf32>
      %321 = vector.multi_reduction <add>, %320, %cst_94 [0] : vector<128x128xf32> to vector<128xf32>
      %322 = vector.shape_cast %321 : vector<128xf32> to vector<1x128xf32>
      %cst_95 = arith.constant dense<0.000000e+00> : vector<128xf32>
      %323 = vector.multi_reduction <add>, %318, %cst_95 [0] : vector<128x128xf32> to vector<128xf32>
      %324 = vector.shape_cast %323 : vector<128xf32> to vector<1x128xf32>
      %325 = tpu.reciprocal %324 {approx = true} : vector<1x128xf32> -> vector<1x128xf32>
      %326 = arith.mulf %322, %325 : vector<1x128xf32>
      %c5_i32 = arith.constant 5 : i32
      %327 = vector.broadcast %c5_i32 : i32 to vector<8x1xi32>
      %328 = arith.cmpi eq, %43, %327 : vector<8x1xi32>
      %cst_96 = arith.constant 0.000000e+00 : f32
      %329 = vector.shape_cast %328 : vector<8x1xi1> to vector<8x1xi1>
      %330 = vector.broadcast %329 : vector<8x1xi1> to vector<8x128xi1>
      %331 = vector.shape_cast %326 : vector<1x128xf32> to vector<1x128xf32>
      %332 = vector.broadcast %331 : vector<1x128xf32> to vector<8x128xf32>
      %333 = vector.broadcast %cst_96 : f32 to vector<8x128xf32>
      %334 = arith.select %330, %332, %333 : vector<8x128xi1>, vector<8x128xf32>
      %335 = arith.addf %299, %334 : vector<8x128xf32>
      %336 = vector.extract_strided_slice %108 {offsets = [6, 0], sizes = [1, 128], strides = [1, 1]} : vector<8x128xf32> to vector<1x128xf32>
      %cst_97 = arith.constant 0.000000e+00 : f32
      %337 = vector.broadcast %cst_97 : f32 to vector<1x128xf32>
      %338 = arith.cmpf oge, %336, %337 : vector<1x128xf32>
      %339 = vector.extract_strided_slice %114 {offsets = [6, 0], sizes = [1, 1], strides = [1, 1]} : vector<8x1xf32> to vector<1x1xf32>
      %340 = vector.extract_strided_slice %116 {offsets = [6, 0], sizes = [1, 1], strides = [1, 1]} : vector<8x1xf32> to vector<1x1xf32>
      %341 = vector.shape_cast %339 : vector<1x1xf32> to vector<1x1xf32>
      %342 = vector.broadcast %341 : vector<1x1xf32> to vector<1x128xf32>
      %343 = vector.shape_cast %340 : vector<1x1xf32> to vector<1x1xf32>
      %344 = vector.broadcast %343 : vector<1x1xf32> to vector<1x128xf32>
      %345 = arith.select %338, %342, %344 : vector<1x128xi1>, vector<1x128xf32>
      %346 = arith.mulf %336, %345 : vector<1x128xf32>
      %347 = vector.extract_strided_slice %117 {offsets = [0, 6], sizes = [128, 1], strides = [1, 1]} : vector<128x8xf32> to vector<128x1xf32>
      %348 = vector.extract_strided_slice %118 {offsets = [0, 6], sizes = [128, 1], strides = [1, 1]} : vector<128x8xf32> to vector<128x1xf32>
      %349 = vector.broadcast %347 : vector<128x1xf32> to vector<128x128xf32>
      %350 = vector.broadcast %336 : vector<1x128xf32> to vector<128x128xf32>
      %351 = arith.mulf %349, %350 : vector<128x128xf32>
      %352 = vector.broadcast %346 : vector<1x128xf32> to vector<128x128xf32>
      %353 = arith.subf %351, %352 : vector<128x128xf32>
      %354 = math.exp %353 : vector<128x128xf32>
      %355 = vector.broadcast %348 : vector<128x1xf32> to vector<128x128xf32>
      %356 = arith.mulf %354, %355 : vector<128x128xf32>
      %cst_98 = arith.constant dense<0.000000e+00> : vector<128xf32>
      %357 = vector.multi_reduction <add>, %356, %cst_98 [0] : vector<128x128xf32> to vector<128xf32>
      %358 = vector.shape_cast %357 : vector<128xf32> to vector<1x128xf32>
      %cst_99 = arith.constant dense<0.000000e+00> : vector<128xf32>
      %359 = vector.multi_reduction <add>, %354, %cst_99 [0] : vector<128x128xf32> to vector<128xf32>
      %360 = vector.shape_cast %359 : vector<128xf32> to vector<1x128xf32>
      %361 = tpu.reciprocal %360 {approx = true} : vector<1x128xf32> -> vector<1x128xf32>
      %362 = arith.mulf %358, %361 : vector<1x128xf32>
      %c6_i32 = arith.constant 6 : i32
      %363 = vector.broadcast %c6_i32 : i32 to vector<8x1xi32>
      %364 = arith.cmpi eq, %43, %363 : vector<8x1xi32>
      %cst_100 = arith.constant 0.000000e+00 : f32
      %365 = vector.shape_cast %364 : vector<8x1xi1> to vector<8x1xi1>
      %366 = vector.broadcast %365 : vector<8x1xi1> to vector<8x128xi1>
      %367 = vector.shape_cast %362 : vector<1x128xf32> to vector<1x128xf32>
      %368 = vector.broadcast %367 : vector<1x128xf32> to vector<8x128xf32>
      %369 = vector.broadcast %cst_100 : f32 to vector<8x128xf32>
      %370 = arith.select %366, %368, %369 : vector<8x128xi1>, vector<8x128xf32>
      %371 = arith.addf %335, %370 : vector<8x128xf32>
      %372 = vector.extract_strided_slice %108 {offsets = [7, 0], sizes = [1, 128], strides = [1, 1]} : vector<8x128xf32> to vector<1x128xf32>
      %cst_101 = arith.constant 0.000000e+00 : f32
      %373 = vector.broadcast %cst_101 : f32 to vector<1x128xf32>
      %374 = arith.cmpf oge, %372, %373 : vector<1x128xf32>
      %375 = vector.extract_strided_slice %114 {offsets = [7, 0], sizes = [1, 1], strides = [1, 1]} : vector<8x1xf32> to vector<1x1xf32>
      %376 = vector.extract_strided_slice %116 {offsets = [7, 0], sizes = [1, 1], strides = [1, 1]} : vector<8x1xf32> to vector<1x1xf32>
      %377 = vector.shape_cast %375 : vector<1x1xf32> to vector<1x1xf32>
      %378 = vector.broadcast %377 : vector<1x1xf32> to vector<1x128xf32>
      %379 = vector.shape_cast %376 : vector<1x1xf32> to vector<1x1xf32>
      %380 = vector.broadcast %379 : vector<1x1xf32> to vector<1x128xf32>
      %381 = arith.select %374, %378, %380 : vector<1x128xi1>, vector<1x128xf32>
      %382 = arith.mulf %372, %381 : vector<1x128xf32>
      %383 = vector.extract_strided_slice %117 {offsets = [0, 7], sizes = [128, 1], strides = [1, 1]} : vector<128x8xf32> to vector<128x1xf32>
      %384 = vector.extract_strided_slice %118 {offsets = [0, 7], sizes = [128, 1], strides = [1, 1]} : vector<128x8xf32> to vector<128x1xf32>
      %385 = vector.broadcast %383 : vector<128x1xf32> to vector<128x128xf32>
      %386 = vector.broadcast %372 : vector<1x128xf32> to vector<128x128xf32>
      %387 = arith.mulf %385, %386 : vector<128x128xf32>
      %388 = vector.broadcast %382 : vector<1x128xf32> to vector<128x128xf32>
      %389 = arith.subf %387, %388 : vector<128x128xf32>
      %390 = math.exp %389 : vector<128x128xf32>
      %391 = vector.broadcast %384 : vector<128x1xf32> to vector<128x128xf32>
      %392 = arith.mulf %390, %391 : vector<128x128xf32>
      %cst_102 = arith.constant dense<0.000000e+00> : vector<128xf32>
      %393 = vector.multi_reduction <add>, %392, %cst_102 [0] : vector<128x128xf32> to vector<128xf32>
      %394 = vector.shape_cast %393 : vector<128xf32> to vector<1x128xf32>
      %cst_103 = arith.constant dense<0.000000e+00> : vector<128xf32>
      %395 = vector.multi_reduction <add>, %390, %cst_103 [0] : vector<128x128xf32> to vector<128xf32>
      %396 = vector.shape_cast %395 : vector<128xf32> to vector<1x128xf32>
      %397 = tpu.reciprocal %396 {approx = true} : vector<1x128xf32> -> vector<1x128xf32>
      %398 = arith.mulf %394, %397 : vector<1x128xf32>
      %c7_i32 = arith.constant 7 : i32
      %399 = vector.broadcast %c7_i32 : i32 to vector<8x1xi32>
      %400 = arith.cmpi eq, %43, %399 : vector<8x1xi32>
      %cst_104 = arith.constant 0.000000e+00 : f32
      %401 = vector.shape_cast %400 : vector<8x1xi1> to vector<8x1xi1>
      %402 = vector.broadcast %401 : vector<8x1xi1> to vector<8x128xi1>
      %403 = vector.shape_cast %398 : vector<1x128xf32> to vector<1x128xf32>
      %404 = vector.broadcast %403 : vector<1x128xf32> to vector<8x128xf32>
      %405 = vector.broadcast %cst_104 : f32 to vector<8x128xf32>
      %406 = arith.select %402, %404, %405 : vector<8x128xi1>, vector<8x128xf32>
      %407 = arith.addf %371, %406 : vector<8x128xf32>
      %408 = arith.index_cast %106 : i32 to index
      %c0_105 = arith.constant 0 : index
      %409 = vector.load %arg22[%408, %c0_105] : memref<128x128xf32, #tpu.memory_space<vmem>>, vector<8x128xf32>
      tpu.vector_store %arg22[%408, %c0_105], %407 {strides = array<i32>} : memref<128x128xf32, #tpu.memory_space<vmem>>, vector<8x128xf32>,
    }
    %c16_i32_31 = arith.constant 16 : i32
    %c0_32 = arith.constant 0 : index
    %c0_33 = arith.constant 0 : index
    %45 = vector.load %arg22[%c0_32, %c0_33] : memref<128x128xf32, #tpu.memory_space<vmem>>, vector<128x128xf32>
    %46 = arith.addf %0, %45 : vector<128x128xf32>
    %c0_34 = arith.constant 0 : index
    %c0_35 = arith.constant 0 : index
    %47 = vector.load %arg10[%c0_34, %c0_35] : memref<1x128xf32, #tpu.memory_space<vmem>>, vector<1x128xf32>
    %c0_36 = arith.constant 0 : index
    %c0_37 = arith.constant 0 : index
    %48 = vector.load %arg11[%c0_36, %c0_37] : memref<1x128xf32, #tpu.memory_space<vmem>>, vector<1x128xf32>
    %cst_38 = arith.constant dense<0.000000e+00> : vector<128xf32>
    %49 = vector.multi_reduction <add>, %46, %cst_38 [1] : vector<128x128xf32> to vector<128xf32>
    %50 = vector.shape_cast %49 : vector<128xf32> to vector<128x1xf32>
    %cst_39 = arith.constant 1.280000e+02 : f32
    %51 = vector.broadcast %cst_39 : f32 to vector<128x1xf32>
    %52 = arith.divf %50, %51 : vector<128x1xf32>
    %53 = vector.broadcast %52 : vector<128x1xf32> to vector<128x128xf32>
    %54 = arith.subf %46, %53 : vector<128x128xf32>
    %55 = arith.mulf %54, %54 : vector<128x128xf32>
    %cst_40 = arith.constant dense<0.000000e+00> : vector<128xf32>
    %56 = vector.multi_reduction <add>, %55, %cst_40 [1] : vector<128x128xf32> to vector<128xf32>
    %57 = vector.shape_cast %56 : vector<128xf32> to vector<128x1xf32>
    %cst_41 = arith.constant 1.280000e+02 : f32
    %58 = vector.broadcast %cst_41 : f32 to vector<128x1xf32>
    %59 = arith.divf %57, %58 : vector<128x1xf32>
    %cst_42 = arith.constant 9.99999974E-6 : f32
    %60 = vector.broadcast %cst_42 : f32 to vector<128x1xf32>
    %61 = arith.addf %59, %60 : vector<128x1xf32>
    %62 = math.rsqrt %61 : vector<128x1xf32>
    %63 = vector.broadcast %62 : vector<128x1xf32> to vector<128x128xf32>
    %64 = arith.mulf %54, %63 : vector<128x128xf32>
    %65 = vector.broadcast %47 : vector<1x128xf32> to vector<128x128xf32>
    %66 = arith.mulf %64, %65 : vector<128x128xf32>
    %67 = vector.broadcast %48 : vector<1x128xf32> to vector<128x128xf32>
    %68 = arith.addf %66, %67 : vector<128x128xf32>
    %c0_43 = arith.constant 0 : index
    %c0_44 = arith.constant 0 : index
    %69 = vector.load %arg12[%c0_43, %c0_44] : memref<128x256xf32, #tpu.memory_space<vmem>>, vector<128x256xf32>
    %cst_45 = arith.constant dense<0.000000e+00> : vector<128x256xf32>
    %70 = tpu.matmul %68, %69, %cst_45 {dimension_numbers = #tpu.dot_dimension_numbers<[1], [0], [0], [1], [0, 0, 1, 1], [], []>} : vector<128x128xf32>, vector<128x256xf32>, vector<128x256xf32> -> vector<128x256xf32>
    %c0_46 = arith.constant 0 : index
    %c0_47 = arith.constant 0 : index
    %71 = vector.load %arg13[%c0_46, %c0_47] : memref<1x256xf32, #tpu.memory_space<vmem>>, vector<1x256xf32>
    %72 = vector.broadcast %71 : vector<1x256xf32> to vector<128x256xf32>
    %73 = arith.addf %70, %72 : vector<128x256xf32>
    %cst_48 = arith.constant 0.000000e+00 : f32
    %74 = vector.broadcast %cst_48 : f32 to vector<128x256xf32>
    %75 = arith.maximumf %73, %74 : vector<128x256xf32>
    %c0_49 = arith.constant 0 : index
    %c0_50 = arith.constant 0 : index
    %76 = vector.load %arg14[%c0_49, %c0_50] : memref<256x128xf32, #tpu.memory_space<vmem>>, vector<256x128xf32>
    %cst_51 = arith.constant dense<0.000000e+00> : vector<128x128xf32>
    %77 = tpu.matmul %75, %76, %cst_51 {dimension_numbers = #tpu.dot_dimension_numbers<[1], [0], [0], [1], [0, 0, 1, 1], [], []>} : vector<128x256xf32>, vector<256x128xf32>, vector<128x128xf32> -> vector<128x128xf32>
    %c0_52 = arith.constant 0 : index
    %c0_53 = arith.constant 0 : index
    %78 = vector.load %arg15[%c0_52, %c0_53] : memref<1x128xf32, #tpu.memory_space<vmem>>, vector<1x128xf32>
    %79 = vector.broadcast %78 : vector<1x128xf32> to vector<128x128xf32>
    %80 = arith.addf %77, %79 : vector<128x128xf32>
    %81 = arith.addf %46, %80 : vector<128x128xf32>
    %c0_54 = arith.constant 0 : index
    %c0_55 = arith.constant 0 : index
    %82 = vector.load %arg16[%c0_54, %c0_55] : memref<1x128xf32, #tpu.memory_space<vmem>>, vector<1x128xf32>
    %c0_56 = arith.constant 0 : index
    %c0_57 = arith.constant 0 : index
    %83 = vector.load %arg17[%c0_56, %c0_57] : memref<1x128xf32, #tpu.memory_space<vmem>>, vector<1x128xf32>
    %cst_58 = arith.constant dense<0.000000e+00> : vector<128xf32>
    %84 = vector.multi_reduction <add>, %81, %cst_58 [1] : vector<128x128xf32> to vector<128xf32>
    %85 = vector.shape_cast %84 : vector<128xf32> to vector<128x1xf32>
    %cst_59 = arith.constant 1.280000e+02 : f32
    %86 = vector.broadcast %cst_59 : f32 to vector<128x1xf32>
    %87 = arith.divf %85, %86 : vector<128x1xf32>
    %88 = vector.broadcast %87 : vector<128x1xf32> to vector<128x128xf32>
    %89 = arith.subf %81, %88 : vector<128x128xf32>
    %90 = arith.mulf %89, %89 : vector<128x128xf32>
    %cst_60 = arith.constant dense<0.000000e+00> : vector<128xf32>
    %91 = vector.multi_reduction <add>, %90, %cst_60 [1] : vector<128x128xf32> to vector<128xf32>
    %92 = vector.shape_cast %91 : vector<128xf32> to vector<128x1xf32>
    %cst_61 = arith.constant 1.280000e+02 : f32
    %93 = vector.broadcast %cst_61 : f32 to vector<128x1xf32>
    %94 = arith.divf %92, %93 : vector<128x1xf32>
    %cst_62 = arith.constant 9.99999974E-6 : f32
    %95 = vector.broadcast %cst_62 : f32 to vector<128x1xf32>
    %96 = arith.addf %94, %95 : vector<128x1xf32>
    %97 = math.rsqrt %96 : vector<128x1xf32>
    %98 = vector.broadcast %97 : vector<128x1xf32> to vector<128x128xf32>
    %99 = arith.mulf %89, %98 : vector<128x128xf32>
    %100 = vector.broadcast %82 : vector<1x128xf32> to vector<128x128xf32>
    %101 = arith.mulf %99, %100 : vector<128x128xf32>
    %102 = vector.broadcast %83 : vector<1x128xf32> to vector<128x128xf32>
    %103 = arith.addf %101, %102 : vector<128x128xf32>
    %c0_63 = arith.constant 0 : index
    %c0_64 = arith.constant 0 : index
    %104 = vector.load %arg18[%c0_63, %c0_64] : memref<128x128xf32, #tpu.memory_space<vmem>>, vector<128x128xf32>
    tpu.vector_store %arg18[%c0_63, %c0_64], %103 {strides = array<i32>} : memref<128x128xf32, #tpu.memory_space<vmem>>, vector<128x128xf32>,
    return
  }
  func.func @transform_0(%arg0: i32) -> (i32, i32) {
    %c0_i32 = arith.constant 0 : i32
    %c0_i32_0 = arith.constant 0 : i32
    return %arg0, %c0_i32 : i32, i32
  }
  func.func @transform_1(%arg0: i32) -> (i32, i32) {
    %c0_i32 = arith.constant 0 : i32
    %c0_i32_0 = arith.constant 0 : i32
    %c0_i32_1 = arith.constant 0 : i32
    return %c0_i32, %c0_i32_0 : i32, i32
  }
  func.func @transform_2(%arg0: i32) -> (i32, i32) {
    %c0_i32 = arith.constant 0 : i32
    %c0_i32_0 = arith.constant 0 : i32
    %c0_i32_1 = arith.constant 0 : i32
    return %c0_i32, %c0_i32_0 : i32, i32
  }
  func.func @transform_3(%arg0: i32) -> (i32, i32) {
    %c0_i32 = arith.constant 0 : i32
    %c0_i32_0 = arith.constant 0 : i32
    %c0_i32_1 = arith.constant 0 : i32
    return %c0_i32, %c0_i32_0 : i32, i32
  }
  func.func @transform_4(%arg0: i32) -> (i32, i32) {
    %c0_i32 = arith.constant 0 : i32
    %c0_i32_0 = arith.constant 0 : i32
    %c0_i32_1 = arith.constant 0 : i32
    return %c0_i32, %c0_i32_0 : i32, i32
  }
  func.func @transform_5(%arg0: i32) -> (i32, i32) {
    %c0_i32 = arith.constant 0 : i32
    %c0_i32_0 = arith.constant 0 : i32
    %c0_i32_1 = arith.constant 0 : i32
    return %c0_i32, %c0_i32_0 : i32, i32
  }
  func.func @transform_6(%arg0: i32) -> (i32, i32) {
    %c0_i32 = arith.constant 0 : i32
    %c0_i32_0 = arith.constant 0 : i32
    %c0_i32_1 = arith.constant 0 : i32
    return %c0_i32, %c0_i32_0 : i32, i32
  }
  func.func @transform_7(%arg0: i32) -> (i32, i32) {
    %c0_i32 = arith.constant 0 : i32
    %c0_i32_0 = arith.constant 0 : i32
    %c0_i32_1 = arith.constant 0 : i32
    return %c0_i32, %c0_i32_0 : i32, i32
  }
  func.func @transform_8(%arg0: i32) -> (i32, i32) {
    %c0_i32 = arith.constant 0 : i32
    %c0_i32_0 = arith.constant 0 : i32
    %c0_i32_1 = arith.constant 0 : i32
    return %c0_i32, %c0_i32_0 : i32, i32
  }
  func.func @transform_9(%arg0: i32) -> (i32, i32) {
    %c0_i32 = arith.constant 0 : i32
    %c0_i32_0 = arith.constant 0 : i32
    %c0_i32_1 = arith.constant 0 : i32
    return %c0_i32, %c0_i32_0 : i32, i32
  }
  func.func @transform_10(%arg0: i32) -> (i32, i32) {
    %c0_i32 = arith.constant 0 : i32
    %c0_i32_0 = arith.constant 0 : i32
    %c0_i32_1 = arith.constant 0 : i32
    return %c0_i32, %c0_i32_0 : i32, i32
  }
  func.func @transform_11(%arg0: i32) -> (i32, i32) {
    %c0_i32 = arith.constant 0 : i32
    %c0_i32_0 = arith.constant 0 : i32
    %c0_i32_1 = arith.constant 0 : i32
    return %c0_i32, %c0_i32_0 : i32, i32
  }
  func.func @transform_12(%arg0: i32) -> (i32, i32) {
    %c0_i32 = arith.constant 0 : i32
    %c0_i32_0 = arith.constant 0 : i32
    %c0_i32_1 = arith.constant 0 : i32
    return %c0_i32, %c0_i32_0 : i32, i32
  }
  func.func @transform_13(%arg0: i32) -> (i32, i32) {
    %c0_i32 = arith.constant 0 : i32
    %c0_i32_0 = arith.constant 0 : i32
    %c0_i32_1 = arith.constant 0 : i32
    return %c0_i32, %c0_i32_0 : i32, i32
  }
  func.func @transform_14(%arg0: i32) -> (i32, i32) {
    %c0_i32 = arith.constant 0 : i32
    %c0_i32_0 = arith.constant 0 : i32
    %c0_i32_1 = arith.constant 0 : i32
    return %c0_i32, %c0_i32_0 : i32, i32
  }
  func.func @transform_15(%arg0: i32) -> (i32, i32) {
    %c0_i32 = arith.constant 0 : i32
    %c0_i32_0 = arith.constant 0 : i32
    %c0_i32_1 = arith.constant 0 : i32
    return %c0_i32, %c0_i32_0 : i32, i32
  }
  func.func @transform_16(%arg0: i32) -> (i32, i32) {
    %c0_i32 = arith.constant 0 : i32
    %c0_i32_0 = arith.constant 0 : i32
    %c0_i32_1 = arith.constant 0 : i32
    return %c0_i32, %c0_i32_0 : i32, i32
  }
  func.func @transform_17(%arg0: i32) -> (i32, i32) {
    %c0_i32 = arith.constant 0 : i32
    %c0_i32_0 = arith.constant 0 : i32
    return %arg0, %c0_i32 : i32, i32
  }
}

</mosaic_0001>

<llo_original>
// kernel: transformer_encoder_forward.1
$region0: #{transformer_encoder_forward.1}
  #allocation0 [shape = 'u32[]', space=smem, size = 0x4, offset = 0x4, fixed_abs, tag = 'smem constant byte address 0x4 - core index']
  #allocation1 [shape = 'u32[72,128]{1,0:T(1,128)}', space=vmem, size = 0x9000, scoped, tag = 'internal scratch']
  #allocation2 [shape = 'f32[128,128]{1,0:T(8,128)}', space=vmem, size = 0x10000, scoped, tag = 'scratch operand']
  #allocation3 [shape = 'f32[128,128]{1,0:T(8,128)}', space=vmem, size = 0x10000, scoped, tag = 'scratch operand']
  #allocation4 [shape = 'f32[128,128]{1,0:T(8,128)}', space=vmem, size = 0x10000, scoped, tag = 'scratch operand']
  #allocation5 [shape = 'f32[128,128]{1,0:T(8,128)}', space=vmem, size = 0x10000, scoped, tag = 'scratch operand']
  %s0 = inlined_call_operand.vmem [shape: f32[256,128], index: 0, kind: input, shape index: {}]
  %s1 = inlined_call_operand.vmem [shape: f32[1,128], index: 1, kind: input, shape index: {}]
  %s2 = inlined_call_operand.vmem [shape: f32[1,128], index: 2, kind: input, shape index: {}]
  %s3 = inlined_call_operand.vmem [shape: f32[128,128], index: 3, kind: input, shape index: {}]
  %s4 = inlined_call_operand.vmem [shape: f32[1,128], index: 4, kind: input, shape index: {}]
  %s5 = inlined_call_operand.vmem [shape: f32[128,128], index: 5, kind: input, shape index: {}]
  %s6 = inlined_call_operand.vmem [shape: f32[1,128], index: 6, kind: input, shape index: {}]
  %s7 = inlined_call_operand.vmem [shape: f32[128,128], index: 7, kind: input, shape index: {}]
  %s8 = inlined_call_operand.vmem [shape: f32[1,128], index: 8, kind: input, shape index: {}]
  %s9 = inlined_call_operand.vmem [shape: f32[1,128], index: 9, kind: input, shape index: {}]
  %s10 = inlined_call_operand.vmem [shape: f32[1,128], index: 10, kind: input, shape index: {}]
  %s11 = inlined_call_operand.vmem [shape: f32[128,256], index: 11, kind: input, shape index: {}]
  %s12 = inlined_call_operand.vmem [shape: f32[1,256], index: 12, kind: input, shape index: {}]
  %s13 = inlined_call_operand.vmem [shape: f32[256,128], index: 13, kind: input, shape index: {}]
  %s14 = inlined_call_operand.vmem [shape: f32[1,128], index: 14, kind: input, shape index: {}]
  %s15 = inlined_call_operand.vmem [shape: f32[1,128], index: 15, kind: input, shape index: {}]
  %s16 = inlined_call_operand.vmem [shape: f32[1,128], index: 16, kind: input, shape index: {}]
  %s17 = inlined_call_operand.hbm [shape: f32[256,128], index: 17, kind: output, shape index: {}]
  %s18 = sld [smem:[#allocation0]]
  $region108: #{transformer_encoder_forward.1} parent=0
    _
  %s20 = ssub.s32 1, %s18
  %s21 = scalar_select 0, %s20, %s18
  $region1: #{transformer_encoder_forward.1} parent=0
    #allocation6 [shape = 'u8[131072]{0}', space=vmem, size = 0x20000, scoped, tag = 'output window, operand 0']
    #allocation7 [shape = 's32[2]{0}', space=sflag, size = 0x8, scoped, tag = 'scoped memory for transformer_encoder_forward.1']
    %22 = vsyncpa [#allocation7], 0
    %s23 = scalar_lea.sflag [#allocation7], 1
    %24 = vsyncpa %s23, 0
    loop: start=0, step=1, limit=4
    $region2: #{transformer_encoder_forward.1} parent=1 // loop_pre_header
      _
    $region3: #{transformer_encoder_forward.1} parent=1 // loop_header
      %s26 = sphi 0, %s30
      %p27 = scmp.ge.s32.totalorder %s26, 4
      %s36 = sphi 0, %s38
      %s39 = sphi 0, %s36
      %s40 = sphi 0, %s39
      %s56 = sphi 0, %s40
      %s60 = sphi 0, %s60
      %s62 = sphi 0, %s60
      %s63 = sphi 0, %s62
      %s77 = sphi 0, %s63
      %s81 = sphi 0, %s81
      %s83 = sphi 0, %s81
      %s84 = sphi 0, %s83
      %s98 = sphi 0, %s84
      %s102 = sphi 0, %s102
      %s104 = sphi 0, %s102
      %s105 = sphi 0, %s104
      %s119 = sphi 0, %s105
      %s123 = sphi 0, %s123
      %s125 = sphi 0, %s123
      %s126 = sphi 0, %s125
      %s140 = sphi 0, %s126
      %s144 = sphi 0, %s144
      %s146 = sphi 0, %s144
      %s147 = sphi 0, %s146
      %s161 = sphi 0, %s147
      %s165 = sphi 0, %s165
      %s167 = sphi 0, %s165
      %s168 = sphi 0, %s167
      %s182 = sphi 0, %s168
      %s186 = sphi 0, %s186
      %s188 = sphi 0, %s186
      %s189 = sphi 0, %s188
      %s203 = sphi 0, %s189
      %s207 = sphi 0, %s207
      %s209 = sphi 0, %s207
      %s210 = sphi 0, %s209
      %s224 = sphi 0, %s210
      %s228 = sphi 0, %s228
      %s230 = sphi 0, %s228
      %s231 = sphi 0, %s230
      %s245 = sphi 0, %s231
      %s249 = sphi 0, %s249
      %s251 = sphi 0, %s249
      %s252 = sphi 0, %s251
      %s266 = sphi 0, %s252
      %s270 = sphi 0, %s270
      %s272 = sphi 0, %s270
      %s273 = sphi 0, %s272
      %s287 = sphi 0, %s273
      %s291 = sphi 0, %s291
      %s293 = sphi 0, %s291
      %s294 = sphi 0, %s293
      %s308 = sphi 0, %s294
      %s312 = sphi 0, %s312
      %s314 = sphi 0, %s312
      %s315 = sphi 0, %s314
      %s329 = sphi 0, %s315
      %s333 = sphi 0, %s333
      %s335 = sphi 0, %s333
      %s336 = sphi 0, %s335
      %s350 = sphi 0, %s336
      %s354 = sphi 0, %s354
      %s356 = sphi 0, %s354
      %s357 = sphi 0, %s356
      %s371 = sphi 0, %s357
      %s375 = sphi 0, %s375
      %s377 = sphi 0, %s375
      %s378 = sphi 0, %s377
      %s392 = sphi 0, %s378
      %s398 = sphi 0, %s400
      %s401 = sphi 0, %s398
      %s402 = sphi 0, %s401
      %s418 = sphi 0, %s402
    $region4: #{transformer_encoder_forward.1} parent=1 // loop_header_branch
      %29 = sbr.rel (%p27) target = $region8
    $region5: #{transformer_encoder_forward.1} parent=1 // loop_body
      %s31 = ssub.s32 %s26, 1
      %s32 = ssub.s32 %s26, 2
      %s33 = sadd.s32 %s26, 1
      %s34 = ssub.s32 %s26, %s33
      %p35 = scmp.eq.s32.totalorder %s34, 0
      %s37 = sadd.s32 %s36, 1
      %s38 = scalar_select %p35, %s36, %s37
      %p41 = pneg %p35
      %p42 = scmp.eq.s32.totalorder %s26, 1
      %p43 = por %p41, %p42
      %p44 = scmp.ne.s32.totalorder %s36, %s39
      %p45 = scmp.eq.s32.totalorder %s26, 0
      %p46 = por %p44, %p45
      %p47 = scmp.ne.s32.totalorder %s36, %s39
      %p48 = scmp.eq.s32.totalorder %s31, 1
      %p49 = por %p47, %p48
      %p50 = scmp.ne.s32.totalorder %s39, %s40
      %p51 = scmp.eq.s32.totalorder %s31, 0
      %p52 = por %p50, %p51
      %p53 = scmp.ne.s32.totalorder %s39, %s40
      %p54 = scmp.eq.s32.totalorder %s32, 1
      %p55 = por %p53, %p54
      %p57 = scmp.ne.s32.totalorder %s40, %s56
      %p58 = scmp.eq.s32.totalorder %s32, 0
      %p59 = por %p57, %p58
      %s61 = sadd.s32 %s60, 1
      %p64 = scmp.eq.s32.totalorder %s26, 1
      %p65 = scmp.ne.s32.totalorder %s60, %s62
      %p66 = scmp.eq.s32.totalorder %s26, 0
      %p67 = por %p65, %p66
      %p68 = scmp.ne.s32.totalorder %s60, %s62
      %p69 = scmp.eq.s32.totalorder %s31, 1
      %p70 = por %p68, %p69
      %p71 = scmp.ne.s32.totalorder %s62, %s63
      %p72 = scmp.eq.s32.totalorder %s31, 0
      %p73 = por %p71, %p72
      %p74 = scmp.ne.s32.totalorder %s62, %s63
      %p75 = scmp.eq.s32.totalorder %s32, 1
      %p76 = por %p74, %p75
      %p78 = scmp.ne.s32.totalorder %s63, %s77
      %p79 = scmp.eq.s32.totalorder %s32, 0
      %p80 = por %p78, %p79
      %s82 = sadd.s32 %s81, 1
      %p85 = scmp.eq.s32.totalorder %s26, 1
      %p86 = scmp.ne.s32.totalorder %s81, %s83
      %p87 = scmp.eq.s32.totalorder %s26, 0
      %p88 = por %p86, %p87
      %p89 = scmp.ne.s32.totalorder %s81, %s83
      %p90 = scmp.eq.s32.totalorder %s31, 1
      %p91 = por %p89, %p90
      %p92 = scmp.ne.s32.totalorder %s83, %s84
      %p93 = scmp.eq.s32.totalorder %s31, 0
      %p94 = por %p92, %p93
      %p95 = scmp.ne.s32.totalorder %s83, %s84
      %p96 = scmp.eq.s32.totalorder %s32, 1
      %p97 = por %p95, %p96
      %p99 = scmp.ne.s32.totalorder %s84, %s98
      %p100 = scmp.eq.s32.totalorder %s32, 0
      %p101 = por %p99, %p100
      %s103 = sadd.s32 %s102, 1
      %p106 = scmp.eq.s32.totalorder %s26, 1
      %p107 = scmp.ne.s32.totalorder %s102, %s104
      %p108 = scmp.eq.s32.totalorder %s26, 0
      %p109 = por %p107, %p108
      %p110 = scmp.ne.s32.totalorder %s102, %s104
      %p111 = scmp.eq.s32.totalorder %s31, 1
      %p112 = por %p110, %p111
      %p113 = scmp.ne.s32.totalorder %s104, %s105
      %p114 = scmp.eq.s32.totalorder %s31, 0
      %p115 = por %p113, %p114
      %p116 = scmp.ne.s32.totalorder %s104, %s105
      %p117 = scmp.eq.s32.totalorder %s32, 1
      %p118 = por %p116, %p117
      %p120 = scmp.ne.s32.totalorder %s105, %s119
      %p121 = scmp.eq.s32.totalorder %s32, 0
      %p122 = por %p120, %p121
      %s124 = sadd.s32 %s123, 1
      %p127 = scmp.eq.s32.totalorder %s26, 1
      %p128 = scmp.ne.s32.totalorder %s123, %s125
      %p129 = scmp.eq.s32.totalorder %s26, 0
      %p130 = por %p128, %p129
      %p131 = scmp.ne.s32.totalorder %s123, %s125
      %p132 = scmp.eq.s32.totalorder %s31, 1
      %p133 = por %p131, %p132
      %p134 = scmp.ne.s32.totalorder %s125, %s126
      %p135 = scmp.eq.s32.totalorder %s31, 0
      %p136 = por %p134, %p135
      %p137 = scmp.ne.s32.totalorder %s125, %s126
      %p138 = scmp.eq.s32.totalorder %s32, 1
      %p139 = por %p137, %p138
      %p141 = scmp.ne.s32.totalorder %s126, %s140
      %p142 = scmp.eq.s32.totalorder %s32, 0
      %p143 = por %p141, %p142
      %s145 = sadd.s32 %s144, 1
      %p148 = scmp.eq.s32.totalorder %s26, 1
      %p149 = scmp.ne.s32.totalorder %s144, %s146
      %p150 = scmp.eq.s32.totalorder %s26, 0
      %p151 = por %p149, %p150
      %p152 = scmp.ne.s32.totalorder %s144, %s146
      %p153 = scmp.eq.s32.totalorder %s31, 1
      %p154 = por %p152, %p153
      %p155 = scmp.ne.s32.totalorder %s146, %s147
      %p156 = scmp.eq.s32.totalorder %s31, 0
      %p157 = por %p155, %p156
      %p158 = scmp.ne.s32.totalorder %s146, %s147
      %p159 = scmp.eq.s32.totalorder %s32, 1
      %p160 = por %p158, %p159
      %p162 = scmp.ne.s32.totalorder %s147, %s161
      %p163 = scmp.eq.s32.totalorder %s32, 0
      %p164 = por %p162, %p163
      %s166 = sadd.s32 %s165, 1
      %p169 = scmp.eq.s32.totalorder %s26, 1
      %p170 = scmp.ne.s32.totalorder %s165, %s167
      %p171 = scmp.eq.s32.totalorder %s26, 0
      %p172 = por %p170, %p171
      %p173 = scmp.ne.s32.totalorder %s165, %s167
      %p174 = scmp.eq.s32.totalorder %s31, 1
      %p175 = por %p173, %p174
      %p176 = scmp.ne.s32.totalorder %s167, %s168
      %p177 = scmp.eq.s32.totalorder %s31, 0
      %p178 = por %p176, %p177
      %p179 = scmp.ne.s32.totalorder %s167, %s168
      %p180 = scmp.eq.s32.totalorder %s32, 1
      %p181 = por %p179, %p180
      %p183 = scmp.ne.s32.totalorder %s168, %s182
      %p184 = scmp.eq.s32.totalorder %s32, 0
      %p185 = por %p183, %p184
      %s187 = sadd.s32 %s186, 1
      %p190 = scmp.eq.s32.totalorder %s26, 1
      %p191 = scmp.ne.s32.totalorder %s186, %s188
      %p192 = scmp.eq.s32.totalorder %s26, 0
      %p193 = por %p191, %p192
      %p194 = scmp.ne.s32.totalorder %s186, %s188
      %p195 = scmp.eq.s32.totalorder %s31, 1
      %p196 = por %p194, %p195
      %p197 = scmp.ne.s32.totalorder %s188, %s189
      %p198 = scmp.eq.s32.totalorder %s31, 0
      %p199 = por %p197, %p198
      %p200 = scmp.ne.s32.totalorder %s188, %s189
      %p201 = scmp.eq.s32.totalorder %s32, 1
      %p202 = por %p200, %p201
      %p204 = scmp.ne.s32.totalorder %s189, %s203
      %p205 = scmp.eq.s32.totalorder %s32, 0
      %p206 = por %p204, %p205
      %s208 = sadd.s32 %s207, 1
      %p211 = scmp.eq.s32.totalorder %s26, 1
      %p212 = scmp.ne.s32.totalorder %s207, %s209
      %p213 = scmp.eq.s32.totalorder %s26, 0
      %p214 = por %p212, %p213
      %p215 = scmp.ne.s32.totalorder %s207, %s209
      %p216 = scmp.eq.s32.totalorder %s31, 1
      %p217 = por %p215, %p216
      %p218 = scmp.ne.s32.totalorder %s209, %s210
      %p219 = scmp.eq.s32.totalorder %s31, 0
      %p220 = por %p218, %p219
      %p221 = scmp.ne.s32.totalorder %s209, %s210
      %p222 = scmp.eq.s32.totalorder %s32, 1
      %p223 = por %p221, %p222
      %p225 = scmp.ne.s32.totalorder %s210, %s224
      %p226 = scmp.eq.s32.totalorder %s32, 0
      %p227 = por %p225, %p226
      %s229 = sadd.s32 %s228, 1
      %p232 = scmp.eq.s32.totalorder %s26, 1
      %p233 = scmp.ne.s32.totalorder %s228, %s230
      %p234 = scmp.eq.s32.totalorder %s26, 0
      %p235 = por %p233, %p234
      %p236 = scmp.ne.s32.totalorder %s228, %s230
      %p237 = scmp.eq.s32.totalorder %s31, 1
      %p238 = por %p236, %p237
      %p239 = scmp.ne.s32.totalorder %s230, %s231
      %p240 = scmp.eq.s32.totalorder %s31, 0
      %p241 = por %p239, %p240
      %p242 = scmp.ne.s32.totalorder %s230, %s231
      %p243 = scmp.eq.s32.totalorder %s32, 1
      %p244 = por %p242, %p243
      %p246 = scmp.ne.s32.totalorder %s231, %s245
      %p247 = scmp.eq.s32.totalorder %s32, 0
      %p248 = por %p246, %p247
      %s250 = sadd.s32 %s249, 1
      %p253 = scmp.eq.s32.totalorder %s26, 1
      %p254 = scmp.ne.s32.totalorder %s249, %s251
      %p255 = scmp.eq.s32.totalorder %s26, 0
      %p256 = por %p254, %p255
      %p257 = scmp.ne.s32.totalorder %s249, %s251
      %p258 = scmp.eq.s32.totalorder %s31, 1
      %p259 = por %p257, %p258
      %p260 = scmp.ne.s32.totalorder %s251, %s252
      %p261 = scmp.eq.s32.totalorder %s31, 0
      %p262 = por %p260, %p261
      %p263 = scmp.ne.s32.totalorder %s251, %s252
      %p264 = scmp.eq.s32.totalorder %s32, 1
      %p265 = por %p263, %p264
      %p267 = scmp.ne.s32.totalorder %s252, %s266
      %p268 = scmp.eq.s32.totalorder %s32, 0
      %p269 = por %p267, %p268
      %s271 = sadd.s32 %s270, 1
      %p274 = scmp.eq.s32.totalorder %s26, 1
      %p275 = scmp.ne.s32.totalorder %s270, %s272
      %p276 = scmp.eq.s32.totalorder %s26, 0
      %p277 = por %p275, %p276
      %p278 = scmp.ne.s32.totalorder %s270, %s272
      %p279 = scmp.eq.s32.totalorder %s31, 1
      %p280 = por %p278, %p279
      %p281 = scmp.ne.s32.totalorder %s272, %s273
      %p282 = scmp.eq.s32.totalorder %s31, 0
      %p283 = por %p281, %p282
      %p284 = scmp.ne.s32.totalorder %s272, %s273
      %p285 = scmp.eq.s32.totalorder %s32, 1
      %p286 = por %p284, %p285
      %p288 = scmp.ne.s32.totalorder %s273, %s287
      %p289 = scmp.eq.s32.totalorder %s32, 0
      %p290 = por %p288, %p289
      %s292 = sadd.s32 %s291, 1
      %p295 = scmp.eq.s32.totalorder %s26, 1
      %p296 = scmp.ne.s32.totalorder %s291, %s293
      %p297 = scmp.eq.s32.totalorder %s26, 0
      %p298 = por %p296, %p297
      %p299 = scmp.ne.s32.totalorder %s291, %s293
      %p300 = scmp.eq.s32.totalorder %s31, 1
      %p301 = por %p299, %p300
      %p302 = scmp.ne.s32.totalorder %s293, %s294
      %p303 = scmp.eq.s32.totalorder %s31, 0
      %p304 = por %p302, %p303
      %p305 = scmp.ne.s32.totalorder %s293, %s294
      %p306 = scmp.eq.s32.totalorder %s32, 1
      %p307 = por %p305, %p306
      %p309 = scmp.ne.s32.totalorder %s294, %s308
      %p310 = scmp.eq.s32.totalorder %s32, 0
      %p311 = por %p309, %p310
      %s313 = sadd.s32 %s312, 1
      %p316 = scmp.eq.s32.totalorder %s26, 1
      %p317 = scmp.ne.s32.totalorder %s312, %s314
      %p318 = scmp.eq.s32.totalorder %s26, 0
      %p319 = por %p317, %p318
      %p320 = scmp.ne.s32.totalorder %s312, %s314
      %p321 = scmp.eq.s32.totalorder %s31, 1
      %p322 = por %p320, %p321
      %p323 = scmp.ne.s32.totalorder %s314, %s315
      %p324 = scmp.eq.s32.totalorder %s31, 0
      %p325 = por %p323, %p324
      %p326 = scmp.ne.s32.totalorder %s314, %s315
      %p327 = scmp.eq.s32.totalorder %s32, 1
      %p328 = por %p326, %p327
      %p330 = scmp.ne.s32.totalorder %s315, %s329
      %p331 = scmp.eq.s32.totalorder %s32, 0
      %p332 = por %p330, %p331
      %s334 = sadd.s32 %s333, 1
      %p337 = scmp.eq.s32.totalorder %s26, 1
      %p338 = scmp.ne.s32.totalorder %s333, %s335
      %p339 = scmp.eq.s32.totalorder %s26, 0
      %p340 = por %p338, %p339
      %p341 = scmp.ne.s32.totalorder %s333, %s335
      %p342 = scmp.eq.s32.totalorder %s31, 1
      %p343 = por %p341, %p342
      %p344 = scmp.ne.s32.totalorder %s335, %s336
      %p345 = scmp.eq.s32.totalorder %s31, 0
      %p346 = por %p344, %p345
      %p347 = scmp.ne.s32.totalorder %s335, %s336
      %p348 = scmp.eq.s32.totalorder %s32, 1
      %p349 = por %p347, %p348
      %p351 = scmp.ne.s32.totalorder %s336, %s350
      %p352 = scmp.eq.s32.totalorder %s32, 0
      %p353 = por %p351, %p352
      %s355 = sadd.s32 %s354, 1
      %p358 = scmp.eq.s32.totalorder %s26, 1
      %p359 = scmp.ne.s32.totalorder %s354, %s356
      %p360 = scmp.eq.s32.totalorder %s26, 0
      %p361 = por %p359, %p360
      %p362 = scmp.ne.s32.totalorder %s354, %s356
      %p363 = scmp.eq.s32.totalorder %s31, 1
      %p364 = por %p362, %p363
      %p365 = scmp.ne.s32.totalorder %s356, %s357
      %p366 = scmp.eq.s32.totalorder %s31, 0
      %p367 = por %p365, %p366
      %p368 = scmp.ne.s32.totalorder %s356, %s357
      %p369 = scmp.eq.s32.totalorder %s32, 1
      %p370 = por %p368, %p369
      %p372 = scmp.ne.s32.totalorder %s357, %s371
      %p373 = scmp.eq.s32.totalorder %s32, 0
      %p374 = por %p372, %p373
      %s376 = sadd.s32 %s375, 1
      %p379 = scmp.eq.s32.totalorder %s26, 1
      %p380 = scmp.ne.s32.totalorder %s375, %s377
      %p381 = scmp.eq.s32.totalorder %s26, 0
      %p382 = por %p380, %p381
      %p383 = scmp.ne.s32.totalorder %s375, %s377
      %p384 = scmp.eq.s32.totalorder %s31, 1
      %p385 = por %p383, %p384
      %p386 = scmp.ne.s32.totalorder %s377, %s378
      %p387 = scmp.eq.s32.totalorder %s31, 0
      %p388 = por %p386, %p387
      %p389 = scmp.ne.s32.totalorder %s377, %s378
      %p390 = scmp.eq.s32.totalorder %s32, 1
      %p391 = por %p389, %p390
      %p393 = scmp.ne.s32.totalorder %s378, %s392
      %p394 = scmp.eq.s32.totalorder %s32, 0
      %p395 = por %p393, %p394
      %s396 = ssub.s32 %s26, %s33
      %p397 = scmp.eq.s32.totalorder %s396, 0
      %s399 = sadd.s32 %s398, 1
      %s400 = scalar_select %p397, %s398, %s399
      %p403 = pneg %p397
      %p404 = scmp.eq.s32.totalorder %s26, 1
      %p405 = por %p403, %p404
      %p406 = scmp.ne.s32.totalorder %s398, %s401
      %p407 = scmp.eq.s32.totalorder %s26, 0
      %p408 = por %p406, %p407
      %p409 = scmp.ne.s32.totalorder %s398, %s401
      %p410 = scmp.eq.s32.totalorder %s31, 1
      %p411 = por %p409, %p410
      %p412 = scmp.ne.s32.totalorder %s401, %s402
      %p413 = scmp.eq.s32.totalorder %s31, 0
      %p414 = por %p412, %p413
      %p415 = scmp.ne.s32.totalorder %s401, %s402
      %p416 = scmp.eq.s32.totalorder %s32, 1
      %p417 = por %p415, %p416
      %p419 = scmp.ne.s32.totalorder %s402, %s418
      %p420 = scmp.eq.s32.totalorder %s32, 0
      %p421 = por %p419, %p420
      %p422 = scmp.le.s32.totalorder 1, %s26
      %p423 = scmp.lt.s32.totalorder %s26, 3
      %p424 = pnand %p422, %p423
      %p425 = pneg %p424
      // Predicated region
      $region9: #{transformer_encoder_forward.1} parent=5 // pred_check
        _
      $region10: #{transformer_encoder_forward.1} parent=5 // pred_check_branch
        %427 = sbr.rel (%p424) target = $region12
      $region11: #{transformer_encoder_forward.1} parent=5 // pred_region
        %s428 = ssub.s32 %s26, 1
        // Predicated region
        $region13: #{transformer_encoder_forward.1} parent=11 // pred_check
          %p429 = pneg %p73
        $region14: #{transformer_encoder_forward.1} parent=11 // pred_check_branch
          %431 = sbr.rel (%p429) target = $region16
        $region15: #{transformer_encoder_forward.1} parent=11 // pred_region
          _
        $region16: #{transformer_encoder_forward.1} parent=11 // pred_fallthru
          _
        // Predicated region
        $region17: #{transformer_encoder_forward.1} parent=11 // pred_check
          %p432 = pneg %p94
        $region18: #{transformer_encoder_forward.1} parent=11 // pred_check_branch
          %434 = sbr.rel (%p432) target = $region20
        $region19: #{transformer_encoder_forward.1} parent=11 // pred_region
          _
        $region20: #{transformer_encoder_forward.1} parent=11 // pred_fallthru
          _
        // Predicated region
        $region21: #{transformer_encoder_forward.1} parent=11 // pred_check
          %p435 = pneg %p115
        $region22: #{transformer_encoder_forward.1} parent=11 // pred_check_branch
          %437 = sbr.rel (%p435) target = $region24
        $region23: #{transformer_encoder_forward.1} parent=11 // pred_region
          _
        $region24: #{transformer_encoder_forward.1} parent=11 // pred_fallthru
          _
        // Predicated region
        $region25: #{transformer_encoder_forward.1} parent=11 // pred_check
          %p438 = pneg %p136
        $region26: #{transformer_encoder_forward.1} parent=11 // pred_check_branch
          %440 = sbr.rel (%p438) target = $region28
        $region27: #{transformer_encoder_forward.1} parent=11 // pred_region
          _
        $region28: #{transformer_encoder_forward.1} parent=11 // pred_fallthru
          _
        // Predicated region
        $region29: #{transformer_encoder_forward.1} parent=11 // pred_check
          %p441 = pneg %p157
        $region30: #{transformer_encoder_forward.1} parent=11 // pred_check_branch
          %443 = sbr.rel (%p441) target = $region32
        $region31: #{transformer_encoder_forward.1} parent=11 // pred_region
          _
        $region32: #{transformer_encoder_forward.1} parent=11 // pred_fallthru
          _
        // Predicated region
        $region33: #{transformer_encoder_forward.1} parent=11 // pred_check
          %p444 = pneg %p178
        $region34: #{transformer_encoder_forward.1} parent=11 // pred_check_branch
          %446 = sbr.rel (%p444) target = $region36
        $region35: #{transformer_encoder_forward.1} parent=11 // pred_region
          _
        $region36: #{transformer_encoder_forward.1} parent=11 // pred_fallthru
          _
        // Predicated region
        $region37: #{transformer_encoder_forward.1} parent=11 // pred_check
          %p447 = pneg %p199
        $region38: #{transformer_encoder_forward.1} parent=11 // pred_check_branch
          %449 = sbr.rel (%p447) target = $region40
        $region39: #{transformer_encoder_forward.1} parent=11 // pred_region
          _
        $region40: #{transformer_encoder_forward.1} parent=11 // pred_fallthru
          _
        // Predicated region
        $region41: #{transformer_encoder_forward.1} parent=11 // pred_check
          %p450 = pneg %p220
        $region42: #{transformer_encoder_forward.1} parent=11 // pred_check_branch
          %452 = sbr.rel (%p450) target = $region44
        $region43: #{transformer_encoder_forward.1} parent=11 // pred_region
          _
        $region44: #{transformer_encoder_forward.1} parent=11 // pred_fallthru
          _
        // Predicated region
        $region45: #{transformer_encoder_forward.1} parent=11 // pred_check
          %p453 = pneg %p241
        $region46: #{transformer_encoder_forward.1} parent=11 // pred_check_branch
          %455 = sbr.rel (%p453) target = $region48
        $region47: #{transformer_encoder_forward.1} parent=11 // pred_region
          _
        $region48: #{transformer_encoder_forward.1} parent=11 // pred_fallthru
          _
        // Predicated region
        $region49: #{transformer_encoder_forward.1} parent=11 // pred_check
          %p456 = pneg %p262
        $region50: #{transformer_encoder_forward.1} parent=11 // pred_check_branch
          %458 = sbr.rel (%p456) target = $region52
        $region51: #{transformer_encoder_forward.1} parent=11 // pred_region
          _
        $region52: #{transformer_encoder_forward.1} parent=11 // pred_fallthru
          _
        // Predicated region
        $region53: #{transformer_encoder_forward.1} parent=11 // pred_check
          %p459 = pneg %p283
        $region54: #{transformer_encoder_forward.1} parent=11 // pred_check_branch
          %461 = sbr.rel (%p459) target = $region56
        $region55: #{transformer_encoder_forward.1} parent=11 // pred_region
          _
        $region56: #{transformer_encoder_forward.1} parent=11 // pred_fallthru
          _
        // Predicated region
        $region57: #{transformer_encoder_forward.1} parent=11 // pred_check
          %p462 = pneg %p304
        $region58: #{transformer_encoder_forward.1} parent=11 // pred_check_branch
          %464 = sbr.rel (%p462) target = $region60
        $region59: #{transformer_encoder_forward.1} parent=11 // pred_region
          _
        $region60: #{transformer_encoder_forward.1} parent=11 // pred_fallthru
          _
        // Predicated region
        $region61: #{transformer_encoder_forward.1} parent=11 // pred_check
          %p465 = pneg %p325
        $region62: #{transformer_encoder_forward.1} parent=11 // pred_check_branch
          %467 = sbr.rel (%p465) target = $region64
        $region63: #{transformer_encoder_forward.1} parent=11 // pred_region
          _
        $region64: #{transformer_encoder_forward.1} parent=11 // pred_fallthru
          _
        // Predicated region
        $region65: #{transformer_encoder_forward.1} parent=11 // pred_check
          %p468 = pneg %p346
        $region66: #{transformer_encoder_forward.1} parent=11 // pred_check_branch
          %470 = sbr.rel (%p468) target = $region68
        $region67: #{transformer_encoder_forward.1} parent=11 // pred_region
          _
        $region68: #{transformer_encoder_forward.1} parent=11 // pred_fallthru
          _
        // Predicated region
        $region69: #{transformer_encoder_forward.1} parent=11 // pred_check
          %p471 = pneg %p367
        $region70: #{transformer_encoder_forward.1} parent=11 // pred_check_branch
          %473 = sbr.rel (%p471) target = $region72
        $region71: #{transformer_encoder_forward.1} parent=11 // pred_region
          _
        $region72: #{transformer_encoder_forward.1} parent=11 // pred_fallthru
          _
        // Predicated region
        $region73: #{transformer_encoder_forward.1} parent=11 // pred_check
          %p474 = pneg %p388
        $region74: #{transformer_encoder_forward.1} parent=11 // pred_check_branch
          %476 = sbr.rel (%p474) target = $region76
        $region75: #{transformer_encoder_forward.1} parent=11 // pred_region
          _
        $region76: #{transformer_encoder_forward.1} parent=11 // pred_fallthru
          _
      $region12: #{transformer_encoder_forward.1} parent=5 // pred_fallthru
        _
      %p477 = scmp.lt.s32.totalorder %s26, 2
      // Predicated region
      $region77: #{transformer_encoder_forward.1} parent=5 // pred_check
        %p478 = pneg %p477
      $region78: #{transformer_encoder_forward.1} parent=5 // pred_check_branch
        %480 = sbr.rel (%p478) target = $region80
      $region79: #{transformer_encoder_forward.1} parent=5 // pred_region
        // Predicated region
        $region81: #{transformer_encoder_forward.1} parent=79 // pred_check
          %p481 = pneg %p46
        $region82: #{transformer_encoder_forward.1} parent=79 // pred_check_branch
          %483 = sbr.rel (%p481) target = $region84
        $region83: #{transformer_encoder_forward.1} parent=79 // pred_region
          %s484 = smul.u32 16, %s26
          %p485 = scmp.lt.s32.totalorder %s484, 31
          %s486 = scalar_select %p485, %s484, 31
          %s487 = smul.addr %s486, 8
          %s488 = scalar_lea.vmem %s0, %s487
          %s489 = smul.u32 16, %s26
        $region84: #{transformer_encoder_forward.1} parent=79 // pred_fallthru
          _
      $region80: #{transformer_encoder_forward.1} parent=5 // pred_fallthru
        _
      %p490 = scmp.le.s32.totalorder 1, %s26
      %p491 = scmp.lt.s32.totalorder %s26, 3
      %p492 = pnand %p490, %p491
      %p493 = pneg %p492
      // Predicated region
      $region85: #{transformer_encoder_forward.1} parent=5 // pred_check
        _
      $region86: #{transformer_encoder_forward.1} parent=5 // pred_check_branch
        %495 = sbr.rel (%p492) target = $region88
      $region87: #{transformer_encoder_forward.1} parent=5 // pred_region
        %s496 = ssub.s32 %s26, 1
        %s497 = smul.u32 16, %s31
        %p498 = scmp.lt.s32.totalorder %s497, 31
        %s499 = scalar_select %p498, %s497, 31
        %s500 = smul.addr %s499, 8
        %s501 = scalar_lea.vmem %s0, %s500
        %p502 = pneg %p52
        %p503 = pneg %p49
        %p504 = pneg %p73
        %p505 = pneg %p70
        %p506 = pneg %p94
        %p507 = pneg %p91
        %p508 = pneg %p115
        %p509 = pneg %p112
        %p510 = pneg %p136
        %p511 = pneg %p133
        %p512 = pneg %p157
        %p513 = pneg %p154
        %p514 = pneg %p178
        %p515 = pneg %p175
        %p516 = pneg %p199
        %p517 = pneg %p196
        %p518 = pneg %p220
        %p519 = pneg %p217
        %p520 = pneg %p241
        %p521 = pneg %p238
        %p522 = pneg %p262
        %p523 = pneg %p259
        %p524 = pneg %p283
        %p525 = pneg %p280
        %p526 = pneg %p304
        %p527 = pneg %p301
        %p528 = pneg %p325
        %p529 = pneg %p322
        %p530 = pneg %p346
        %p531 = pneg %p343
        %p532 = pneg %p367
        %p533 = pneg %p364
        %p534 = pneg %p388
        %p535 = pneg %p385
        %p536 = pneg %p414
        %p537 = pneg %p411
        %s538 = sand.u32 %s401, 1
        %s539 = scalar_lea.sflag [#allocation7], %s538
        %s540 = sand.u32 %s401, 1
        %s541 = smul.addr %s540, 128
        %s542 = scalar_lea.vmem [#allocation6], %s541
        %s543 = smul.u32 16, %s31
        %p544 = scmp.lt.s32.totalorder %s543, 31
        %s545 = scalar_select %p544, %s543, 31
        %s546 = smul.addr %s545, 8
        %s547 = scalar_lea.vmem %s0, %s546
        %s548 = smul.u32 16, %s31
        %s549 = smul.u32 16, %s31
        %v550 = vld [vmem:[%s547] sm:$0xff]
        %v551 = vld [vmem:[%s547 + $0x8] sm:$0xff]
        %v552 = vld [vmem:[%s547 + $0x10] sm:$0xff]
        %v553 = vld [vmem:[%s547 + $0x18] sm:$0xff]
        %v554 = vld [vmem:[%s547 + $0x20] sm:$0xff]
        %v555 = vld [vmem:[%s547 + $0x28] sm:$0xff]
        %v556 = vld [vmem:[%s547 + $0x30] sm:$0xff]
        %v557 = vld [vmem:[%s547 + $0x38] sm:$0xff]
        %v558 = vld [vmem:[%s547 + $0x40] sm:$0xff]
        %v559 = vld [vmem:[%s547 + $0x48] sm:$0xff]
        %v560 = vld [vmem:[%s547 + $0x50] sm:$0xff]
        %v561 = vld [vmem:[%s547 + $0x58] sm:$0xff]
        %v562 = vld [vmem:[%s547 + $0x60] sm:$0xff]
        %v563 = vld [vmem:[%s547 + $0x68] sm:$0xff]
        %v564 = vld [vmem:[%s547 + $0x70] sm:$0xff]
        %v565 = vld [vmem:[%s547 + $0x78] sm:$0xff]
        %v566 = vld [vmem:[%s1] sm:$0x1]
        %v567 = vld [vmem:[%s2] sm:$0x1]
        %568 = vadd.xlane.f32.xlu0 %v550
        %v569 = vpop.xlane.xlu0 %568
        %570 = vadd.xlane.f32.xlu0 %v551
        %v571 = vpop.xlane.xlu0 %570
        %572 = vadd.xlane.f32.xlu0 %v552
        %v573 = vpop.xlane.xlu0 %572
        %574 = vadd.xlane.f32.xlu0 %v553
        %v575 = vpop.xlane.xlu0 %574
        %576 = vadd.xlane.f32.xlu0 %v554
        %v577 = vpop.xlane.xlu0 %576
        %578 = vadd.xlane.f32.xlu0 %v555
        %v579 = vpop.xlane.xlu0 %578
        %580 = vadd.xlane.f32.xlu0 %v556
        %v581 = vpop.xlane.xlu0 %580
        %582 = vadd.xlane.f32.xlu0 %v557
        %v583 = vpop.xlane.xlu0 %582
        %584 = vadd.xlane.f32.xlu0 %v558
        %v585 = vpop.xlane.xlu0 %584
        %586 = vadd.xlane.f32.xlu0 %v559
        %v587 = vpop.xlane.xlu0 %586
        %588 = vadd.xlane.f32.xlu0 %v560
        %v589 = vpop.xlane.xlu0 %588
        %590 = vadd.xlane.f32.xlu0 %v561
        %v591 = vpop.xlane.xlu0 %590
        %592 = vadd.xlane.f32.xlu0 %v562
        %v593 = vpop.xlane.xlu0 %592
        %594 = vadd.xlane.f32.xlu0 %v563
        %v595 = vpop.xlane.xlu0 %594
        %596 = vadd.xlane.f32.xlu0 %v564
        %v597 = vpop.xlane.xlu0 %596
        %598 = vadd.xlane.f32.xlu0 %v565
        %v599 = vpop.xlane.xlu0 %598
        %v600 = vrcp.pop 128.0
        %v601 = vmul.f32 128.0, %v600
        %v602 = vsub.f32 1.0, %v601
        %v603 = vmul.f32 %v600, %v602
        %v604 = vadd.f32 %v600, %v603
        %vm605 = vweird.f32 %v600
        %v606 = vsel %vm605, %v600, %v604
        %v607 = vmul.f32 %v569, %v606
        %v608 = vmul.f32 %v571, %v606
        %v609 = vmul.f32 %v573, %v606
        %v610 = vmul.f32 %v575, %v606
        %v611 = vmul.f32 %v577, %v606
        %v612 = vmul.f32 %v579, %v606
        %v613 = vmul.f32 %v581, %v606
        %v614 = vmul.f32 %v583, %v606
        %v615 = vmul.f32 %v585, %v606
        %v616 = vmul.f32 %v587, %v606
        %v617 = vmul.f32 %v589, %v606
        %v618 = vmul.f32 %v591, %v606
        %v619 = vmul.f32 %v593, %v606
        %v620 = vmul.f32 %v595, %v606
        %v621 = vmul.f32 %v597, %v606
        %v622 = vmul.f32 %v599, %v606
        %v623 = vsub.f32 %v550, %v607
        %v624 = vsub.f32 %v551, %v608
        %v625 = vsub.f32 %v552, %v609
        %v626 = vsub.f32 %v553, %v610
        %v627 = vsub.f32 %v554, %v611
        %v628 = vsub.f32 %v555, %v612
        %v629 = vsub.f32 %v556, %v613
        %v630 = vsub.f32 %v557, %v614
        %v631 = vsub.f32 %v558, %v615
        %v632 = vsub.f32 %v559, %v616
        %v633 = vsub.f32 %v560, %v617
        %v634 = vsub.f32 %v561, %v618
        %v635 = vsub.f32 %v562, %v619
        %v636 = vsub.f32 %v563, %v620
        %v637 = vsub.f32 %v564, %v621
        %v638 = vsub.f32 %v565, %v622
        %v639 = vmul.f32 %v623, %v623
        %v640 = vmul.f32 %v624, %v624
        %v641 = vmul.f32 %v625, %v625
        %v642 = vmul.f32 %v626, %v626
        %v643 = vmul.f32 %v627, %v627
        %v644 = vmul.f32 %v628, %v628
        %v645 = vmul.f32 %v629, %v629
        %v646 = vmul.f32 %v630, %v630
        %v647 = vmul.f32 %v631, %v631
        %v648 = vmul.f32 %v632, %v632
        %v649 = vmul.f32 %v633, %v633
        %v650 = vmul.f32 %v634, %v634
        %v651 = vmul.f32 %v635, %v635
        %v652 = vmul.f32 %v636, %v636
        %v653 = vmul.f32 %v637, %v637
        %v654 = vmul.f32 %v638, %v638
        %655 = vadd.xlane.f32.xlu0 %v639
        %v656 = vpop.xlane.xlu0 %655
        %657 = vadd.xlane.f32.xlu0 %v640
        %v658 = vpop.xlane.xlu0 %657
        %659 = vadd.xlane.f32.xlu0 %v641
        %v660 = vpop.xlane.xlu0 %659
        %661 = vadd.xlane.f32.xlu0 %v642
        %v662 = vpop.xlane.xlu0 %661
        %663 = vadd.xlane.f32.xlu0 %v643
        %v664 = vpop.xlane.xlu0 %663
        %665 = vadd.xlane.f32.xlu0 %v644
        %v666 = vpop.xlane.xlu0 %665
        %667 = vadd.xlane.f32.xlu0 %v645
        %v668 = vpop.xlane.xlu0 %667
        %669 = vadd.xlane.f32.xlu0 %v646
        %v670 = vpop.xlane.xlu0 %669
        %671 = vadd.xlane.f32.xlu0 %v647
        %v672 = vpop.xlane.xlu0 %671
        %673 = vadd.xlane.f32.xlu0 %v648
        %v674 = vpop.xlane.xlu0 %673
        %675 = vadd.xlane.f32.xlu0 %v649
        %v676 = vpop.xlane.xlu0 %675
        %677 = vadd.xlane.f32.xlu0 %v650
        %v678 = vpop.xlane.xlu0 %677
        %679 = vadd.xlane.f32.xlu0 %v651
        %v680 = vpop.xlane.xlu0 %679
        %681 = vadd.xlane.f32.xlu0 %v652
        %v682 = vpop.xlane.xlu0 %681
        %683 = vadd.xlane.f32.xlu0 %v653
        %v684 = vpop.xlane.xlu0 %683
        %685 = vadd.xlane.f32.xlu0 %v654
        %v686 = vpop.xlane.xlu0 %685
        %v687 = vmul.f32 %v656, %v606
        %v688 = vmul.f32 %v658, %v606
        %v689 = vmul.f32 %v660, %v606
        %v690 = vmul.f32 %v662, %v606
        %v691 = vmul.f32 %v664, %v606
        %v692 = vmul.f32 %v666, %v606
        %v693 = vmul.f32 %v668, %v606
        %v694 = vmul.f32 %v670, %v606
        %v695 = vmul.f32 %v672, %v606
        %v696 = vmul.f32 %v674, %v606
        %v697 = vmul.f32 %v676, %v606
        %v698 = vmul.f32 %v678, %v606
        %v699 = vmul.f32 %v680, %v606
        %v700 = vmul.f32 %v682, %v606
        %v701 = vmul.f32 %v684, %v606
        %v702 = vmul.f32 %v686, %v606
        %v703 = vadd.f32 %v687, 1e-05
        %v704 = vadd.f32 %v688, 1e-05
        %v705 = vadd.f32 %v689, 1e-05
        %v706 = vadd.f32 %v690, 1e-05
        %v707 = vadd.f32 %v691, 1e-05
        %v708 = vadd.f32 %v692, 1e-05
        %v709 = vadd.f32 %v693, 1e-05
        %v710 = vadd.f32 %v694, 1e-05
        %v711 = vadd.f32 %v695, 1e-05
        %v712 = vadd.f32 %v696, 1e-05
        %v713 = vadd.f32 %v697, 1e-05
        %v714 = vadd.f32 %v698, 1e-05
        %v715 = vadd.f32 %v699, 1e-05
        %v716 = vadd.f32 %v700, 1e-05
        %v717 = vadd.f32 %v701, 1e-05
        %v718 = vadd.f32 %v702, 1e-05
        %v719 = vrsqrt.pop %v703
        %v720 = vmul.f32 %v719, %v703
        %v721 = vmul.f32 %v720, %v719
        %v722 = vmul.f32 0.5, %v721
        %v723 = vsub.f32 1.5, %v722
        %v724 = vmul.f32 %v719, %v723
        %vm725 = vweird.f32 %v703
        %vm726 = vweird.f32 %v719
        %vm727 = vmor %vm725, %vm726
        %v728 = vsel %vm727, %v719, %v724
        %v729 = vrsqrt.pop %v704
        %v730 = vmul.f32 %v729, %v704
        %v731 = vmul.f32 %v730, %v729
        %v732 = vmul.f32 0.5, %v731
        %v733 = vsub.f32 1.5, %v732
        %v734 = vmul.f32 %v729, %v733
        %vm735 = vweird.f32 %v704
        %vm736 = vweird.f32 %v729
        %vm737 = vmor %vm735, %vm736
        %v738 = vsel %vm737, %v729, %v734
        %v739 = vrsqrt.pop %v705
        %v740 = vmul.f32 %v739, %v705
        %v741 = vmul.f32 %v740, %v739
        %v742 = vmul.f32 0.5, %v741
        %v743 = vsub.f32 1.5, %v742
        %v744 = vmul.f32 %v739, %v743
        %vm745 = vweird.f32 %v705
        %vm746 = vweird.f32 %v739
        %vm747 = vmor %vm745, %vm746
        %v748 = vsel %vm747, %v739, %v744
        %v749 = vrsqrt.pop %v706
        %v750 = vmul.f32 %v749, %v706
        %v751 = vmul.f32 %v750, %v749
        %v752 = vmul.f32 0.5, %v751
        %v753 = vsub.f32 1.5, %v752
        %v754 = vmul.f32 %v749, %v753
        %vm755 = vweird.f32 %v706
        %vm756 = vweird.f32 %v749
        %vm757 = vmor %vm755, %vm756
        %v758 = vsel %vm757, %v749, %v754
        %v759 = vrsqrt.pop %v707
        %v760 = vmul.f32 %v759, %v707
        %v761 = vmul.f32 %v760, %v759
        %v762 = vmul.f32 0.5, %v761
        %v763 = vsub.f32 1.5, %v762
        %v764 = vmul.f32 %v759, %v763
        %vm765 = vweird.f32 %v707
        %vm766 = vweird.f32 %v759
        %vm767 = vmor %vm765, %vm766
        %v768 = vsel %vm767, %v759, %v764
        %v769 = vrsqrt.pop %v708
        %v770 = vmul.f32 %v769, %v708
        %v771 = vmul.f32 %v770, %v769
        %v772 = vmul.f32 0.5, %v771
        %v773 = vsub.f32 1.5, %v772
        %v774 = vmul.f32 %v769, %v773
        %vm775 = vweird.f32 %v708
        %vm776 = vweird.f32 %v769
        %vm777 = vmor %vm775, %vm776
        %v778 = vsel %vm777, %v769, %v774
        %v779 = vrsqrt.pop %v709
        %v780 = vmul.f32 %v779, %v709
        %v781 = vmul.f32 %v780, %v779
        %v782 = vmul.f32 0.5, %v781
        %v783 = vsub.f32 1.5, %v782
        %v784 = vmul.f32 %v779, %v783
        %vm785 = vweird.f32 %v709
        %vm786 = vweird.f32 %v779
        %vm787 = vmor %vm785, %vm786
        %v788 = vsel %vm787, %v779, %v784
        %v789 = vrsqrt.pop %v710
        %v790 = vmul.f32 %v789, %v710
        %v791 = vmul.f32 %v790, %v789
        %v792 = vmul.f32 0.5, %v791
        %v793 = vsub.f32 1.5, %v792
        %v794 = vmul.f32 %v789, %v793
        %vm795 = vweird.f32 %v710
        %vm796 = vweird.f32 %v789
        %vm797 = vmor %vm795, %vm796
        %v798 = vsel %vm797, %v789, %v794
        %v799 = vrsqrt.pop %v711
        %v800 = vmul.f32 %v799, %v711
        %v801 = vmul.f32 %v800, %v799
        %v802 = vmul.f32 0.5, %v801
        %v803 = vsub.f32 1.5, %v802
        %v804 = vmul.f32 %v799, %v803
        %vm805 = vweird.f32 %v711
        %vm806 = vweird.f32 %v799
        %vm807 = vmor %vm805, %vm806
        %v808 = vsel %vm807, %v799, %v804
        %v809 = vrsqrt.pop %v712
        %v810 = vmul.f32 %v809, %v712
        %v811 = vmul.f32 %v810, %v809
        %v812 = vmul.f32 0.5, %v811
        %v813 = vsub.f32 1.5, %v812
        %v814 = vmul.f32 %v809, %v813
        %vm815 = vweird.f32 %v712
        %vm816 = vweird.f32 %v809
        %vm817 = vmor %vm815, %vm816
        %v818 = vsel %vm817, %v809, %v814
        %v819 = vrsqrt.pop %v713
        %v820 = vmul.f32 %v819, %v713
        %v821 = vmul.f32 %v820, %v819
        %v822 = vmul.f32 0.5, %v821
        %v823 = vsub.f32 1.5, %v822
        %v824 = vmul.f32 %v819, %v823
        %vm825 = vweird.f32 %v713
        %vm826 = vweird.f32 %v819
        %vm827 = vmor %vm825, %vm826
        %v828 = vsel %vm827, %v819, %v824
        %v829 = vrsqrt.pop %v714
        %v830 = vmul.f32 %v829, %v714
        %v831 = vmul.f32 %v830, %v829
        %v832 = vmul.f32 0.5, %v831
        %v833 = vsub.f32 1.5, %v832
        %v834 = vmul.f32 %v829, %v833
        %vm835 = vweird.f32 %v714
        %vm836 = vweird.f32 %v829
        %vm837 = vmor %vm835, %vm836
        %v838 = vsel %vm837, %v829, %v834
        %v839 = vrsqrt.pop %v715
        %v840 = vmul.f32 %v839, %v715
        %v841 = vmul.f32 %v840, %v839
        %v842 = vmul.f32 0.5, %v841
        %v843 = vsub.f32 1.5, %v842
        %v844 = vmul.f32 %v839, %v843
        %vm845 = vweird.f32 %v715
        %vm846 = vweird.f32 %v839
        %vm847 = vmor %vm845, %vm846
        %v848 = vsel %vm847, %v839, %v844
        %v849 = vrsqrt.pop %v716
        %v850 = vmul.f32 %v849, %v716
        %v851 = vmul.f32 %v850, %v849
        %v852 = vmul.f32 0.5, %v851
        %v853 = vsub.f32 1.5, %v852
        %v854 = vmul.f32 %v849, %v853
        %vm855 = vweird.f32 %v716
        %vm856 = vweird.f32 %v849
        %vm857 = vmor %vm855, %vm856
        %v858 = vsel %vm857, %v849, %v854
        %v859 = vrsqrt.pop %v717
        %v860 = vmul.f32 %v859, %v717
        %v861 = vmul.f32 %v860, %v859
        %v862 = vmul.f32 0.5, %v861
        %v863 = vsub.f32 1.5, %v862
        %v864 = vmul.f32 %v859, %v863
        %vm865 = vweird.f32 %v717
        %vm866 = vweird.f32 %v859
        %vm867 = vmor %vm865, %vm866
        %v868 = vsel %vm867, %v859, %v864
        %v869 = vrsqrt.pop %v718
        %v870 = vmul.f32 %v869, %v718
        %v871 = vmul.f32 %v870, %v869
        %v872 = vmul.f32 0.5, %v871
        %v873 = vsub.f32 1.5, %v872
        %v874 = vmul.f32 %v869, %v873
        %vm875 = vweird.f32 %v718
        %vm876 = vweird.f32 %v869
        %vm877 = vmor %vm875, %vm876
        %v878 = vsel %vm877, %v869, %v874
        %v879 = vmul.f32 %v623, %v728
        %v880 = vmul.f32 %v624, %v738
        %v881 = vmul.f32 %v625, %v748
        %v882 = vmul.f32 %v626, %v758
        %v883 = vmul.f32 %v627, %v768
        %v884 = vmul.f32 %v628, %v778
        %v885 = vmul.f32 %v629, %v788
        %v886 = vmul.f32 %v630, %v798
        %v887 = vmul.f32 %v631, %v808
        %v888 = vmul.f32 %v632, %v818
        %v889 = vmul.f32 %v633, %v828
        %v890 = vmul.f32 %v634, %v838
        %v891 = vmul.f32 %v635, %v848
        %v892 = vmul.f32 %v636, %v858
        %v893 = vmul.f32 %v637, %v868
        %v894 = vmul.f32 %v638, %v878
        %v896 = vperm.slane %v566, 0
        %v898 = vmul.f32 %v879, %v896
        %v899 = vmul.f32 %v880, %v896
        %v900 = vmul.f32 %v881, %v896
        %v901 = vmul.f32 %v882, %v896
        %v902 = vmul.f32 %v883, %v896
        %v903 = vmul.f32 %v884, %v896
        %v904 = vmul.f32 %v885, %v896
        %v905 = vmul.f32 %v886, %v896
        %v906 = vmul.f32 %v887, %v896
        %v907 = vmul.f32 %v888, %v896
        %v908 = vmul.f32 %v889, %v896
        %v909 = vmul.f32 %v890, %v896
        %v910 = vmul.f32 %v891, %v896
        %v911 = vmul.f32 %v892, %v896
        %v912 = vmul.f32 %v893, %v896
        %v913 = vmul.f32 %v894, %v896
        %v915 = vperm.slane %v567, 0
        %v917 = vadd.f32 %v898, %v915
        %v918 = vadd.f32 %v899, %v915
        %v919 = vadd.f32 %v900, %v915
        %v920 = vadd.f32 %v901, %v915
        %v921 = vadd.f32 %v902, %v915
        %v922 = vadd.f32 %v903, %v915
        %v923 = vadd.f32 %v904, %v915
        %v924 = vadd.f32 %v905, %v915
        %v925 = vadd.f32 %v906, %v915
        %v926 = vadd.f32 %v907, %v915
        %v927 = vadd.f32 %v908, %v915
        %v928 = vadd.f32 %v909, %v915
        %v929 = vadd.f32 %v910, %v915
        %v930 = vadd.f32 %v911, %v915
        %v931 = vadd.f32 %v912, %v915
        %v932 = vadd.f32 %v913, %v915
        %v933 = vld [vmem:[%s3] sm:$0xff]
        %v934 = vld [vmem:[%s3 + $0x8] sm:$0xff]
        %v935 = vld [vmem:[%s3 + $0x10] sm:$0xff]
        %v936 = vld [vmem:[%s3 + $0x18] sm:$0xff]
        %v937 = vld [vmem:[%s3 + $0x20] sm:$0xff]
        %v938 = vld [vmem:[%s3 + $0x28] sm:$0xff]
        %v939 = vld [vmem:[%s3 + $0x30] sm:$0xff]
        %v940 = vld [vmem:[%s3 + $0x38] sm:$0xff]
        %v941 = vld [vmem:[%s3 + $0x40] sm:$0xff]
        %v942 = vld [vmem:[%s3 + $0x48] sm:$0xff]
        %v943 = vld [vmem:[%s3 + $0x50] sm:$0xff]
        %v944 = vld [vmem:[%s3 + $0x58] sm:$0xff]
        %v945 = vld [vmem:[%s3 + $0x60] sm:$0xff]
        %v946 = vld [vmem:[%s3 + $0x68] sm:$0xff]
        %v947 = vld [vmem:[%s3 + $0x70] sm:$0xff]
        %v948 = vld [vmem:[%s3 + $0x78] sm:$0xff]
        %v949 = vld [vmem:[%s4] sm:$0x1]
        %v951 = vperm.slane %v949, 0
        %953 = vmatpush.msra.mxu0 %v948
        %954 = vmatpush.msra.mxu0 %v947
        %955 = vmatpush.msra.mxu0 %v946
        %956 = vmatpush.msra.mxu0 %v945
        %957 = vmatpush.msra.mxu0 %v944
        %958 = vmatpush.msra.mxu0 %v943
        %959 = vmatpush.msra.mxu0 %v942
        %960 = vmatpush.msra.mxu0 %v941
        %961 = vmatpush.msra.mxu0 %v940
        %962 = vmatpush.msra.mxu0 %v939
        %963 = vmatpush.msra.mxu0 %v938
        %964 = vmatpush.msra.mxu0 %v937
        %965 = vmatpush.msra.mxu0 %v936
        %966 = vmatpush.msra.mxu0 %v935
        %967 = vmatpush.msra.mxu0 %v934
        %968 = vmatpush.msra.mxu0 %v933
        %969 = vmatmul.f32.gmra.mxu0 %v917
        %v970 = vpop.f32.mrf.mxu0
        %v971 = vadd.f32 %v951, %v970
        %972 = vmatmul.f32.gmra.mxu0 %v918
        %v973 = vpop.f32.mrf.mxu0
        %v974 = vadd.f32 %v951, %v973
        %975 = vmatmul.f32.gmra.mxu0 %v919
        %v976 = vpop.f32.mrf.mxu0
        %v977 = vadd.f32 %v951, %v976
        %978 = vmatmul.f32.gmra.mxu0 %v920
        %v979 = vpop.f32.mrf.mxu0
        %v980 = vadd.f32 %v951, %v979
        %981 = vmatmul.f32.gmra.mxu0 %v921
        %v982 = vpop.f32.mrf.mxu0
        %v983 = vadd.f32 %v951, %v982
        %984 = vmatmul.f32.gmra.mxu0 %v922
        %v985 = vpop.f32.mrf.mxu0
        %v986 = vadd.f32 %v951, %v985
        %987 = vmatmul.f32.gmra.mxu0 %v923
        %v988 = vpop.f32.mrf.mxu0
        %v989 = vadd.f32 %v951, %v988
        %990 = vmatmul.f32.gmra.mxu0 %v924
        %v991 = vpop.f32.mrf.mxu0
        %v992 = vadd.f32 %v951, %v991
        %993 = vmatmul.f32.gmra.mxu0 %v925
        %v994 = vpop.f32.mrf.mxu0
        %v995 = vadd.f32 %v951, %v994
        %996 = vmatmul.f32.gmra.mxu0 %v926
        %v997 = vpop.f32.mrf.mxu0
        %v998 = vadd.f32 %v951, %v997
        %999 = vmatmul.f32.gmra.mxu0 %v927
        %v1000 = vpop.f32.mrf.mxu0
        %v1001 = vadd.f32 %v951, %v1000
        %1002 = vmatmul.f32.gmra.mxu0 %v928
        %v1003 = vpop.f32.mrf.mxu0
        %v1004 = vadd.f32 %v951, %v1003
        %1005 = vmatmul.f32.gmra.mxu0 %v929
        %v1006 = vpop.f32.mrf.mxu0
        %v1007 = vadd.f32 %v951, %v1006
        %1008 = vmatmul.f32.gmra.mxu0 %v930
        %v1009 = vpop.f32.mrf.mxu0
        %v1010 = vadd.f32 %v951, %v1009
        %1011 = vmatmul.f32.gmra.mxu0 %v931
        %v1012 = vpop.f32.mrf.mxu0
        %v1013 = vadd.f32 %v951, %v1012
        %1014 = vmatmul.f32.gmra.mxu0 %v932
        %v1015 = vpop.f32.mrf.mxu0
        %v1016 = vadd.f32 %v951, %v1015
        %1017 = vdwg.mxu0
        %v1018 = vmul.f32 %v971, 0.088388346
        %v1019 = vmul.f32 %v974, 0.088388346
        %v1020 = vmul.f32 %v977, 0.088388346
        %v1021 = vmul.f32 %v980, 0.088388346
        %v1022 = vmul.f32 %v983, 0.088388346
        %v1023 = vmul.f32 %v986, 0.088388346
        %v1024 = vmul.f32 %v989, 0.088388346
        %v1025 = vmul.f32 %v992, 0.088388346
        %v1026 = vmul.f32 %v995, 0.088388346
        %v1027 = vmul.f32 %v998, 0.088388346
        %v1028 = vmul.f32 %v1001, 0.088388346
        %v1029 = vmul.f32 %v1004, 0.088388346
        %v1030 = vmul.f32 %v1007, 0.088388346
        %v1031 = vmul.f32 %v1010, 0.088388346
        %v1032 = vmul.f32 %v1013, 0.088388346
        %v1033 = vmul.f32 %v1016, 0.088388346
        %1034 = vst [vmem:[#allocation2] sm:$0xff] %v1018
        %1035 = vst [vmem:[#allocation2 + $0x8] sm:$0xff] %v1019
        %1036 = vst [vmem:[#allocation2 + $0x10] sm:$0xff] %v1020
        %1037 = vst [vmem:[#allocation2 + $0x18] sm:$0xff] %v1021
        %1038 = vst [vmem:[#allocation2 + $0x20] sm:$0xff] %v1022
        %1039 = vst [vmem:[#allocation2 + $0x28] sm:$0xff] %v1023
        %1040 = vst [vmem:[#allocation2 + $0x30] sm:$0xff] %v1024
        %1041 = vst [vmem:[#allocation2 + $0x38] sm:$0xff] %v1025
        %1042 = vst [vmem:[#allocation2 + $0x40] sm:$0xff] %v1026
        %1043 = vst [vmem:[#allocation2 + $0x48] sm:$0xff] %v1027
        %1044 = vst [vmem:[#allocation2 + $0x50] sm:$0xff] %v1028
        %1045 = vst [vmem:[#allocation2 + $0x58] sm:$0xff] %v1029
        %1046 = vst [vmem:[#allocation2 + $0x60] sm:$0xff] %v1030
        %1047 = vst [vmem:[#allocation2 + $0x68] sm:$0xff] %v1031
        %1048 = vst [vmem:[#allocation2 + $0x70] sm:$0xff] %v1032
        %1049 = vst [vmem:[#allocation2 + $0x78] sm:$0xff] %v1033
        %v1050 = vld [vmem:[%s5] sm:$0xff]
        %v1051 = vld [vmem:[%s5 + $0x8] sm:$0xff]
        %v1052 = vld [vmem:[%s5 + $0x10] sm:$0xff]
        %v1053 = vld [vmem:[%s5 + $0x18] sm:$0xff]
        %v1054 = vld [vmem:[%s5 + $0x20] sm:$0xff]
        %v1055 = vld [vmem:[%s5 + $0x28] sm:$0xff]
        %v1056 = vld [vmem:[%s5 + $0x30] sm:$0xff]
        %v1057 = vld [vmem:[%s5 + $0x38] sm:$0xff]
        %v1058 = vld [vmem:[%s5 + $0x40] sm:$0xff]
        %v1059 = vld [vmem:[%s5 + $0x48] sm:$0xff]
        %v1060 = vld [vmem:[%s5 + $0x50] sm:$0xff]
        %v1061 = vld [vmem:[%s5 + $0x58] sm:$0xff]
        %v1062 = vld [vmem:[%s5 + $0x60] sm:$0xff]
        %v1063 = vld [vmem:[%s5 + $0x68] sm:$0xff]
        %v1064 = vld [vmem:[%s5 + $0x70] sm:$0xff]
        %v1065 = vld [vmem:[%s5 + $0x78] sm:$0xff]
        %v1066 = vld [vmem:[%s6] sm:$0x1]
        %v1068 = vperm.slane %v1066, 0
        %1070 = vmatpush.msra.mxu0 %v1065
        %1071 = vmatpush.msra.mxu0 %v1064
        %1072 = vmatpush.msra.mxu0 %v1063
        %1073 = vmatpush.msra.mxu0 %v1062
        %1074 = vmatpush.msra.mxu0 %v1061
        %1075 = vmatpush.msra.mxu0 %v1060
        %1076 = vmatpush.msra.mxu0 %v1059
        %1077 = vmatpush.msra.mxu0 %v1058
        %1078 = vmatpush.msra.mxu0 %v1057
        %1079 = vmatpush.msra.mxu0 %v1056
        %1080 = vmatpush.msra.mxu0 %v1055
        %1081 = vmatpush.msra.mxu0 %v1054
        %1082 = vmatpush.msra.mxu0 %v1053
        %1083 = vmatpush.msra.mxu0 %v1052
        %1084 = vmatpush.msra.mxu0 %v1051
        %1085 = vmatpush.msra.mxu0 %v1050
        %1086 = vmatmul.f32.gmra.mxu0 %v917
        %v1087 = vpop.f32.mrf.mxu0
        %v1088 = vadd.f32 %v1068, %v1087
        %1089 = vmatmul.f32.gmra.mxu0 %v918
        %v1090 = vpop.f32.mrf.mxu0
        %v1091 = vadd.f32 %v1068, %v1090
        %1092 = vmatmul.f32.gmra.mxu0 %v919
        %v1093 = vpop.f32.mrf.mxu0
        %v1094 = vadd.f32 %v1068, %v1093
        %1095 = vmatmul.f32.gmra.mxu0 %v920
        %v1096 = vpop.f32.mrf.mxu0
        %v1097 = vadd.f32 %v1068, %v1096
        %1098 = vmatmul.f32.gmra.mxu0 %v921
        %v1099 = vpop.f32.mrf.mxu0
        %v1100 = vadd.f32 %v1068, %v1099
        %1101 = vmatmul.f32.gmra.mxu0 %v922
        %v1102 = vpop.f32.mrf.mxu0
        %v1103 = vadd.f32 %v1068, %v1102
        %1104 = vmatmul.f32.gmra.mxu0 %v923
        %v1105 = vpop.f32.mrf.mxu0
        %v1106 = vadd.f32 %v1068, %v1105
        %1107 = vmatmul.f32.gmra.mxu0 %v924
        %v1108 = vpop.f32.mrf.mxu0
        %v1109 = vadd.f32 %v1068, %v1108
        %1110 = vmatmul.f32.gmra.mxu0 %v925
        %v1111 = vpop.f32.mrf.mxu0
        %v1112 = vadd.f32 %v1068, %v1111
        %1113 = vmatmul.f32.gmra.mxu0 %v926
        %v1114 = vpop.f32.mrf.mxu0
        %v1115 = vadd.f32 %v1068, %v1114
        %1116 = vmatmul.f32.gmra.mxu0 %v927
        %v1117 = vpop.f32.mrf.mxu0
        %v1118 = vadd.f32 %v1068, %v1117
        %1119 = vmatmul.f32.gmra.mxu0 %v928
        %v1120 = vpop.f32.mrf.mxu0
        %v1121 = vadd.f32 %v1068, %v1120
        %1122 = vmatmul.f32.gmra.mxu0 %v929
        %v1123 = vpop.f32.mrf.mxu0
        %v1124 = vadd.f32 %v1068, %v1123
        %1125 = vmatmul.f32.gmra.mxu0 %v930
        %v1126 = vpop.f32.mrf.mxu0
        %v1127 = vadd.f32 %v1068, %v1126
        %1128 = vmatmul.f32.gmra.mxu0 %v931
        %v1129 = vpop.f32.mrf.mxu0
        %v1130 = vadd.f32 %v1068, %v1129
        %1131 = vmatmul.f32.gmra.mxu0 %v932
        %v1132 = vpop.f32.mrf.mxu0
        %v1133 = vadd.f32 %v1068, %v1132
        %1134 = vdwg.mxu0
        %1135 = vst [vmem:[#allocation3] sm:$0xff] %v1088
        %1136 = vst [vmem:[#allocation3 + $0x8] sm:$0xff] %v1091
        %1137 = vst [vmem:[#allocation3 + $0x10] sm:$0xff] %v1094
        %1138 = vst [vmem:[#allocation3 + $0x18] sm:$0xff] %v1097
        %1139 = vst [vmem:[#allocation3 + $0x20] sm:$0xff] %v1100
        %1140 = vst [vmem:[#allocation3 + $0x28] sm:$0xff] %v1103
        %1141 = vst [vmem:[#allocation3 + $0x30] sm:$0xff] %v1106
        %1142 = vst [vmem:[#allocation3 + $0x38] sm:$0xff] %v1109
        %1143 = vst [vmem:[#allocation3 + $0x40] sm:$0xff] %v1112
        %1144 = vst [vmem:[#allocation3 + $0x48] sm:$0xff] %v1115
        %1145 = vst [vmem:[#allocation3 + $0x50] sm:$0xff] %v1118
        %1146 = vst [vmem:[#allocation3 + $0x58] sm:$0xff] %v1121
        %1147 = vst [vmem:[#allocation3 + $0x60] sm:$0xff] %v1124
        %1148 = vst [vmem:[#allocation3 + $0x68] sm:$0xff] %v1127
        %1149 = vst [vmem:[#allocation3 + $0x70] sm:$0xff] %v1130
        %1150 = vst [vmem:[#allocation3 + $0x78] sm:$0xff] %v1133
        %v1151 = vld [vmem:[%s7] sm:$0xff]
        %v1152 = vld [vmem:[%s7 + $0x8] sm:$0xff]
        %v1153 = vld [vmem:[%s7 + $0x10] sm:$0xff]
        %v1154 = vld [vmem:[%s7 + $0x18] sm:$0xff]
        %v1155 = vld [vmem:[%s7 + $0x20] sm:$0xff]
        %v1156 = vld [vmem:[%s7 + $0x28] sm:$0xff]
        %v1157 = vld [vmem:[%s7 + $0x30] sm:$0xff]
        %v1158 = vld [vmem:[%s7 + $0x38] sm:$0xff]
        %v1159 = vld [vmem:[%s7 + $0x40] sm:$0xff]
        %v1160 = vld [vmem:[%s7 + $0x48] sm:$0xff]
        %v1161 = vld [vmem:[%s7 + $0x50] sm:$0xff]
        %v1162 = vld [vmem:[%s7 + $0x58] sm:$0xff]
        %v1163 = vld [vmem:[%s7 + $0x60] sm:$0xff]
        %v1164 = vld [vmem:[%s7 + $0x68] sm:$0xff]
        %v1165 = vld [vmem:[%s7 + $0x70] sm:$0xff]
        %v1166 = vld [vmem:[%s7 + $0x78] sm:$0xff]
        %v1167 = vld [vmem:[%s8] sm:$0x1]
        %v1169 = vperm.slane %v1167, 0
        %1171 = vmatpush.msra.mxu0 %v1166
        %1172 = vmatpush.msra.mxu0 %v1165
        %1173 = vmatpush.msra.mxu0 %v1164
        %1174 = vmatpush.msra.mxu0 %v1163
        %1175 = vmatpush.msra.mxu0 %v1162
        %1176 = vmatpush.msra.mxu0 %v1161
        %1177 = vmatpush.msra.mxu0 %v1160
        %1178 = vmatpush.msra.mxu0 %v1159
        %1179 = vmatpush.msra.mxu0 %v1158
        %1180 = vmatpush.msra.mxu0 %v1157
        %1181 = vmatpush.msra.mxu0 %v1156
        %1182 = vmatpush.msra.mxu0 %v1155
        %1183 = vmatpush.msra.mxu0 %v1154
        %1184 = vmatpush.msra.mxu0 %v1153
        %1185 = vmatpush.msra.mxu0 %v1152
        %1186 = vmatpush.msra.mxu0 %v1151
        %1187 = vmatmul.f32.gmra.mxu0 %v917
        %v1188 = vpop.f32.mrf.mxu0
        %v1189 = vadd.f32 %v1169, %v1188
        %1190 = vmatmul.f32.gmra.mxu0 %v918
        %v1191 = vpop.f32.mrf.mxu0
        %v1192 = vadd.f32 %v1169, %v1191
        %1193 = vmatmul.f32.gmra.mxu0 %v919
        %v1194 = vpop.f32.mrf.mxu0
        %v1195 = vadd.f32 %v1169, %v1194
        %1196 = vmatmul.f32.gmra.mxu0 %v920
        %v1197 = vpop.f32.mrf.mxu0
        %v1198 = vadd.f32 %v1169, %v1197
        %1199 = vmatmul.f32.gmra.mxu0 %v921
        %v1200 = vpop.f32.mrf.mxu0
        %v1201 = vadd.f32 %v1169, %v1200
        %1202 = vmatmul.f32.gmra.mxu0 %v922
        %v1203 = vpop.f32.mrf.mxu0
        %v1204 = vadd.f32 %v1169, %v1203
        %1205 = vmatmul.f32.gmra.mxu0 %v923
        %v1206 = vpop.f32.mrf.mxu0
        %v1207 = vadd.f32 %v1169, %v1206
        %1208 = vmatmul.f32.gmra.mxu0 %v924
        %v1209 = vpop.f32.mrf.mxu0
        %v1210 = vadd.f32 %v1169, %v1209
        %1211 = vmatmul.f32.gmra.mxu0 %v925
        %v1212 = vpop.f32.mrf.mxu0
        %v1213 = vadd.f32 %v1169, %v1212
        %1214 = vmatmul.f32.gmra.mxu0 %v926
        %v1215 = vpop.f32.mrf.mxu0
        %v1216 = vadd.f32 %v1169, %v1215
        %1217 = vmatmul.f32.gmra.mxu0 %v927
        %v1218 = vpop.f32.mrf.mxu0
        %v1219 = vadd.f32 %v1169, %v1218
        %1220 = vmatmul.f32.gmra.mxu0 %v928
        %v1221 = vpop.f32.mrf.mxu0
        %v1222 = vadd.f32 %v1169, %v1221
        %1223 = vmatmul.f32.gmra.mxu0 %v929
        %v1224 = vpop.f32.mrf.mxu0
        %v1225 = vadd.f32 %v1169, %v1224
        %1226 = vmatmul.f32.gmra.mxu0 %v930
        %v1227 = vpop.f32.mrf.mxu0
        %v1228 = vadd.f32 %v1169, %v1227
        %1229 = vmatmul.f32.gmra.mxu0 %v931
        %v1230 = vpop.f32.mrf.mxu0
        %v1231 = vadd.f32 %v1169, %v1230
        %1232 = vmatmul.f32.gmra.mxu0 %v932
        %v1233 = vpop.f32.mrf.mxu0
        %v1234 = vadd.f32 %v1169, %v1233
        %1235 = vdwg.mxu0
        %1236 = vst [vmem:[#allocation4] sm:$0xff] %v1189
        %1237 = vst [vmem:[#allocation4 + $0x8] sm:$0xff] %v1192
        %1238 = vst [vmem:[#allocation4 + $0x10] sm:$0xff] %v1195
        %1239 = vst [vmem:[#allocation4 + $0x18] sm:$0xff] %v1198
        %1240 = vst [vmem:[#allocation4 + $0x20] sm:$0xff] %v1201
        %1241 = vst [vmem:[#allocation4 + $0x28] sm:$0xff] %v1204
        %1242 = vst [vmem:[#allocation4 + $0x30] sm:$0xff] %v1207
        %1243 = vst [vmem:[#allocation4 + $0x38] sm:$0xff] %v1210
        %1244 = vst [vmem:[#allocation4 + $0x40] sm:$0xff] %v1213
        %1245 = vst [vmem:[#allocation4 + $0x48] sm:$0xff] %v1216
        %1246 = vst [vmem:[#allocation4 + $0x50] sm:$0xff] %v1219
        %1247 = vst [vmem:[#allocation4 + $0x58] sm:$0xff] %v1222
        %1248 = vst [vmem:[#allocation4 + $0x60] sm:$0xff] %v1225
        %1249 = vst [vmem:[#allocation4 + $0x68] sm:$0xff] %v1228
        %1250 = vst [vmem:[#allocation4 + $0x70] sm:$0xff] %v1231
        %1251 = vst [vmem:[#allocation4 + $0x78] sm:$0xff] %v1234
        %v1252 = vlaneseq
        %v1253 = vshrl.u32 %v1252, 7
        loop: start=0, step=1, limit=16
        $region89: #{transformer_encoder_forward.1} parent=87 // loop_pre_header
          _
        $region90: #{transformer_encoder_forward.1} parent=87 // loop_header
          %s1255 = sphi 0, %s1259
          %p1256 = scmp.ge.s32.totalorder %s1255, 16
        $region91: #{transformer_encoder_forward.1} parent=87 // loop_header_branch
          %1258 = sbr.rel (%p1256) target = $region95
        $region92: #{transformer_encoder_forward.1} parent=87 // loop_body
          %s1260 = smul.u32 %s1255, 8
          %s1261 = scalar_lea.vmem [#allocation2], %s1260
          %v1262 = vld [vmem:[%s1261] sm:$0xff]
          %s1263 = scalar_lea.vmem [#allocation3], %s1260
          %v1264 = vld [vmem:[%s1263] sm:$0xff]
          %s1265 = scalar_lea.vmem [#allocation4], %s1260
          %v1266 = vld [vmem:[%s1265] sm:$0xff]
          %1267 = vmax.xlane.f32.xlu0 %v1264
          %v1268 = vpop.xlane.xlu0 %1267
          %1269 = vmin.xlane.f32.xlu0 %v1264
          %v1270 = vpop.xlane.xlu0 %1269
          %1271 = vxpose.xlu0.b32.start [1/16] %v1264, 128
          %1272 = vxpose.xlu0.b32.cont [2/16] 0.0, 128
          %1273 = vxpose.xlu0.b32.cont [3/16] 0.0, 128
          %1274 = vxpose.xlu0.b32.cont [4/16] 0.0, 128
          %1275 = vxpose.xlu0.b32.cont [5/16] 0.0, 128
          %1276 = vxpose.xlu0.b32.cont [6/16] 0.0, 128
          %1277 = vxpose.xlu0.b32.cont [7/16] 0.0, 128
          %1278 = vxpose.xlu0.b32.cont [8/16] 0.0, 128
          %1279 = vxpose.xlu0.b32.cont [9/16] 0.0, 128
          %1280 = vxpose.xlu0.b32.cont [10/16] 0.0, 128
          %1281 = vxpose.xlu0.b32.cont [11/16] 0.0, 128
          %1282 = vxpose.xlu0.b32.cont [12/16] 0.0, 128
          %1283 = vxpose.xlu0.b32.cont [13/16] 0.0, 128
          %1284 = vxpose.xlu0.b32.cont [14/16] 0.0, 128
          %1285 = vxpose.xlu0.b32.cont [15/16] 0.0, 128
          %1286 = vxpose.xlu0.b32.end [16/16] 0.0, 128
          %v1287 = vpop.trf.xlu0
          %v1288 = vpop.trf.xlu0
          %v1289 = vpop.trf.xlu0
          %v1290 = vpop.trf.xlu0
          %v1291 = vpop.trf.xlu0
          %v1292 = vpop.trf.xlu0
          %v1293 = vpop.trf.xlu0
          %v1294 = vpop.trf.xlu0
          %v1295 = vpop.trf.xlu0
          %v1296 = vpop.trf.xlu0
          %v1297 = vpop.trf.xlu0
          %v1298 = vpop.trf.xlu0
          %v1299 = vpop.trf.xlu0
          %v1300 = vpop.trf.xlu0
          %v1301 = vpop.trf.xlu0
          %v1302 = vpop.trf.xlu0
          %1303 = vxpose.xlu0.b32.start [1/16] %v1266, 128
          %1304 = vxpose.xlu0.b32.cont [2/16] 0.0, 128
          %1305 = vxpose.xlu0.b32.cont [3/16] 0.0, 128
          %1306 = vxpose.xlu0.b32.cont [4/16] 0.0, 128
          %1307 = vxpose.xlu0.b32.cont [5/16] 0.0, 128
          %1308 = vxpose.xlu0.b32.cont [6/16] 0.0, 128
          %1309 = vxpose.xlu0.b32.cont [7/16] 0.0, 128
          %1310 = vxpose.xlu0.b32.cont [8/16] 0.0, 128
          %1311 = vxpose.xlu0.b32.cont [9/16] 0.0, 128
          %1312 = vxpose.xlu0.b32.cont [10/16] 0.0, 128
          %1313 = vxpose.xlu0.b32.cont [11/16] 0.0, 128
          %1314 = vxpose.xlu0.b32.cont [12/16] 0.0, 128
          %1315 = vxpose.xlu0.b32.cont [13/16] 0.0, 128
          %1316 = vxpose.xlu0.b32.cont [14/16] 0.0, 128
          %1317 = vxpose.xlu0.b32.cont [15/16] 0.0, 128
          %1318 = vxpose.xlu0.b32.end [16/16] 0.0, 128
          %v1319 = vpop.trf.xlu0
          %v1320 = vpop.trf.xlu0
          %v1321 = vpop.trf.xlu0
          %v1322 = vpop.trf.xlu0
          %v1323 = vpop.trf.xlu0
          %v1324 = vpop.trf.xlu0
          %v1325 = vpop.trf.xlu0
          %v1326 = vpop.trf.xlu0
          %v1327 = vpop.trf.xlu0
          %v1328 = vpop.trf.xlu0
          %v1329 = vpop.trf.xlu0
          %v1330 = vpop.trf.xlu0
          %v1331 = vpop.trf.xlu0
          %v1332 = vpop.trf.xlu0
          %v1333 = vpop.trf.xlu0
          %v1334 = vpop.trf.xlu0
          %vm1335 = vcmp.ge.f32.partialorder %v1262, 0.0
          %v1336 = vsel %vm1335, %v1268, %v1270
          %v1337 = vmul.f32 %v1262, %v1336
          %1339 = vset.pattern.permute.xlu0 0
          %1340 = vperm.xlu0 %1339, %v1287
          %v1341 = vpop.permute.xlu0 %1340
          %1344 = vset.pattern.permute.xlu0 0
          %1345 = vperm.xlu0 %1344, %v1288
          %v1346 = vpop.permute.xlu0 %1345
          %1349 = vset.pattern.permute.xlu0 0
          %1350 = vperm.xlu0 %1349, %v1289
          %v1351 = vpop.permute.xlu0 %1350
          %1354 = vset.pattern.permute.xlu0 0
          %1355 = vperm.xlu0 %1354, %v1290
          %v1356 = vpop.permute.xlu0 %1355
          %1359 = vset.pattern.permute.xlu0 0
          %1360 = vperm.xlu0 %1359, %v1291
          %v1361 = vpop.permute.xlu0 %1360
          %1364 = vset.pattern.permute.xlu0 0
          %1365 = vperm.xlu0 %1364, %v1292
          %v1366 = vpop.permute.xlu0 %1365
          %1369 = vset.pattern.permute.xlu0 0
          %1370 = vperm.xlu0 %1369, %v1293
          %v1371 = vpop.permute.xlu0 %1370
          %1374 = vset.pattern.permute.xlu0 0
          %1375 = vperm.xlu0 %1374, %v1294
          %v1376 = vpop.permute.xlu0 %1375
          %1379 = vset.pattern.permute.xlu0 0
          %1380 = vperm.xlu0 %1379, %v1295
          %v1381 = vpop.permute.xlu0 %1380
          %1384 = vset.pattern.permute.xlu0 0
          %1385 = vperm.xlu0 %1384, %v1296
          %v1386 = vpop.permute.xlu0 %1385
          %1389 = vset.pattern.permute.xlu0 0
          %1390 = vperm.xlu0 %1389, %v1297
          %v1391 = vpop.permute.xlu0 %1390
          %1394 = vset.pattern.permute.xlu0 0
          %1395 = vperm.xlu0 %1394, %v1298
          %v1396 = vpop.permute.xlu0 %1395
          %1399 = vset.pattern.permute.xlu0 0
          %1400 = vperm.xlu0 %1399, %v1299
          %v1401 = vpop.permute.xlu0 %1400
          %1404 = vset.pattern.permute.xlu0 0
          %1405 = vperm.xlu0 %1404, %v1300
          %v1406 = vpop.permute.xlu0 %1405
          %1409 = vset.pattern.permute.xlu0 0
          %1410 = vperm.xlu0 %1409, %v1301
          %v1411 = vpop.permute.xlu0 %1410
          %1414 = vset.pattern.permute.xlu0 0
          %1415 = vperm.xlu0 %1414, %v1302
          %v1416 = vpop.permute.xlu0 %1415
          %v1418 = vperm.slane %v1262, 0
          %v1419 = vmul.f32 %v1341, %v1418
          %v1420 = vmul.f32 %v1346, %v1418
          %v1421 = vmul.f32 %v1351, %v1418
          %v1422 = vmul.f32 %v1356, %v1418
          %v1423 = vmul.f32 %v1361, %v1418
          %v1424 = vmul.f32 %v1366, %v1418
          %v1425 = vmul.f32 %v1371, %v1418
          %v1426 = vmul.f32 %v1376, %v1418
          %v1427 = vmul.f32 %v1381, %v1418
          %v1428 = vmul.f32 %v1386, %v1418
          %v1429 = vmul.f32 %v1391, %v1418
          %v1430 = vmul.f32 %v1396, %v1418
          %v1431 = vmul.f32 %v1401, %v1418
          %v1432 = vmul.f32 %v1406, %v1418
          %v1433 = vmul.f32 %v1411, %v1418
          %v1434 = vmul.f32 %v1416, %v1418
          %v1435 = vperm.slane %v1337, 0
          %v1436 = vsub.f32 %v1419, %v1435
          %v1437 = vsub.f32 %v1420, %v1435
          %v1438 = vsub.f32 %v1421, %v1435
          %v1439 = vsub.f32 %v1422, %v1435
          %v1440 = vsub.f32 %v1423, %v1435
          %v1441 = vsub.f32 %v1424, %v1435
          %v1442 = vsub.f32 %v1425, %v1435
          %v1443 = vsub.f32 %v1426, %v1435
          %v1444 = vsub.f32 %v1427, %v1435
          %v1445 = vsub.f32 %v1428, %v1435
          %v1446 = vsub.f32 %v1429, %v1435
          %v1447 = vsub.f32 %v1430, %v1435
          %v1448 = vsub.f32 %v1431, %v1435
          %v1449 = vsub.f32 %v1432, %v1435
          %v1450 = vsub.f32 %v1433, %v1435
          %v1451 = vsub.f32 %v1434, %v1435
          %v1452 = vmul.f32 %v1436, 1.442695
          %v1453 = vpow.pop %v1452
          %v1454 = vmul.f32 %v1437, 1.442695
          %v1455 = vpow.pop %v1454
          %v1456 = vmul.f32 %v1438, 1.442695
          %v1457 = vpow.pop %v1456
          %v1458 = vmul.f32 %v1439, 1.442695
          %v1459 = vpow.pop %v1458
          %v1460 = vmul.f32 %v1440, 1.442695
          %v1461 = vpow.pop %v1460
          %v1462 = vmul.f32 %v1441, 1.442695
          %v1463 = vpow.pop %v1462
          %v1464 = vmul.f32 %v1442, 1.442695
          %v1465 = vpow.pop %v1464
          %v1466 = vmul.f32 %v1443, 1.442695
          %v1467 = vpow.pop %v1466
          %v1468 = vmul.f32 %v1444, 1.442695
          %v1469 = vpow.pop %v1468
          %v1470 = vmul.f32 %v1445, 1.442695
          %v1471 = vpow.pop %v1470
          %v1472 = vmul.f32 %v1446, 1.442695
          %v1473 = vpow.pop %v1472
          %v1474 = vmul.f32 %v1447, 1.442695
          %v1475 = vpow.pop %v1474
          %v1476 = vmul.f32 %v1448, 1.442695
          %v1477 = vpow.pop %v1476
          %v1478 = vmul.f32 %v1449, 1.442695
          %v1479 = vpow.pop %v1478
          %v1480 = vmul.f32 %v1450, 1.442695
          %v1481 = vpow.pop %v1480
          %v1482 = vmul.f32 %v1451, 1.442695
          %v1483 = vpow.pop %v1482
          %1485 = vset.pattern.permute.xlu0 0
          %1486 = vperm.xlu0 %1485, %v1319
          %v1487 = vpop.permute.xlu0 %1486
          %1490 = vset.pattern.permute.xlu0 0
          %1491 = vperm.xlu0 %1490, %v1320
          %v1492 = vpop.permute.xlu0 %1491
          %1495 = vset.pattern.permute.xlu0 0
          %1496 = vperm.xlu0 %1495, %v1321
          %v1497 = vpop.permute.xlu0 %1496
          %1500 = vset.pattern.permute.xlu0 0
          %1501 = vperm.xlu0 %1500, %v1322
          %v1502 = vpop.permute.xlu0 %1501
          %1505 = vset.pattern.permute.xlu0 0
          %1506 = vperm.xlu0 %1505, %v1323
          %v1507 = vpop.permute.xlu0 %1506
          %1510 = vset.pattern.permute.xlu0 0
          %1511 = vperm.xlu0 %1510, %v1324
          %v1512 = vpop.permute.xlu0 %1511
          %1515 = vset.pattern.permute.xlu0 0
          %1516 = vperm.xlu0 %1515, %v1325
          %v1517 = vpop.permute.xlu0 %1516
          %1520 = vset.pattern.permute.xlu0 0
          %1521 = vperm.xlu0 %1520, %v1326
          %v1522 = vpop.permute.xlu0 %1521
          %1525 = vset.pattern.permute.xlu0 0
          %1526 = vperm.xlu0 %1525, %v1327
          %v1527 = vpop.permute.xlu0 %1526
          %1530 = vset.pattern.permute.xlu0 0
          %1531 = vperm.xlu0 %1530, %v1328
          %v1532 = vpop.permute.xlu0 %1531
          %1535 = vset.pattern.permute.xlu0 0
          %1536 = vperm.xlu0 %1535, %v1329
          %v1537 = vpop.permute.xlu0 %1536
          %1540 = vset.pattern.permute.xlu0 0
          %1541 = vperm.xlu0 %1540, %v1330
          %v1542 = vpop.permute.xlu0 %1541
          %1545 = vset.pattern.permute.xlu0 0
          %1546 = vperm.xlu0 %1545, %v1331
          %v1547 = vpop.permute.xlu0 %1546
          %1550 = vset.pattern.permute.xlu0 0
          %1551 = vperm.xlu0 %1550, %v1332
          %v1552 = vpop.permute.xlu0 %1551
          %1555 = vset.pattern.permute.xlu0 0
          %1556 = vperm.xlu0 %1555, %v1333
          %v1557 = vpop.permute.xlu0 %1556
          %1560 = vset.pattern.permute.xlu0 0
          %1561 = vperm.xlu0 %1560, %v1334
          %v1562 = vpop.permute.xlu0 %1561
          %v1564 = vmul.f32 %v1453, %v1487
          %v1565 = vmul.f32 %v1455, %v1492
          %v1566 = vmul.f32 %v1457, %v1497
          %v1567 = vmul.f32 %v1459, %v1502
          %v1568 = vmul.f32 %v1461, %v1507
          %v1569 = vmul.f32 %v1463, %v1512
          %v1570 = vmul.f32 %v1465, %v1517
          %v1571 = vmul.f32 %v1467, %v1522
          %v1572 = vmul.f32 %v1469, %v1527
          %v1573 = vmul.f32 %v1471, %v1532
          %v1574 = vmul.f32 %v1473, %v1537
          %v1575 = vmul.f32 %v1475, %v1542
          %v1576 = vmul.f32 %v1477, %v1547
          %v1577 = vmul.f32 %v1479, %v1552
          %v1578 = vmul.f32 %v1481, %v1557
          %v1579 = vmul.f32 %v1483, %v1562
          %v1580 = vadd.f32 %v1564, %v1565
          %v1581 = vadd.f32 %v1580, %v1566
          %v1582 = vadd.f32 %v1581, %v1567
          %v1583 = vadd.f32 %v1582, %v1568
          %v1584 = vadd.f32 %v1583, %v1569
          %v1585 = vadd.f32 %v1584, %v1570
          %v1586 = vadd.f32 %v1585, %v1571
          %v1587 = vadd.f32 %v1586, %v1572
          %v1588 = vadd.f32 %v1587, %v1573
          %v1589 = vadd.f32 %v1588, %v1574
          %v1590 = vadd.f32 %v1589, %v1575
          %v1591 = vadd.f32 %v1590, %v1576
          %v1592 = vadd.f32 %v1591, %v1577
          %v1593 = vadd.f32 %v1592, %v1578
          %v1594 = vadd.f32 %v1593, %v1579
          %v1595 = vrot.slane %v1594, 4
          %v1596 = vadd.f32 %v1594, %v1595
          %v1597 = vrot.slane %v1596, 2
          %v1598 = vadd.f32 %v1596, %v1597
          %v1599 = vrot.slane %v1598, 1
          %v1600 = vadd.f32 %v1598, %v1599
          %v1601 = vadd.f32 %v1453, %v1455
          %v1602 = vadd.f32 %v1601, %v1457
          %v1603 = vadd.f32 %v1602, %v1459
          %v1604 = vadd.f32 %v1603, %v1461
          %v1605 = vadd.f32 %v1604, %v1463
          %v1606 = vadd.f32 %v1605, %v1465
          %v1607 = vadd.f32 %v1606, %v1467
          %v1608 = vadd.f32 %v1607, %v1469
          %v1609 = vadd.f32 %v1608, %v1471
          %v1610 = vadd.f32 %v1609, %v1473
          %v1611 = vadd.f32 %v1610, %v1475
          %v1612 = vadd.f32 %v1611, %v1477
          %v1613 = vadd.f32 %v1612, %v1479
          %v1614 = vadd.f32 %v1613, %v1481
          %v1615 = vadd.f32 %v1614, %v1483
          %v1616 = vrot.slane %v1615, 4
          %v1617 = vadd.f32 %v1615, %v1616
          %v1618 = vrot.slane %v1617, 2
          %v1619 = vadd.f32 %v1617, %v1618
          %v1620 = vrot.slane %v1619, 1
          %v1621 = vadd.f32 %v1619, %v1620
          %v1622 = vrcp.pop %v1621
          %v1623 = vmul.f32 %v1600, %v1622
          %vm1624 = vcmp.eq.s32.totalorder %v1253, 0
          %v1625 = vsel %vm1624, 1, 0
          %vm1626 = vcmp.eq.s32.totalorder %v1625, 1
          %v1627 = vsel %vm1626, %v1623, 0.0
          %v1628 = vadd.f32 %v1627, 0.0
          %1629 = vset.pattern.permute.xlu0 1
          %1630 = vperm.xlu0 %1629, %v1287
          %v1631 = vpop.permute.xlu0 %1630
          %1633 = vset.pattern.permute.xlu0 1
          %1634 = vperm.xlu0 %1633, %v1288
          %v1635 = vpop.permute.xlu0 %1634
          %1637 = vset.pattern.permute.xlu0 1
          %1638 = vperm.xlu0 %1637, %v1289
          %v1639 = vpop.permute.xlu0 %1638
          %1641 = vset.pattern.permute.xlu0 1
          %1642 = vperm.xlu0 %1641, %v1290
          %v1643 = vpop.permute.xlu0 %1642
          %1645 = vset.pattern.permute.xlu0 1
          %1646 = vperm.xlu0 %1645, %v1291
          %v1647 = vpop.permute.xlu0 %1646
          %1649 = vset.pattern.permute.xlu0 1
          %1650 = vperm.xlu0 %1649, %v1292
          %v1651 = vpop.permute.xlu0 %1650
          %1653 = vset.pattern.permute.xlu0 1
          %1654 = vperm.xlu0 %1653, %v1293
          %v1655 = vpop.permute.xlu0 %1654
          %1657 = vset.pattern.permute.xlu0 1
          %1658 = vperm.xlu0 %1657, %v1294
          %v1659 = vpop.permute.xlu0 %1658
          %1661 = vset.pattern.permute.xlu0 1
          %1662 = vperm.xlu0 %1661, %v1295
          %v1663 = vpop.permute.xlu0 %1662
          %1665 = vset.pattern.permute.xlu0 1
          %1666 = vperm.xlu0 %1665, %v1296
          %v1667 = vpop.permute.xlu0 %1666
          %1669 = vset.pattern.permute.xlu0 1
          %1670 = vperm.xlu0 %1669, %v1297
          %v1671 = vpop.permute.xlu0 %1670
          %1673 = vset.pattern.permute.xlu0 1
          %1674 = vperm.xlu0 %1673, %v1298
          %v1675 = vpop.permute.xlu0 %1674
          %1677 = vset.pattern.permute.xlu0 1
          %1678 = vperm.xlu0 %1677, %v1299
          %v1679 = vpop.permute.xlu0 %1678
          %1681 = vset.pattern.permute.xlu0 1
          %1682 = vperm.xlu0 %1681, %v1300
          %v1683 = vpop.permute.xlu0 %1682
          %1685 = vset.pattern.permute.xlu0 1
          %1686 = vperm.xlu0 %1685, %v1301
          %v1687 = vpop.permute.xlu0 %1686
          %1689 = vset.pattern.permute.xlu0 1
          %1690 = vperm.xlu0 %1689, %v1302
          %v1691 = vpop.permute.xlu0 %1690
          %v1693 = vperm.slane %v1262, 1
          %v1694 = vmul.f32 %v1631, %v1693
          %v1695 = vmul.f32 %v1635, %v1693
          %v1696 = vmul.f32 %v1639, %v1693
          %v1697 = vmul.f32 %v1643, %v1693
          %v1698 = vmul.f32 %v1647, %v1693
          %v1699 = vmul.f32 %v1651, %v1693
          %v1700 = vmul.f32 %v1655, %v1693
          %v1701 = vmul.f32 %v1659, %v1693
          %v1702 = vmul.f32 %v1663, %v1693
          %v1703 = vmul.f32 %v1667, %v1693
          %v1704 = vmul.f32 %v1671, %v1693
          %v1705 = vmul.f32 %v1675, %v1693
          %v1706 = vmul.f32 %v1679, %v1693
          %v1707 = vmul.f32 %v1683, %v1693
          %v1708 = vmul.f32 %v1687, %v1693
          %v1709 = vmul.f32 %v1691, %v1693
          %v1710 = vperm.slane %v1337, 1
          %v1711 = vsub.f32 %v1694, %v1710
          %v1712 = vsub.f32 %v1695, %v1710
          %v1713 = vsub.f32 %v1696, %v1710
          %v1714 = vsub.f32 %v1697, %v1710
          %v1715 = vsub.f32 %v1698, %v1710
          %v1716 = vsub.f32 %v1699, %v1710
          %v1717 = vsub.f32 %v1700, %v1710
          %v1718 = vsub.f32 %v1701, %v1710
          %v1719 = vsub.f32 %v1702, %v1710
          %v1720 = vsub.f32 %v1703, %v1710
          %v1721 = vsub.f32 %v1704, %v1710
          %v1722 = vsub.f32 %v1705, %v1710
          %v1723 = vsub.f32 %v1706, %v1710
          %v1724 = vsub.f32 %v1707, %v1710
          %v1725 = vsub.f32 %v1708, %v1710
          %v1726 = vsub.f32 %v1709, %v1710
          %v1727 = vmul.f32 %v1711, 1.442695
          %v1728 = vpow.pop %v1727
          %v1729 = vmul.f32 %v1712, 1.442695
          %v1730 = vpow.pop %v1729
          %v1731 = vmul.f32 %v1713, 1.442695
          %v1732 = vpow.pop %v1731
          %v1733 = vmul.f32 %v1714, 1.442695
          %v1734 = vpow.pop %v1733
          %v1735 = vmul.f32 %v1715, 1.442695
          %v1736 = vpow.pop %v1735
          %v1737 = vmul.f32 %v1716, 1.442695
          %v1738 = vpow.pop %v1737
          %v1739 = vmul.f32 %v1717, 1.442695
          %v1740 = vpow.pop %v1739
          %v1741 = vmul.f32 %v1718, 1.442695
          %v1742 = vpow.pop %v1741
          %v1743 = vmul.f32 %v1719, 1.442695
          %v1744 = vpow.pop %v1743
          %v1745 = vmul.f32 %v1720, 1.442695
          %v1746 = vpow.pop %v1745
          %v1747 = vmul.f32 %v1721, 1.442695
          %v1748 = vpow.pop %v1747
          %v1749 = vmul.f32 %v1722, 1.442695
          %v1750 = vpow.pop %v1749
          %v1751 = vmul.f32 %v1723, 1.442695
          %v1752 = vpow.pop %v1751
          %v1753 = vmul.f32 %v1724, 1.442695
          %v1754 = vpow.pop %v1753
          %v1755 = vmul.f32 %v1725, 1.442695
          %v1756 = vpow.pop %v1755
          %v1757 = vmul.f32 %v1726, 1.442695
          %v1758 = vpow.pop %v1757
          %1759 = vset.pattern.permute.xlu0 1
          %1760 = vperm.xlu0 %1759, %v1319
          %v1761 = vpop.permute.xlu0 %1760
          %1763 = vset.pattern.permute.xlu0 1
          %1764 = vperm.xlu0 %1763, %v1320
          %v1765 = vpop.permute.xlu0 %1764
          %1767 = vset.pattern.permute.xlu0 1
          %1768 = vperm.xlu0 %1767, %v1321
          %v1769 = vpop.permute.xlu0 %1768
          %1771 = vset.pattern.permute.xlu0 1
          %1772 = vperm.xlu0 %1771, %v1322
          %v1773 = vpop.permute.xlu0 %1772
          %1775 = vset.pattern.permute.xlu0 1
          %1776 = vperm.xlu0 %1775, %v1323
          %v1777 = vpop.permute.xlu0 %1776
          %1779 = vset.pattern.permute.xlu0 1
          %1780 = vperm.xlu0 %1779, %v1324
          %v1781 = vpop.permute.xlu0 %1780
          %1783 = vset.pattern.permute.xlu0 1
          %1784 = vperm.xlu0 %1783, %v1325
          %v1785 = vpop.permute.xlu0 %1784
          %1787 = vset.pattern.permute.xlu0 1
          %1788 = vperm.xlu0 %1787, %v1326
          %v1789 = vpop.permute.xlu0 %1788
          %1791 = vset.pattern.permute.xlu0 1
          %1792 = vperm.xlu0 %1791, %v1327
          %v1793 = vpop.permute.xlu0 %1792
          %1795 = vset.pattern.permute.xlu0 1
          %1796 = vperm.xlu0 %1795, %v1328
          %v1797 = vpop.permute.xlu0 %1796
          %1799 = vset.pattern.permute.xlu0 1
          %1800 = vperm.xlu0 %1799, %v1329
          %v1801 = vpop.permute.xlu0 %1800
          %1803 = vset.pattern.permute.xlu0 1
          %1804 = vperm.xlu0 %1803, %v1330
          %v1805 = vpop.permute.xlu0 %1804
          %1807 = vset.pattern.permute.xlu0 1
          %1808 = vperm.xlu0 %1807, %v1331
          %v1809 = vpop.permute.xlu0 %1808
          %1811 = vset.pattern.permute.xlu0 1
          %1812 = vperm.xlu0 %1811, %v1332
          %v1813 = vpop.permute.xlu0 %1812
          %1815 = vset.pattern.permute.xlu0 1
          %1816 = vperm.xlu0 %1815, %v1333
          %v1817 = vpop.permute.xlu0 %1816
          %1819 = vset.pattern.permute.xlu0 1
          %1820 = vperm.xlu0 %1819, %v1334
          %v1821 = vpop.permute.xlu0 %1820
          %v1823 = vmul.f32 %v1728, %v1761
          %v1824 = vmul.f32 %v1730, %v1765
          %v1825 = vmul.f32 %v1732, %v1769
          %v1826 = vmul.f32 %v1734, %v1773
          %v1827 = vmul.f32 %v1736, %v1777
          %v1828 = vmul.f32 %v1738, %v1781
          %v1829 = vmul.f32 %v1740, %v1785
          %v1830 = vmul.f32 %v1742, %v1789
          %v1831 = vmul.f32 %v1744, %v1793
          %v1832 = vmul.f32 %v1746, %v1797
          %v1833 = vmul.f32 %v1748, %v1801
          %v1834 = vmul.f32 %v1750, %v1805
          %v1835 = vmul.f32 %v1752, %v1809
          %v1836 = vmul.f32 %v1754, %v1813
          %v1837 = vmul.f32 %v1756, %v1817
          %v1838 = vmul.f32 %v1758, %v1821
          %v1839 = vadd.f32 %v1823, %v1824
          %v1840 = vadd.f32 %v1839, %v1825
          %v1841 = vadd.f32 %v1840, %v1826
          %v1842 = vadd.f32 %v1841, %v1827
          %v1843 = vadd.f32 %v1842, %v1828
          %v1844 = vadd.f32 %v1843, %v1829
          %v1845 = vadd.f32 %v1844, %v1830
          %v1846 = vadd.f32 %v1845, %v1831
          %v1847 = vadd.f32 %v1846, %v1832
          %v1848 = vadd.f32 %v1847, %v1833
          %v1849 = vadd.f32 %v1848, %v1834
          %v1850 = vadd.f32 %v1849, %v1835
          %v1851 = vadd.f32 %v1850, %v1836
          %v1852 = vadd.f32 %v1851, %v1837
          %v1853 = vadd.f32 %v1852, %v1838
          %v1854 = vrot.slane %v1853, 4
          %v1855 = vadd.f32 %v1853, %v1854
          %v1856 = vrot.slane %v1855, 2
          %v1857 = vadd.f32 %v1855, %v1856
          %v1858 = vrot.slane %v1857, 1
          %v1859 = vadd.f32 %v1857, %v1858
          %v1860 = vadd.f32 %v1728, %v1730
          %v1861 = vadd.f32 %v1860, %v1732
          %v1862 = vadd.f32 %v1861, %v1734
          %v1863 = vadd.f32 %v1862, %v1736
          %v1864 = vadd.f32 %v1863, %v1738
          %v1865 = vadd.f32 %v1864, %v1740
          %v1866 = vadd.f32 %v1865, %v1742
          %v1867 = vadd.f32 %v1866, %v1744
          %v1868 = vadd.f32 %v1867, %v1746
          %v1869 = vadd.f32 %v1868, %v1748
          %v1870 = vadd.f32 %v1869, %v1750
          %v1871 = vadd.f32 %v1870, %v1752
          %v1872 = vadd.f32 %v1871, %v1754
          %v1873 = vadd.f32 %v1872, %v1756
          %v1874 = vadd.f32 %v1873, %v1758
          %v1875 = vrot.slane %v1874, 4
          %v1876 = vadd.f32 %v1874, %v1875
          %v1877 = vrot.slane %v1876, 2
          %v1878 = vadd.f32 %v1876, %v1877
          %v1879 = vrot.slane %v1878, 1
          %v1880 = vadd.f32 %v1878, %v1879
          %v1881 = vrcp.pop %v1880
          %v1882 = vmul.f32 %v1859, %v1881
          %vm1883 = vcmp.eq.s32.totalorder %v1253, 1
          %v1884 = vsel %vm1883, 1, 0
          %vm1885 = vcmp.eq.s32.totalorder %v1884, 1
          %v1886 = vsel %vm1885, %v1882, 0.0
          %v1887 = vadd.f32 %v1628, %v1886
          %1888 = vset.pattern.permute.xlu0 2
          %1889 = vperm.xlu0 %1888, %v1287
          %v1890 = vpop.permute.xlu0 %1889
          %1892 = vset.pattern.permute.xlu0 2
          %1893 = vperm.xlu0 %1892, %v1288
          %v1894 = vpop.permute.xlu0 %1893
          %1896 = vset.pattern.permute.xlu0 2
          %1897 = vperm.xlu0 %1896, %v1289
          %v1898 = vpop.permute.xlu0 %1897
          %1900 = vset.pattern.permute.xlu0 2
          %1901 = vperm.xlu0 %1900, %v1290
          %v1902 = vpop.permute.xlu0 %1901
          %1904 = vset.pattern.permute.xlu0 2
          %1905 = vperm.xlu0 %1904, %v1291
          %v1906 = vpop.permute.xlu0 %1905
          %1908 = vset.pattern.permute.xlu0 2
          %1909 = vperm.xlu0 %1908, %v1292
          %v1910 = vpop.permute.xlu0 %1909
          %1912 = vset.pattern.permute.xlu0 2
          %1913 = vperm.xlu0 %1912, %v1293
          %v1914 = vpop.permute.xlu0 %1913
          %1916 = vset.pattern.permute.xlu0 2
          %1917 = vperm.xlu0 %1916, %v1294
          %v1918 = vpop.permute.xlu0 %1917
          %1920 = vset.pattern.permute.xlu0 2
          %1921 = vperm.xlu0 %1920, %v1295
          %v1922 = vpop.permute.xlu0 %1921
          %1924 = vset.pattern.permute.xlu0 2
          %1925 = vperm.xlu0 %1924, %v1296
          %v1926 = vpop.permute.xlu0 %1925
          %1928 = vset.pattern.permute.xlu0 2
          %1929 = vperm.xlu0 %1928, %v1297
          %v1930 = vpop.permute.xlu0 %1929
          %1932 = vset.pattern.permute.xlu0 2
          %1933 = vperm.xlu0 %1932, %v1298
          %v1934 = vpop.permute.xlu0 %1933
          %1936 = vset.pattern.permute.xlu0 2
          %1937 = vperm.xlu0 %1936, %v1299
          %v1938 = vpop.permute.xlu0 %1937
          %1940 = vset.pattern.permute.xlu0 2
          %1941 = vperm.xlu0 %1940, %v1300
          %v1942 = vpop.permute.xlu0 %1941
          %1944 = vset.pattern.permute.xlu0 2
          %1945 = vperm.xlu0 %1944, %v1301
          %v1946 = vpop.permute.xlu0 %1945
          %1948 = vset.pattern.permute.xlu0 2
          %1949 = vperm.xlu0 %1948, %v1302
          %v1950 = vpop.permute.xlu0 %1949
          %v1952 = vperm.slane %v1262, 2
          %v1953 = vmul.f32 %v1890, %v1952
          %v1954 = vmul.f32 %v1894, %v1952
          %v1955 = vmul.f32 %v1898, %v1952
          %v1956 = vmul.f32 %v1902, %v1952
          %v1957 = vmul.f32 %v1906, %v1952
          %v1958 = vmul.f32 %v1910, %v1952
          %v1959 = vmul.f32 %v1914, %v1952
          %v1960 = vmul.f32 %v1918, %v1952
          %v1961 = vmul.f32 %v1922, %v1952
          %v1962 = vmul.f32 %v1926, %v1952
          %v1963 = vmul.f32 %v1930, %v1952
          %v1964 = vmul.f32 %v1934, %v1952
          %v1965 = vmul.f32 %v1938, %v1952
          %v1966 = vmul.f32 %v1942, %v1952
          %v1967 = vmul.f32 %v1946, %v1952
          %v1968 = vmul.f32 %v1950, %v1952
          %v1969 = vperm.slane %v1337, 2
          %v1970 = vsub.f32 %v1953, %v1969
          %v1971 = vsub.f32 %v1954, %v1969
          %v1972 = vsub.f32 %v1955, %v1969
          %v1973 = vsub.f32 %v1956, %v1969
          %v1974 = vsub.f32 %v1957, %v1969
          %v1975 = vsub.f32 %v1958, %v1969
          %v1976 = vsub.f32 %v1959, %v1969
          %v1977 = vsub.f32 %v1960, %v1969
          %v1978 = vsub.f32 %v1961, %v1969
          %v1979 = vsub.f32 %v1962, %v1969
          %v1980 = vsub.f32 %v1963, %v1969
          %v1981 = vsub.f32 %v1964, %v1969
          %v1982 = vsub.f32 %v1965, %v1969
          %v1983 = vsub.f32 %v1966, %v1969
          %v1984 = vsub.f32 %v1967, %v1969
          %v1985 = vsub.f32 %v1968, %v1969
          %v1986 = vmul.f32 %v1970, 1.442695
          %v1987 = vpow.pop %v1986
          %v1988 = vmul.f32 %v1971, 1.442695
          %v1989 = vpow.pop %v1988
          %v1990 = vmul.f32 %v1972, 1.442695
          %v1991 = vpow.pop %v1990
          %v1992 = vmul.f32 %v1973, 1.442695
          %v1993 = vpow.pop %v1992
          %v1994 = vmul.f32 %v1974, 1.442695
          %v1995 = vpow.pop %v1994
          %v1996 = vmul.f32 %v1975, 1.442695
          %v1997 = vpow.pop %v1996
          %v1998 = vmul.f32 %v1976, 1.442695
          %v1999 = vpow.pop %v1998
          %v2000 = vmul.f32 %v1977, 1.442695
          %v2001 = vpow.pop %v2000
          %v2002 = vmul.f32 %v1978, 1.442695
          %v2003 = vpow.pop %v2002
          %v2004 = vmul.f32 %v1979, 1.442695
          %v2005 = vpow.pop %v2004
          %v2006 = vmul.f32 %v1980, 1.442695
          %v2007 = vpow.pop %v2006
          %v2008 = vmul.f32 %v1981, 1.442695
          %v2009 = vpow.pop %v2008
          %v2010 = vmul.f32 %v1982, 1.442695
          %v2011 = vpow.pop %v2010
          %v2012 = vmul.f32 %v1983, 1.442695
          %v2013 = vpow.pop %v2012
          %v2014 = vmul.f32 %v1984, 1.442695
          %v2015 = vpow.pop %v2014
          %v2016 = vmul.f32 %v1985, 1.442695
          %v2017 = vpow.pop %v2016
          %2018 = vset.pattern.permute.xlu0 2
          %2019 = vperm.xlu0 %2018, %v1319
          %v2020 = vpop.permute.xlu0 %2019
          %2022 = vset.pattern.permute.xlu0 2
          %2023 = vperm.xlu0 %2022, %v1320
          %v2024 = vpop.permute.xlu0 %2023
          %2026 = vset.pattern.permute.xlu0 2
          %2027 = vperm.xlu0 %2026, %v1321
          %v2028 = vpop.permute.xlu0 %2027
          %2030 = vset.pattern.permute.xlu0 2
          %2031 = vperm.xlu0 %2030, %v1322
          %v2032 = vpop.permute.xlu0 %2031
          %2034 = vset.pattern.permute.xlu0 2
          %2035 = vperm.xlu0 %2034, %v1323
          %v2036 = vpop.permute.xlu0 %2035
          %2038 = vset.pattern.permute.xlu0 2
          %2039 = vperm.xlu0 %2038, %v1324
          %v2040 = vpop.permute.xlu0 %2039
          %2042 = vset.pattern.permute.xlu0 2
          %2043 = vperm.xlu0 %2042, %v1325
          %v2044 = vpop.permute.xlu0 %2043
          %2046 = vset.pattern.permute.xlu0 2
          %2047 = vperm.xlu0 %2046, %v1326
          %v2048 = vpop.permute.xlu0 %2047
          %2050 = vset.pattern.permute.xlu0 2
          %2051 = vperm.xlu0 %2050, %v1327
          %v2052 = vpop.permute.xlu0 %2051
          %2054 = vset.pattern.permute.xlu0 2
          %2055 = vperm.xlu0 %2054, %v1328
          %v2056 = vpop.permute.xlu0 %2055
          %2058 = vset.pattern.permute.xlu0 2
          %2059 = vperm.xlu0 %2058, %v1329
          %v2060 = vpop.permute.xlu0 %2059
          %2062 = vset.pattern.permute.xlu0 2
          %2063 = vperm.xlu0 %2062, %v1330
          %v2064 = vpop.permute.xlu0 %2063
          %2066 = vset.pattern.permute.xlu0 2
          %2067 = vperm.xlu0 %2066, %v1331
          %v2068 = vpop.permute.xlu0 %2067
          %2070 = vset.pattern.permute.xlu0 2
          %2071 = vperm.xlu0 %2070, %v1332
          %v2072 = vpop.permute.xlu0 %2071
          %2074 = vset.pattern.permute.xlu0 2
          %2075 = vperm.xlu0 %2074, %v1333
          %v2076 = vpop.permute.xlu0 %2075
          %2078 = vset.pattern.permute.xlu0 2
          %2079 = vperm.xlu0 %2078, %v1334
          %v2080 = vpop.permute.xlu0 %2079
          %v2082 = vmul.f32 %v1987, %v2020
          %v2083 = vmul.f32 %v1989, %v2024
          %v2084 = vmul.f32 %v1991, %v2028
          %v2085 = vmul.f32 %v1993, %v2032
          %v2086 = vmul.f32 %v1995, %v2036
          %v2087 = vmul.f32 %v1997, %v2040
          %v2088 = vmul.f32 %v1999, %v2044
          %v2089 = vmul.f32 %v2001, %v2048
          %v2090 = vmul.f32 %v2003, %v2052
          %v2091 = vmul.f32 %v2005, %v2056
          %v2092 = vmul.f32 %v2007, %v2060
          %v2093 = vmul.f32 %v2009, %v2064
          %v2094 = vmul.f32 %v2011, %v2068
          %v2095 = vmul.f32 %v2013, %v2072
          %v2096 = vmul.f32 %v2015, %v2076
          %v2097 = vmul.f32 %v2017, %v2080
          %v2098 = vadd.f32 %v2082, %v2083
          %v2099 = vadd.f32 %v2098, %v2084
          %v2100 = vadd.f32 %v2099, %v2085
          %v2101 = vadd.f32 %v2100, %v2086
          %v2102 = vadd.f32 %v2101, %v2087
          %v2103 = vadd.f32 %v2102, %v2088
          %v2104 = vadd.f32 %v2103, %v2089
          %v2105 = vadd.f32 %v2104, %v2090
          %v2106 = vadd.f32 %v2105, %v2091
          %v2107 = vadd.f32 %v2106, %v2092
          %v2108 = vadd.f32 %v2107, %v2093
          %v2109 = vadd.f32 %v2108, %v2094
          %v2110 = vadd.f32 %v2109, %v2095
          %v2111 = vadd.f32 %v2110, %v2096
          %v2112 = vadd.f32 %v2111, %v2097
          %v2113 = vrot.slane %v2112, 4
          %v2114 = vadd.f32 %v2112, %v2113
          %v2115 = vrot.slane %v2114, 2
          %v2116 = vadd.f32 %v2114, %v2115
          %v2117 = vrot.slane %v2116, 1
          %v2118 = vadd.f32 %v2116, %v2117
          %v2119 = vadd.f32 %v1987, %v1989
          %v2120 = vadd.f32 %v2119, %v1991
          %v2121 = vadd.f32 %v2120, %v1993
          %v2122 = vadd.f32 %v2121, %v1995
          %v2123 = vadd.f32 %v2122, %v1997
          %v2124 = vadd.f32 %v2123, %v1999
          %v2125 = vadd.f32 %v2124, %v2001
          %v2126 = vadd.f32 %v2125, %v2003
          %v2127 = vadd.f32 %v2126, %v2005
          %v2128 = vadd.f32 %v2127, %v2007
          %v2129 = vadd.f32 %v2128, %v2009
          %v2130 = vadd.f32 %v2129, %v2011
          %v2131 = vadd.f32 %v2130, %v2013
          %v2132 = vadd.f32 %v2131, %v2015
          %v2133 = vadd.f32 %v2132, %v2017
          %v2134 = vrot.slane %v2133, 4
          %v2135 = vadd.f32 %v2133, %v2134
          %v2136 = vrot.slane %v2135, 2
          %v2137 = vadd.f32 %v2135, %v2136
          %v2138 = vrot.slane %v2137, 1
          %v2139 = vadd.f32 %v2137, %v2138
          %v2140 = vrcp.pop %v2139
          %v2141 = vmul.f32 %v2118, %v2140
          %vm2142 = vcmp.eq.s32.totalorder %v1253, 2
          %v2143 = vsel %vm2142, 1, 0
          %vm2144 = vcmp.eq.s32.totalorder %v2143, 1
          %v2145 = vsel %vm2144, %v2141, 0.0
          %v2146 = vadd.f32 %v1887, %v2145
          %2147 = vset.pattern.permute.xlu0 3
          %2148 = vperm.xlu0 %2147, %v1287
          %v2149 = vpop.permute.xlu0 %2148
          %2151 = vset.pattern.permute.xlu0 3
          %2152 = vperm.xlu0 %2151, %v1288
          %v2153 = vpop.permute.xlu0 %2152
          %2155 = vset.pattern.permute.xlu0 3
          %2156 = vperm.xlu0 %2155, %v1289
          %v2157 = vpop.permute.xlu0 %2156
          %2159 = vset.pattern.permute.xlu0 3
          %2160 = vperm.xlu0 %2159, %v1290
          %v2161 = vpop.permute.xlu0 %2160
          %2163 = vset.pattern.permute.xlu0 3
          %2164 = vperm.xlu0 %2163, %v1291
          %v2165 = vpop.permute.xlu0 %2164
          %2167 = vset.pattern.permute.xlu0 3
          %2168 = vperm.xlu0 %2167, %v1292
          %v2169 = vpop.permute.xlu0 %2168
          %2171 = vset.pattern.permute.xlu0 3
          %2172 = vperm.xlu0 %2171, %v1293
          %v2173 = vpop.permute.xlu0 %2172
          %2175 = vset.pattern.permute.xlu0 3
          %2176 = vperm.xlu0 %2175, %v1294
          %v2177 = vpop.permute.xlu0 %2176
          %2179 = vset.pattern.permute.xlu0 3
          %2180 = vperm.xlu0 %2179, %v1295
          %v2181 = vpop.permute.xlu0 %2180
          %2183 = vset.pattern.permute.xlu0 3
          %2184 = vperm.xlu0 %2183, %v1296
          %v2185 = vpop.permute.xlu0 %2184
          %2187 = vset.pattern.permute.xlu0 3
          %2188 = vperm.xlu0 %2187, %v1297
          %v2189 = vpop.permute.xlu0 %2188
          %2191 = vset.pattern.permute.xlu0 3
          %2192 = vperm.xlu0 %2191, %v1298
          %v2193 = vpop.permute.xlu0 %2192
          %2195 = vset.pattern.permute.xlu0 3
          %2196 = vperm.xlu0 %2195, %v1299
          %v2197 = vpop.permute.xlu0 %2196
          %2199 = vset.pattern.permute.xlu0 3
          %2200 = vperm.xlu0 %2199, %v1300
          %v2201 = vpop.permute.xlu0 %2200
          %2203 = vset.pattern.permute.xlu0 3
          %2204 = vperm.xlu0 %2203, %v1301
          %v2205 = vpop.permute.xlu0 %2204
          %2207 = vset.pattern.permute.xlu0 3
          %2208 = vperm.xlu0 %2207, %v1302
          %v2209 = vpop.permute.xlu0 %2208
          %v2211 = vperm.slane %v1262, 3
          %v2212 = vmul.f32 %v2149, %v2211
          %v2213 = vmul.f32 %v2153, %v2211
          %v2214 = vmul.f32 %v2157, %v2211
          %v2215 = vmul.f32 %v2161, %v2211
          %v2216 = vmul.f32 %v2165, %v2211
          %v2217 = vmul.f32 %v2169, %v2211
          %v2218 = vmul.f32 %v2173, %v2211
          %v2219 = vmul.f32 %v2177, %v2211
          %v2220 = vmul.f32 %v2181, %v2211
          %v2221 = vmul.f32 %v2185, %v2211
          %v2222 = vmul.f32 %v2189, %v2211
          %v2223 = vmul.f32 %v2193, %v2211
          %v2224 = vmul.f32 %v2197, %v2211
          %v2225 = vmul.f32 %v2201, %v2211
          %v2226 = vmul.f32 %v2205, %v2211
          %v2227 = vmul.f32 %v2209, %v2211
          %v2228 = vperm.slane %v1337, 3
          %v2229 = vsub.f32 %v2212, %v2228
          %v2230 = vsub.f32 %v2213, %v2228
          %v2231 = vsub.f32 %v2214, %v2228
          %v2232 = vsub.f32 %v2215, %v2228
          %v2233 = vsub.f32 %v2216, %v2228
          %v2234 = vsub.f32 %v2217, %v2228
          %v2235 = vsub.f32 %v2218, %v2228
          %v2236 = vsub.f32 %v2219, %v2228
          %v2237 = vsub.f32 %v2220, %v2228
          %v2238 = vsub.f32 %v2221, %v2228
          %v2239 = vsub.f32 %v2222, %v2228
          %v2240 = vsub.f32 %v2223, %v2228
          %v2241 = vsub.f32 %v2224, %v2228
          %v2242 = vsub.f32 %v2225, %v2228
          %v2243 = vsub.f32 %v2226, %v2228
          %v2244 = vsub.f32 %v2227, %v2228
          %v2245 = vmul.f32 %v2229, 1.442695
          %v2246 = vpow.pop %v2245
          %v2247 = vmul.f32 %v2230, 1.442695
          %v2248 = vpow.pop %v2247
          %v2249 = vmul.f32 %v2231, 1.442695
          %v2250 = vpow.pop %v2249
          %v2251 = vmul.f32 %v2232, 1.442695
          %v2252 = vpow.pop %v2251
          %v2253 = vmul.f32 %v2233, 1.442695
          %v2254 = vpow.pop %v2253
          %v2255 = vmul.f32 %v2234, 1.442695
          %v2256 = vpow.pop %v2255
          %v2257 = vmul.f32 %v2235, 1.442695
          %v2258 = vpow.pop %v2257
          %v2259 = vmul.f32 %v2236, 1.442695
          %v2260 = vpow.pop %v2259
          %v2261 = vmul.f32 %v2237, 1.442695
          %v2262 = vpow.pop %v2261
          %v2263 = vmul.f32 %v2238, 1.442695
          %v2264 = vpow.pop %v2263
          %v2265 = vmul.f32 %v2239, 1.442695
          %v2266 = vpow.pop %v2265
          %v2267 = vmul.f32 %v2240, 1.442695
          %v2268 = vpow.pop %v2267
          %v2269 = vmul.f32 %v2241, 1.442695
          %v2270 = vpow.pop %v2269
          %v2271 = vmul.f32 %v2242, 1.442695
          %v2272 = vpow.pop %v2271
          %v2273 = vmul.f32 %v2243, 1.442695
          %v2274 = vpow.pop %v2273
          %v2275 = vmul.f32 %v2244, 1.442695
          %v2276 = vpow.pop %v2275
          %2277 = vset.pattern.permute.xlu0 3
          %2278 = vperm.xlu0 %2277, %v1319
          %v2279 = vpop.permute.xlu0 %2278
          %2281 = vset.pattern.permute.xlu0 3
          %2282 = vperm.xlu0 %2281, %v1320
          %v2283 = vpop.permute.xlu0 %2282
          %2285 = vset.pattern.permute.xlu0 3
          %2286 = vperm.xlu0 %2285, %v1321
          %v2287 = vpop.permute.xlu0 %2286
          %2289 = vset.pattern.permute.xlu0 3
          %2290 = vperm.xlu0 %2289, %v1322
          %v2291 = vpop.permute.xlu0 %2290
          %2293 = vset.pattern.permute.xlu0 3
          %2294 = vperm.xlu0 %2293, %v1323
          %v2295 = vpop.permute.xlu0 %2294
          %2297 = vset.pattern.permute.xlu0 3
          %2298 = vperm.xlu0 %2297, %v1324
          %v2299 = vpop.permute.xlu0 %2298
          %2301 = vset.pattern.permute.xlu0 3
          %2302 = vperm.xlu0 %2301, %v1325
          %v2303 = vpop.permute.xlu0 %2302
          %2305 = vset.pattern.permute.xlu0 3
          %2306 = vperm.xlu0 %2305, %v1326
          %v2307 = vpop.permute.xlu0 %2306
          %2309 = vset.pattern.permute.xlu0 3
          %2310 = vperm.xlu0 %2309, %v1327
          %v2311 = vpop.permute.xlu0 %2310
          %2313 = vset.pattern.permute.xlu0 3
          %2314 = vperm.xlu0 %2313, %v1328
          %v2315 = vpop.permute.xlu0 %2314
          %2317 = vset.pattern.permute.xlu0 3
          %2318 = vperm.xlu0 %2317, %v1329
          %v2319 = vpop.permute.xlu0 %2318
          %2321 = vset.pattern.permute.xlu0 3
          %2322 = vperm.xlu0 %2321, %v1330
          %v2323 = vpop.permute.xlu0 %2322
          %2325 = vset.pattern.permute.xlu0 3
          %2326 = vperm.xlu0 %2325, %v1331
          %v2327 = vpop.permute.xlu0 %2326
          %2329 = vset.pattern.permute.xlu0 3
          %2330 = vperm.xlu0 %2329, %v1332
          %v2331 = vpop.permute.xlu0 %2330
          %2333 = vset.pattern.permute.xlu0 3
          %2334 = vperm.xlu0 %2333, %v1333
          %v2335 = vpop.permute.xlu0 %2334
          %2337 = vset.pattern.permute.xlu0 3
          %2338 = vperm.xlu0 %2337, %v1334
          %v2339 = vpop.permute.xlu0 %2338
          %v2341 = vmul.f32 %v2246, %v2279
          %v2342 = vmul.f32 %v2248, %v2283
          %v2343 = vmul.f32 %v2250, %v2287
          %v2344 = vmul.f32 %v2252, %v2291
          %v2345 = vmul.f32 %v2254, %v2295
          %v2346 = vmul.f32 %v2256, %v2299
          %v2347 = vmul.f32 %v2258, %v2303
          %v2348 = vmul.f32 %v2260, %v2307
          %v2349 = vmul.f32 %v2262, %v2311
          %v2350 = vmul.f32 %v2264, %v2315
          %v2351 = vmul.f32 %v2266, %v2319
          %v2352 = vmul.f32 %v2268, %v2323
          %v2353 = vmul.f32 %v2270, %v2327
          %v2354 = vmul.f32 %v2272, %v2331
          %v2355 = vmul.f32 %v2274, %v2335
          %v2356 = vmul.f32 %v2276, %v2339
          %v2357 = vadd.f32 %v2341, %v2342
          %v2358 = vadd.f32 %v2357, %v2343
          %v2359 = vadd.f32 %v2358, %v2344
          %v2360 = vadd.f32 %v2359, %v2345
          %v2361 = vadd.f32 %v2360, %v2346
          %v2362 = vadd.f32 %v2361, %v2347
          %v2363 = vadd.f32 %v2362, %v2348
          %v2364 = vadd.f32 %v2363, %v2349
          %v2365 = vadd.f32 %v2364, %v2350
          %v2366 = vadd.f32 %v2365, %v2351
          %v2367 = vadd.f32 %v2366, %v2352
          %v2368 = vadd.f32 %v2367, %v2353
          %v2369 = vadd.f32 %v2368, %v2354
          %v2370 = vadd.f32 %v2369, %v2355
          %v2371 = vadd.f32 %v2370, %v2356
          %v2372 = vrot.slane %v2371, 4
          %v2373 = vadd.f32 %v2371, %v2372
          %v2374 = vrot.slane %v2373, 2
          %v2375 = vadd.f32 %v2373, %v2374
          %v2376 = vrot.slane %v2375, 1
          %v2377 = vadd.f32 %v2375, %v2376
          %v2378 = vadd.f32 %v2246, %v2248
          %v2379 = vadd.f32 %v2378, %v2250
          %v2380 = vadd.f32 %v2379, %v2252
          %v2381 = vadd.f32 %v2380, %v2254
          %v2382 = vadd.f32 %v2381, %v2256
          %v2383 = vadd.f32 %v2382, %v2258
          %v2384 = vadd.f32 %v2383, %v2260
          %v2385 = vadd.f32 %v2384, %v2262
          %v2386 = vadd.f32 %v2385, %v2264
          %v2387 = vadd.f32 %v2386, %v2266
          %v2388 = vadd.f32 %v2387, %v2268
          %v2389 = vadd.f32 %v2388, %v2270
          %v2390 = vadd.f32 %v2389, %v2272
          %v2391 = vadd.f32 %v2390, %v2274
          %v2392 = vadd.f32 %v2391, %v2276
          %v2393 = vrot.slane %v2392, 4
          %v2394 = vadd.f32 %v2392, %v2393
          %v2395 = vrot.slane %v2394, 2
          %v2396 = vadd.f32 %v2394, %v2395
          %v2397 = vrot.slane %v2396, 1
          %v2398 = vadd.f32 %v2396, %v2397
          %v2399 = vrcp.pop %v2398
          %v2400 = vmul.f32 %v2377, %v2399
          %vm2401 = vcmp.eq.s32.totalorder %v1253, 3
          %v2402 = vsel %vm2401, 1, 0
          %vm2403 = vcmp.eq.s32.totalorder %v2402, 1
          %v2404 = vsel %vm2403, %v2400, 0.0
          %v2405 = vadd.f32 %v2146, %v2404
          %2406 = vset.pattern.permute.xlu0 4
          %2407 = vperm.xlu0 %2406, %v1287
          %v2408 = vpop.permute.xlu0 %2407
          %2410 = vset.pattern.permute.xlu0 4
          %2411 = vperm.xlu0 %2410, %v1288
          %v2412 = vpop.permute.xlu0 %2411
          %2414 = vset.pattern.permute.xlu0 4
          %2415 = vperm.xlu0 %2414, %v1289
          %v2416 = vpop.permute.xlu0 %2415
          %2418 = vset.pattern.permute.xlu0 4
          %2419 = vperm.xlu0 %2418, %v1290
          %v2420 = vpop.permute.xlu0 %2419
          %2422 = vset.pattern.permute.xlu0 4
          %2423 = vperm.xlu0 %2422, %v1291
          %v2424 = vpop.permute.xlu0 %2423
          %2426 = vset.pattern.permute.xlu0 4
          %2427 = vperm.xlu0 %2426, %v1292
          %v2428 = vpop.permute.xlu0 %2427
          %2430 = vset.pattern.permute.xlu0 4
          %2431 = vperm.xlu0 %2430, %v1293
          %v2432 = vpop.permute.xlu0 %2431
          %2434 = vset.pattern.permute.xlu0 4
          %2435 = vperm.xlu0 %2434, %v1294
          %v2436 = vpop.permute.xlu0 %2435
          %2438 = vset.pattern.permute.xlu0 4
          %2439 = vperm.xlu0 %2438, %v1295
          %v2440 = vpop.permute.xlu0 %2439
          %2442 = vset.pattern.permute.xlu0 4
          %2443 = vperm.xlu0 %2442, %v1296
          %v2444 = vpop.permute.xlu0 %2443
          %2446 = vset.pattern.permute.xlu0 4
          %2447 = vperm.xlu0 %2446, %v1297
          %v2448 = vpop.permute.xlu0 %2447
          %2450 = vset.pattern.permute.xlu0 4
          %2451 = vperm.xlu0 %2450, %v1298
          %v2452 = vpop.permute.xlu0 %2451
          %2454 = vset.pattern.permute.xlu0 4
          %2455 = vperm.xlu0 %2454, %v1299
          %v2456 = vpop.permute.xlu0 %2455
          %2458 = vset.pattern.permute.xlu0 4
          %2459 = vperm.xlu0 %2458, %v1300
          %v2460 = vpop.permute.xlu0 %2459
          %2462 = vset.pattern.permute.xlu0 4
          %2463 = vperm.xlu0 %2462, %v1301
          %v2464 = vpop.permute.xlu0 %2463
          %2466 = vset.pattern.permute.xlu0 4
          %2467 = vperm.xlu0 %2466, %v1302
          %v2468 = vpop.permute.xlu0 %2467
          %v2470 = vperm.slane %v1262, 4
          %v2471 = vmul.f32 %v2408, %v2470
          %v2472 = vmul.f32 %v2412, %v2470
          %v2473 = vmul.f32 %v2416, %v2470
          %v2474 = vmul.f32 %v2420, %v2470
          %v2475 = vmul.f32 %v2424, %v2470
          %v2476 = vmul.f32 %v2428, %v2470
          %v2477 = vmul.f32 %v2432, %v2470
          %v2478 = vmul.f32 %v2436, %v2470
          %v2479 = vmul.f32 %v2440, %v2470
          %v2480 = vmul.f32 %v2444, %v2470
          %v2481 = vmul.f32 %v2448, %v2470
          %v2482 = vmul.f32 %v2452, %v2470
          %v2483 = vmul.f32 %v2456, %v2470
          %v2484 = vmul.f32 %v2460, %v2470
          %v2485 = vmul.f32 %v2464, %v2470
          %v2486 = vmul.f32 %v2468, %v2470
          %v2487 = vperm.slane %v1337, 4
          %v2488 = vsub.f32 %v2471, %v2487
          %v2489 = vsub.f32 %v2472, %v2487
          %v2490 = vsub.f32 %v2473, %v2487
          %v2491 = vsub.f32 %v2474, %v2487
          %v2492 = vsub.f32 %v2475, %v2487
          %v2493 = vsub.f32 %v2476, %v2487
          %v2494 = vsub.f32 %v2477, %v2487
          %v2495 = vsub.f32 %v2478, %v2487
          %v2496 = vsub.f32 %v2479, %v2487
          %v2497 = vsub.f32 %v2480, %v2487
          %v2498 = vsub.f32 %v2481, %v2487
          %v2499 = vsub.f32 %v2482, %v2487
          %v2500 = vsub.f32 %v2483, %v2487
          %v2501 = vsub.f32 %v2484, %v2487
          %v2502 = vsub.f32 %v2485, %v2487
          %v2503 = vsub.f32 %v2486, %v2487
          %v2504 = vmul.f32 %v2488, 1.442695
          %v2505 = vpow.pop %v2504
          %v2506 = vmul.f32 %v2489, 1.442695
          %v2507 = vpow.pop %v2506
          %v2508 = vmul.f32 %v2490, 1.442695
          %v2509 = vpow.pop %v2508
          %v2510 = vmul.f32 %v2491, 1.442695
          %v2511 = vpow.pop %v2510
          %v2512 = vmul.f32 %v2492, 1.442695
          %v2513 = vpow.pop %v2512
          %v2514 = vmul.f32 %v2493, 1.442695
          %v2515 = vpow.pop %v2514
          %v2516 = vmul.f32 %v2494, 1.442695
          %v2517 = vpow.pop %v2516
          %v2518 = vmul.f32 %v2495, 1.442695
          %v2519 = vpow.pop %v2518
          %v2520 = vmul.f32 %v2496, 1.442695
          %v2521 = vpow.pop %v2520
          %v2522 = vmul.f32 %v2497, 1.442695
          %v2523 = vpow.pop %v2522
          %v2524 = vmul.f32 %v2498, 1.442695
          %v2525 = vpow.pop %v2524
          %v2526 = vmul.f32 %v2499, 1.442695
          %v2527 = vpow.pop %v2526
          %v2528 = vmul.f32 %v2500, 1.442695
          %v2529 = vpow.pop %v2528
          %v2530 = vmul.f32 %v2501, 1.442695
          %v2531 = vpow.pop %v2530
          %v2532 = vmul.f32 %v2502, 1.442695
          %v2533 = vpow.pop %v2532
          %v2534 = vmul.f32 %v2503, 1.442695
          %v2535 = vpow.pop %v2534
          %2536 = vset.pattern.permute.xlu0 4
          %2537 = vperm.xlu0 %2536, %v1319
          %v2538 = vpop.permute.xlu0 %2537
          %2540 = vset.pattern.permute.xlu0 4
          %2541 = vperm.xlu0 %2540, %v1320
          %v2542 = vpop.permute.xlu0 %2541
          %2544 = vset.pattern.permute.xlu0 4
          %2545 = vperm.xlu0 %2544, %v1321
          %v2546 = vpop.permute.xlu0 %2545
          %2548 = vset.pattern.permute.xlu0 4
          %2549 = vperm.xlu0 %2548, %v1322
          %v2550 = vpop.permute.xlu0 %2549
          %2552 = vset.pattern.permute.xlu0 4
          %2553 = vperm.xlu0 %2552, %v1323
          %v2554 = vpop.permute.xlu0 %2553
          %2556 = vset.pattern.permute.xlu0 4
          %2557 = vperm.xlu0 %2556, %v1324
          %v2558 = vpop.permute.xlu0 %2557
          %2560 = vset.pattern.permute.xlu0 4
          %2561 = vperm.xlu0 %2560, %v1325
          %v2562 = vpop.permute.xlu0 %2561
          %2564 = vset.pattern.permute.xlu0 4
          %2565 = vperm.xlu0 %2564, %v1326
          %v2566 = vpop.permute.xlu0 %2565
          %2568 = vset.pattern.permute.xlu0 4
          %2569 = vperm.xlu0 %2568, %v1327
          %v2570 = vpop.permute.xlu0 %2569
          %2572 = vset.pattern.permute.xlu0 4
          %2573 = vperm.xlu0 %2572, %v1328
          %v2574 = vpop.permute.xlu0 %2573
          %2576 = vset.pattern.permute.xlu0 4
          %2577 = vperm.xlu0 %2576, %v1329
          %v2578 = vpop.permute.xlu0 %2577
          %2580 = vset.pattern.permute.xlu0 4
          %2581 = vperm.xlu0 %2580, %v1330
          %v2582 = vpop.permute.xlu0 %2581
          %2584 = vset.pattern.permute.xlu0 4
          %2585 = vperm.xlu0 %2584, %v1331
          %v2586 = vpop.permute.xlu0 %2585
          %2588 = vset.pattern.permute.xlu0 4
          %2589 = vperm.xlu0 %2588, %v1332
          %v2590 = vpop.permute.xlu0 %2589
          %2592 = vset.pattern.permute.xlu0 4
          %2593 = vperm.xlu0 %2592, %v1333
          %v2594 = vpop.permute.xlu0 %2593
          %2596 = vset.pattern.permute.xlu0 4
          %2597 = vperm.xlu0 %2596, %v1334
          %v2598 = vpop.permute.xlu0 %2597
          %v2600 = vmul.f32 %v2505, %v2538
          %v2601 = vmul.f32 %v2507, %v2542
          %v2602 = vmul.f32 %v2509, %v2546
          %v2603 = vmul.f32 %v2511, %v2550
          %v2604 = vmul.f32 %v2513, %v2554
          %v2605 = vmul.f32 %v2515, %v2558
          %v2606 = vmul.f32 %v2517, %v2562
          %v2607 = vmul.f32 %v2519, %v2566
          %v2608 = vmul.f32 %v2521, %v2570
          %v2609 = vmul.f32 %v2523, %v2574
          %v2610 = vmul.f32 %v2525, %v2578
          %v2611 = vmul.f32 %v2527, %v2582
          %v2612 = vmul.f32 %v2529, %v2586
          %v2613 = vmul.f32 %v2531, %v2590
          %v2614 = vmul.f32 %v2533, %v2594
          %v2615 = vmul.f32 %v2535, %v2598
          %v2616 = vadd.f32 %v2600, %v2601
          %v2617 = vadd.f32 %v2616, %v2602
          %v2618 = vadd.f32 %v2617, %v2603
          %v2619 = vadd.f32 %v2618, %v2604
          %v2620 = vadd.f32 %v2619, %v2605
          %v2621 = vadd.f32 %v2620, %v2606
          %v2622 = vadd.f32 %v2621, %v2607
          %v2623 = vadd.f32 %v2622, %v2608
          %v2624 = vadd.f32 %v2623, %v2609
          %v2625 = vadd.f32 %v2624, %v2610
          %v2626 = vadd.f32 %v2625, %v2611
          %v2627 = vadd.f32 %v2626, %v2612
          %v2628 = vadd.f32 %v2627, %v2613
          %v2629 = vadd.f32 %v2628, %v2614
          %v2630 = vadd.f32 %v2629, %v2615
          %v2631 = vrot.slane %v2630, 4
          %v2632 = vadd.f32 %v2630, %v2631
          %v2633 = vrot.slane %v2632, 2
          %v2634 = vadd.f32 %v2632, %v2633
          %v2635 = vrot.slane %v2634, 1
          %v2636 = vadd.f32 %v2634, %v2635
          %v2637 = vadd.f32 %v2505, %v2507
          %v2638 = vadd.f32 %v2637, %v2509
          %v2639 = vadd.f32 %v2638, %v2511
          %v2640 = vadd.f32 %v2639, %v2513
          %v2641 = vadd.f32 %v2640, %v2515
          %v2642 = vadd.f32 %v2641, %v2517
          %v2643 = vadd.f32 %v2642, %v2519
          %v2644 = vadd.f32 %v2643, %v2521
          %v2645 = vadd.f32 %v2644, %v2523
          %v2646 = vadd.f32 %v2645, %v2525
          %v2647 = vadd.f32 %v2646, %v2527
          %v2648 = vadd.f32 %v2647, %v2529
          %v2649 = vadd.f32 %v2648, %v2531
          %v2650 = vadd.f32 %v2649, %v2533
          %v2651 = vadd.f32 %v2650, %v2535
          %v2652 = vrot.slane %v2651, 4
          %v2653 = vadd.f32 %v2651, %v2652
          %v2654 = vrot.slane %v2653, 2
          %v2655 = vadd.f32 %v2653, %v2654
          %v2656 = vrot.slane %v2655, 1
          %v2657 = vadd.f32 %v2655, %v2656
          %v2658 = vrcp.pop %v2657
          %v2659 = vmul.f32 %v2636, %v2658
          %vm2660 = vcmp.eq.s32.totalorder %v1253, 4
          %v2661 = vsel %vm2660, 1, 0
          %vm2662 = vcmp.eq.s32.totalorder %v2661, 1
          %v2663 = vsel %vm2662, %v2659, 0.0
          %v2664 = vadd.f32 %v2405, %v2663
          %2665 = vset.pattern.permute.xlu0 5
          %2666 = vperm.xlu0 %2665, %v1287
          %v2667 = vpop.permute.xlu0 %2666
          %2669 = vset.pattern.permute.xlu0 5
          %2670 = vperm.xlu0 %2669, %v1288
          %v2671 = vpop.permute.xlu0 %2670
          %2673 = vset.pattern.permute.xlu0 5
          %2674 = vperm.xlu0 %2673, %v1289
          %v2675 = vpop.permute.xlu0 %2674
          %2677 = vset.pattern.permute.xlu0 5
          %2678 = vperm.xlu0 %2677, %v1290
          %v2679 = vpop.permute.xlu0 %2678
          %2681 = vset.pattern.permute.xlu0 5
          %2682 = vperm.xlu0 %2681, %v1291
          %v2683 = vpop.permute.xlu0 %2682
          %2685 = vset.pattern.permute.xlu0 5
          %2686 = vperm.xlu0 %2685, %v1292
          %v2687 = vpop.permute.xlu0 %2686
          %2689 = vset.pattern.permute.xlu0 5
          %2690 = vperm.xlu0 %2689, %v1293
          %v2691 = vpop.permute.xlu0 %2690
          %2693 = vset.pattern.permute.xlu0 5
          %2694 = vperm.xlu0 %2693, %v1294
          %v2695 = vpop.permute.xlu0 %2694
          %2697 = vset.pattern.permute.xlu0 5
          %2698 = vperm.xlu0 %2697, %v1295
          %v2699 = vpop.permute.xlu0 %2698
          %2701 = vset.pattern.permute.xlu0 5
          %2702 = vperm.xlu0 %2701, %v1296
          %v2703 = vpop.permute.xlu0 %2702
          %2705 = vset.pattern.permute.xlu0 5
          %2706 = vperm.xlu0 %2705, %v1297
          %v2707 = vpop.permute.xlu0 %2706
          %2709 = vset.pattern.permute.xlu0 5
          %2710 = vperm.xlu0 %2709, %v1298
          %v2711 = vpop.permute.xlu0 %2710
          %2713 = vset.pattern.permute.xlu0 5
          %2714 = vperm.xlu0 %2713, %v1299
          %v2715 = vpop.permute.xlu0 %2714
          %2717 = vset.pattern.permute.xlu0 5
          %2718 = vperm.xlu0 %2717, %v1300
          %v2719 = vpop.permute.xlu0 %2718
          %2721 = vset.pattern.permute.xlu0 5
          %2722 = vperm.xlu0 %2721, %v1301
          %v2723 = vpop.permute.xlu0 %2722
          %2725 = vset.pattern.permute.xlu0 5
          %2726 = vperm.xlu0 %2725, %v1302
          %v2727 = vpop.permute.xlu0 %2726
          %v2729 = vperm.slane %v1262, 5
          %v2730 = vmul.f32 %v2667, %v2729
          %v2731 = vmul.f32 %v2671, %v2729
          %v2732 = vmul.f32 %v2675, %v2729
          %v2733 = vmul.f32 %v2679, %v2729
          %v2734 = vmul.f32 %v2683, %v2729
          %v2735 = vmul.f32 %v2687, %v2729
          %v2736 = vmul.f32 %v2691, %v2729
          %v2737 = vmul.f32 %v2695, %v2729
          %v2738 = vmul.f32 %v2699, %v2729
          %v2739 = vmul.f32 %v2703, %v2729
          %v2740 = vmul.f32 %v2707, %v2729
          %v2741 = vmul.f32 %v2711, %v2729
          %v2742 = vmul.f32 %v2715, %v2729
          %v2743 = vmul.f32 %v2719, %v2729
          %v2744 = vmul.f32 %v2723, %v2729
          %v2745 = vmul.f32 %v2727, %v2729
          %v2746 = vperm.slane %v1337, 5
          %v2747 = vsub.f32 %v2730, %v2746
          %v2748 = vsub.f32 %v2731, %v2746
          %v2749 = vsub.f32 %v2732, %v2746
          %v2750 = vsub.f32 %v2733, %v2746
          %v2751 = vsub.f32 %v2734, %v2746
          %v2752 = vsub.f32 %v2735, %v2746
          %v2753 = vsub.f32 %v2736, %v2746
          %v2754 = vsub.f32 %v2737, %v2746
          %v2755 = vsub.f32 %v2738, %v2746
          %v2756 = vsub.f32 %v2739, %v2746
          %v2757 = vsub.f32 %v2740, %v2746
          %v2758 = vsub.f32 %v2741, %v2746
          %v2759 = vsub.f32 %v2742, %v2746
          %v2760 = vsub.f32 %v2743, %v2746
          %v2761 = vsub.f32 %v2744, %v2746
          %v2762 = vsub.f32 %v2745, %v2746
          %v2763 = vmul.f32 %v2747, 1.442695
          %v2764 = vpow.pop %v2763
          %v2765 = vmul.f32 %v2748, 1.442695
          %v2766 = vpow.pop %v2765
          %v2767 = vmul.f32 %v2749, 1.442695
          %v2768 = vpow.pop %v2767
          %v2769 = vmul.f32 %v2750, 1.442695
          %v2770 = vpow.pop %v2769
          %v2771 = vmul.f32 %v2751, 1.442695
          %v2772 = vpow.pop %v2771
          %v2773 = vmul.f32 %v2752, 1.442695
          %v2774 = vpow.pop %v2773
          %v2775 = vmul.f32 %v2753, 1.442695
          %v2776 = vpow.pop %v2775
          %v2777 = vmul.f32 %v2754, 1.442695
          %v2778 = vpow.pop %v2777
          %v2779 = vmul.f32 %v2755, 1.442695
          %v2780 = vpow.pop %v2779
          %v2781 = vmul.f32 %v2756, 1.442695
          %v2782 = vpow.pop %v2781
          %v2783 = vmul.f32 %v2757, 1.442695
          %v2784 = vpow.pop %v2783
          %v2785 = vmul.f32 %v2758, 1.442695
          %v2786 = vpow.pop %v2785
          %v2787 = vmul.f32 %v2759, 1.442695
          %v2788 = vpow.pop %v2787
          %v2789 = vmul.f32 %v2760, 1.442695
          %v2790 = vpow.pop %v2789
          %v2791 = vmul.f32 %v2761, 1.442695
          %v2792 = vpow.pop %v2791
          %v2793 = vmul.f32 %v2762, 1.442695
          %v2794 = vpow.pop %v2793
          %2795 = vset.pattern.permute.xlu0 5
          %2796 = vperm.xlu0 %2795, %v1319
          %v2797 = vpop.permute.xlu0 %2796
          %2799 = vset.pattern.permute.xlu0 5
          %2800 = vperm.xlu0 %2799, %v1320
          %v2801 = vpop.permute.xlu0 %2800
          %2803 = vset.pattern.permute.xlu0 5
          %2804 = vperm.xlu0 %2803, %v1321
          %v2805 = vpop.permute.xlu0 %2804
          %2807 = vset.pattern.permute.xlu0 5
          %2808 = vperm.xlu0 %2807, %v1322
          %v2809 = vpop.permute.xlu0 %2808
          %2811 = vset.pattern.permute.xlu0 5
          %2812 = vperm.xlu0 %2811, %v1323
          %v2813 = vpop.permute.xlu0 %2812
          %2815 = vset.pattern.permute.xlu0 5
          %2816 = vperm.xlu0 %2815, %v1324
          %v2817 = vpop.permute.xlu0 %2816
          %2819 = vset.pattern.permute.xlu0 5
          %2820 = vperm.xlu0 %2819, %v1325
          %v2821 = vpop.permute.xlu0 %2820
          %2823 = vset.pattern.permute.xlu0 5
          %2824 = vperm.xlu0 %2823, %v1326
          %v2825 = vpop.permute.xlu0 %2824
          %2827 = vset.pattern.permute.xlu0 5
          %2828 = vperm.xlu0 %2827, %v1327
          %v2829 = vpop.permute.xlu0 %2828
          %2831 = vset.pattern.permute.xlu0 5
          %2832 = vperm.xlu0 %2831, %v1328
          %v2833 = vpop.permute.xlu0 %2832
          %2835 = vset.pattern.permute.xlu0 5
          %2836 = vperm.xlu0 %2835, %v1329
          %v2837 = vpop.permute.xlu0 %2836
          %2839 = vset.pattern.permute.xlu0 5
          %2840 = vperm.xlu0 %2839, %v1330
          %v2841 = vpop.permute.xlu0 %2840
          %2843 = vset.pattern.permute.xlu0 5
          %2844 = vperm.xlu0 %2843, %v1331
          %v2845 = vpop.permute.xlu0 %2844
          %2847 = vset.pattern.permute.xlu0 5
          %2848 = vperm.xlu0 %2847, %v1332
          %v2849 = vpop.permute.xlu0 %2848
          %2851 = vset.pattern.permute.xlu0 5
          %2852 = vperm.xlu0 %2851, %v1333
          %v2853 = vpop.permute.xlu0 %2852
          %2855 = vset.pattern.permute.xlu0 5
          %2856 = vperm.xlu0 %2855, %v1334
          %v2857 = vpop.permute.xlu0 %2856
          %v2859 = vmul.f32 %v2764, %v2797
          %v2860 = vmul.f32 %v2766, %v2801
          %v2861 = vmul.f32 %v2768, %v2805
          %v2862 = vmul.f32 %v2770, %v2809
          %v2863 = vmul.f32 %v2772, %v2813
          %v2864 = vmul.f32 %v2774, %v2817
          %v2865 = vmul.f32 %v2776, %v2821
          %v2866 = vmul.f32 %v2778, %v2825
          %v2867 = vmul.f32 %v2780, %v2829
          %v2868 = vmul.f32 %v2782, %v2833
          %v2869 = vmul.f32 %v2784, %v2837
          %v2870 = vmul.f32 %v2786, %v2841
          %v2871 = vmul.f32 %v2788, %v2845
          %v2872 = vmul.f32 %v2790, %v2849
          %v2873 = vmul.f32 %v2792, %v2853
          %v2874 = vmul.f32 %v2794, %v2857
          %v2875 = vadd.f32 %v2859, %v2860
          %v2876 = vadd.f32 %v2875, %v2861
          %v2877 = vadd.f32 %v2876, %v2862
          %v2878 = vadd.f32 %v2877, %v2863
          %v2879 = vadd.f32 %v2878, %v2864
          %v2880 = vadd.f32 %v2879, %v2865
          %v2881 = vadd.f32 %v2880, %v2866
          %v2882 = vadd.f32 %v2881, %v2867
          %v2883 = vadd.f32 %v2882, %v2868
          %v2884 = vadd.f32 %v2883, %v2869
          %v2885 = vadd.f32 %v2884, %v2870
          %v2886 = vadd.f32 %v2885, %v2871
          %v2887 = vadd.f32 %v2886, %v2872
          %v2888 = vadd.f32 %v2887, %v2873
          %v2889 = vadd.f32 %v2888, %v2874
          %v2890 = vrot.slane %v2889, 4
          %v2891 = vadd.f32 %v2889, %v2890
          %v2892 = vrot.slane %v2891, 2
          %v2893 = vadd.f32 %v2891, %v2892
          %v2894 = vrot.slane %v2893, 1
          %v2895 = vadd.f32 %v2893, %v2894
          %v2896 = vadd.f32 %v2764, %v2766
          %v2897 = vadd.f32 %v2896, %v2768
          %v2898 = vadd.f32 %v2897, %v2770
          %v2899 = vadd.f32 %v2898, %v2772
          %v2900 = vadd.f32 %v2899, %v2774
          %v2901 = vadd.f32 %v2900, %v2776
          %v2902 = vadd.f32 %v2901, %v2778
          %v2903 = vadd.f32 %v2902, %v2780
          %v2904 = vadd.f32 %v2903, %v2782
          %v2905 = vadd.f32 %v2904, %v2784
          %v2906 = vadd.f32 %v2905, %v2786
          %v2907 = vadd.f32 %v2906, %v2788
          %v2908 = vadd.f32 %v2907, %v2790
          %v2909 = vadd.f32 %v2908, %v2792
          %v2910 = vadd.f32 %v2909, %v2794
          %v2911 = vrot.slane %v2910, 4
          %v2912 = vadd.f32 %v2910, %v2911
          %v2913 = vrot.slane %v2912, 2
          %v2914 = vadd.f32 %v2912, %v2913
          %v2915 = vrot.slane %v2914, 1
          %v2916 = vadd.f32 %v2914, %v2915
          %v2917 = vrcp.pop %v2916
          %v2918 = vmul.f32 %v2895, %v2917
          %vm2919 = vcmp.eq.s32.totalorder %v1253, 5
          %v2920 = vsel %vm2919, 1, 0
          %vm2921 = vcmp.eq.s32.totalorder %v2920, 1
          %v2922 = vsel %vm2921, %v2918, 0.0
          %v2923 = vadd.f32 %v2664, %v2922
          %2924 = vset.pattern.permute.xlu0 6
          %2925 = vperm.xlu0 %2924, %v1287
          %v2926 = vpop.permute.xlu0 %2925
          %2928 = vset.pattern.permute.xlu0 6
          %2929 = vperm.xlu0 %2928, %v1288
          %v2930 = vpop.permute.xlu0 %2929
          %2932 = vset.pattern.permute.xlu0 6
          %2933 = vperm.xlu0 %2932, %v1289
          %v2934 = vpop.permute.xlu0 %2933
          %2936 = vset.pattern.permute.xlu0 6
          %2937 = vperm.xlu0 %2936, %v1290
          %v2938 = vpop.permute.xlu0 %2937
          %2940 = vset.pattern.permute.xlu0 6
          %2941 = vperm.xlu0 %2940, %v1291
          %v2942 = vpop.permute.xlu0 %2941
          %2944 = vset.pattern.permute.xlu0 6
          %2945 = vperm.xlu0 %2944, %v1292
          %v2946 = vpop.permute.xlu0 %2945
          %2948 = vset.pattern.permute.xlu0 6
          %2949 = vperm.xlu0 %2948, %v1293
          %v2950 = vpop.permute.xlu0 %2949
          %2952 = vset.pattern.permute.xlu0 6
          %2953 = vperm.xlu0 %2952, %v1294
          %v2954 = vpop.permute.xlu0 %2953
          %2956 = vset.pattern.permute.xlu0 6
          %2957 = vperm.xlu0 %2956, %v1295
          %v2958 = vpop.permute.xlu0 %2957
          %2960 = vset.pattern.permute.xlu0 6
          %2961 = vperm.xlu0 %2960, %v1296
          %v2962 = vpop.permute.xlu0 %2961
          %2964 = vset.pattern.permute.xlu0 6
          %2965 = vperm.xlu0 %2964, %v1297
          %v2966 = vpop.permute.xlu0 %2965
          %2968 = vset.pattern.permute.xlu0 6
          %2969 = vperm.xlu0 %2968, %v1298
          %v2970 = vpop.permute.xlu0 %2969
          %2972 = vset.pattern.permute.xlu0 6
          %2973 = vperm.xlu0 %2972, %v1299
          %v2974 = vpop.permute.xlu0 %2973
          %2976 = vset.pattern.permute.xlu0 6
          %2977 = vperm.xlu0 %2976, %v1300
          %v2978 = vpop.permute.xlu0 %2977
          %2980 = vset.pattern.permute.xlu0 6
          %2981 = vperm.xlu0 %2980, %v1301
          %v2982 = vpop.permute.xlu0 %2981
          %2984 = vset.pattern.permute.xlu0 6
          %2985 = vperm.xlu0 %2984, %v1302
          %v2986 = vpop.permute.xlu0 %2985
          %v2988 = vperm.slane %v1262, 6
          %v2989 = vmul.f32 %v2926, %v2988
          %v2990 = vmul.f32 %v2930, %v2988
          %v2991 = vmul.f32 %v2934, %v2988
          %v2992 = vmul.f32 %v2938, %v2988
          %v2993 = vmul.f32 %v2942, %v2988
          %v2994 = vmul.f32 %v2946, %v2988
          %v2995 = vmul.f32 %v2950, %v2988
          %v2996 = vmul.f32 %v2954, %v2988
          %v2997 = vmul.f32 %v2958, %v2988
          %v2998 = vmul.f32 %v2962, %v2988
          %v2999 = vmul.f32 %v2966, %v2988
          %v3000 = vmul.f32 %v2970, %v2988
          %v3001 = vmul.f32 %v2974, %v2988
          %v3002 = vmul.f32 %v2978, %v2988
          %v3003 = vmul.f32 %v2982, %v2988
          %v3004 = vmul.f32 %v2986, %v2988
          %v3005 = vperm.slane %v1337, 6
          %v3006 = vsub.f32 %v2989, %v3005
          %v3007 = vsub.f32 %v2990, %v3005
          %v3008 = vsub.f32 %v2991, %v3005
          %v3009 = vsub.f32 %v2992, %v3005
          %v3010 = vsub.f32 %v2993, %v3005
          %v3011 = vsub.f32 %v2994, %v3005
          %v3012 = vsub.f32 %v2995, %v3005
          %v3013 = vsub.f32 %v2996, %v3005
          %v3014 = vsub.f32 %v2997, %v3005
          %v3015 = vsub.f32 %v2998, %v3005
          %v3016 = vsub.f32 %v2999, %v3005
          %v3017 = vsub.f32 %v3000, %v3005
          %v3018 = vsub.f32 %v3001, %v3005
          %v3019 = vsub.f32 %v3002, %v3005
          %v3020 = vsub.f32 %v3003, %v3005
          %v3021 = vsub.f32 %v3004, %v3005
          %v3022 = vmul.f32 %v3006, 1.442695
          %v3023 = vpow.pop %v3022
          %v3024 = vmul.f32 %v3007, 1.442695
          %v3025 = vpow.pop %v3024
          %v3026 = vmul.f32 %v3008, 1.442695
          %v3027 = vpow.pop %v3026
          %v3028 = vmul.f32 %v3009, 1.442695
          %v3029 = vpow.pop %v3028
          %v3030 = vmul.f32 %v3010, 1.442695
          %v3031 = vpow.pop %v3030
          %v3032 = vmul.f32 %v3011, 1.442695
          %v3033 = vpow.pop %v3032
          %v3034 = vmul.f32 %v3012, 1.442695
          %v3035 = vpow.pop %v3034
          %v3036 = vmul.f32 %v3013, 1.442695
          %v3037 = vpow.pop %v3036
          %v3038 = vmul.f32 %v3014, 1.442695
          %v3039 = vpow.pop %v3038
          %v3040 = vmul.f32 %v3015, 1.442695
          %v3041 = vpow.pop %v3040
          %v3042 = vmul.f32 %v3016, 1.442695
          %v3043 = vpow.pop %v3042
          %v3044 = vmul.f32 %v3017, 1.442695
          %v3045 = vpow.pop %v3044
          %v3046 = vmul.f32 %v3018, 1.442695
          %v3047 = vpow.pop %v3046
          %v3048 = vmul.f32 %v3019, 1.442695
          %v3049 = vpow.pop %v3048
          %v3050 = vmul.f32 %v3020, 1.442695
          %v3051 = vpow.pop %v3050
          %v3052 = vmul.f32 %v3021, 1.442695
          %v3053 = vpow.pop %v3052
          %3054 = vset.pattern.permute.xlu0 6
          %3055 = vperm.xlu0 %3054, %v1319
          %v3056 = vpop.permute.xlu0 %3055
          %3058 = vset.pattern.permute.xlu0 6
          %3059 = vperm.xlu0 %3058, %v1320
          %v3060 = vpop.permute.xlu0 %3059
          %3062 = vset.pattern.permute.xlu0 6
          %3063 = vperm.xlu0 %3062, %v1321
          %v3064 = vpop.permute.xlu0 %3063
          %3066 = vset.pattern.permute.xlu0 6
          %3067 = vperm.xlu0 %3066, %v1322
          %v3068 = vpop.permute.xlu0 %3067
          %3070 = vset.pattern.permute.xlu0 6
          %3071 = vperm.xlu0 %3070, %v1323
          %v3072 = vpop.permute.xlu0 %3071
          %3074 = vset.pattern.permute.xlu0 6
          %3075 = vperm.xlu0 %3074, %v1324
          %v3076 = vpop.permute.xlu0 %3075
          %3078 = vset.pattern.permute.xlu0 6
          %3079 = vperm.xlu0 %3078, %v1325
          %v3080 = vpop.permute.xlu0 %3079
          %3082 = vset.pattern.permute.xlu0 6
          %3083 = vperm.xlu0 %3082, %v1326
          %v3084 = vpop.permute.xlu0 %3083
          %3086 = vset.pattern.permute.xlu0 6
          %3087 = vperm.xlu0 %3086, %v1327
          %v3088 = vpop.permute.xlu0 %3087
          %3090 = vset.pattern.permute.xlu0 6
          %3091 = vperm.xlu0 %3090, %v1328
          %v3092 = vpop.permute.xlu0 %3091
          %3094 = vset.pattern.permute.xlu0 6
          %3095 = vperm.xlu0 %3094, %v1329
          %v3096 = vpop.permute.xlu0 %3095
          %3098 = vset.pattern.permute.xlu0 6
          %3099 = vperm.xlu0 %3098, %v1330
          %v3100 = vpop.permute.xlu0 %3099
          %3102 = vset.pattern.permute.xlu0 6
          %3103 = vperm.xlu0 %3102, %v1331
          %v3104 = vpop.permute.xlu0 %3103
          %3106 = vset.pattern.permute.xlu0 6
          %3107 = vperm.xlu0 %3106, %v1332
          %v3108 = vpop.permute.xlu0 %3107
          %3110 = vset.pattern.permute.xlu0 6
          %3111 = vperm.xlu0 %3110, %v1333
          %v3112 = vpop.permute.xlu0 %3111
          %3114 = vset.pattern.permute.xlu0 6
          %3115 = vperm.xlu0 %3114, %v1334
          %v3116 = vpop.permute.xlu0 %3115
          %v3118 = vmul.f32 %v3023, %v3056
          %v3119 = vmul.f32 %v3025, %v3060
          %v3120 = vmul.f32 %v3027, %v3064
          %v3121 = vmul.f32 %v3029, %v3068
          %v3122 = vmul.f32 %v3031, %v3072
          %v3123 = vmul.f32 %v3033, %v3076
          %v3124 = vmul.f32 %v3035, %v3080
          %v3125 = vmul.f32 %v3037, %v3084
          %v3126 = vmul.f32 %v3039, %v3088
          %v3127 = vmul.f32 %v3041, %v3092
          %v3128 = vmul.f32 %v3043, %v3096
          %v3129 = vmul.f32 %v3045, %v3100
          %v3130 = vmul.f32 %v3047, %v3104
          %v3131 = vmul.f32 %v3049, %v3108
          %v3132 = vmul.f32 %v3051, %v3112
          %v3133 = vmul.f32 %v3053, %v3116
          %v3134 = vadd.f32 %v3118, %v3119
          %v3135 = vadd.f32 %v3134, %v3120
          %v3136 = vadd.f32 %v3135, %v3121
          %v3137 = vadd.f32 %v3136, %v3122
          %v3138 = vadd.f32 %v3137, %v3123
          %v3139 = vadd.f32 %v3138, %v3124
          %v3140 = vadd.f32 %v3139, %v3125
          %v3141 = vadd.f32 %v3140, %v3126
          %v3142 = vadd.f32 %v3141, %v3127
          %v3143 = vadd.f32 %v3142, %v3128
          %v3144 = vadd.f32 %v3143, %v3129
          %v3145 = vadd.f32 %v3144, %v3130
          %v3146 = vadd.f32 %v3145, %v3131
          %v3147 = vadd.f32 %v3146, %v3132
          %v3148 = vadd.f32 %v3147, %v3133
          %v3149 = vrot.slane %v3148, 4
          %v3150 = vadd.f32 %v3148, %v3149
          %v3151 = vrot.slane %v3150, 2
          %v3152 = vadd.f32 %v3150, %v3151
          %v3153 = vrot.slane %v3152, 1
          %v3154 = vadd.f32 %v3152, %v3153
          %v3155 = vadd.f32 %v3023, %v3025
          %v3156 = vadd.f32 %v3155, %v3027
          %v3157 = vadd.f32 %v3156, %v3029
          %v3158 = vadd.f32 %v3157, %v3031
          %v3159 = vadd.f32 %v3158, %v3033
          %v3160 = vadd.f32 %v3159, %v3035
          %v3161 = vadd.f32 %v3160, %v3037
          %v3162 = vadd.f32 %v3161, %v3039
          %v3163 = vadd.f32 %v3162, %v3041
          %v3164 = vadd.f32 %v3163, %v3043
          %v3165 = vadd.f32 %v3164, %v3045
          %v3166 = vadd.f32 %v3165, %v3047
          %v3167 = vadd.f32 %v3166, %v3049
          %v3168 = vadd.f32 %v3167, %v3051
          %v3169 = vadd.f32 %v3168, %v3053
          %v3170 = vrot.slane %v3169, 4
          %v3171 = vadd.f32 %v3169, %v3170
          %v3172 = vrot.slane %v3171, 2
          %v3173 = vadd.f32 %v3171, %v3172
          %v3174 = vrot.slane %v3173, 1
          %v3175 = vadd.f32 %v3173, %v3174
          %v3176 = vrcp.pop %v3175
          %v3177 = vmul.f32 %v3154, %v3176
          %vm3178 = vcmp.eq.s32.totalorder %v1253, 6
          %v3179 = vsel %vm3178, 1, 0
          %vm3180 = vcmp.eq.s32.totalorder %v3179, 1
          %v3181 = vsel %vm3180, %v3177, 0.0
          %v3182 = vadd.f32 %v2923, %v3181
          %3183 = vset.pattern.permute.xlu0 7
          %3184 = vperm.xlu0 %3183, %v1287
          %v3185 = vpop.permute.xlu0 %3184
          %3187 = vset.pattern.permute.xlu0 7
          %3188 = vperm.xlu0 %3187, %v1288
          %v3189 = vpop.permute.xlu0 %3188
          %3191 = vset.pattern.permute.xlu0 7
          %3192 = vperm.xlu0 %3191, %v1289
          %v3193 = vpop.permute.xlu0 %3192
          %3195 = vset.pattern.permute.xlu0 7
          %3196 = vperm.xlu0 %3195, %v1290
          %v3197 = vpop.permute.xlu0 %3196
          %3199 = vset.pattern.permute.xlu0 7
          %3200 = vperm.xlu0 %3199, %v1291
          %v3201 = vpop.permute.xlu0 %3200
          %3203 = vset.pattern.permute.xlu0 7
          %3204 = vperm.xlu0 %3203, %v1292
          %v3205 = vpop.permute.xlu0 %3204
          %3207 = vset.pattern.permute.xlu0 7
          %3208 = vperm.xlu0 %3207, %v1293
          %v3209 = vpop.permute.xlu0 %3208
          %3211 = vset.pattern.permute.xlu0 7
          %3212 = vperm.xlu0 %3211, %v1294
          %v3213 = vpop.permute.xlu0 %3212
          %3215 = vset.pattern.permute.xlu0 7
          %3216 = vperm.xlu0 %3215, %v1295
          %v3217 = vpop.permute.xlu0 %3216
          %3219 = vset.pattern.permute.xlu0 7
          %3220 = vperm.xlu0 %3219, %v1296
          %v3221 = vpop.permute.xlu0 %3220
          %3223 = vset.pattern.permute.xlu0 7
          %3224 = vperm.xlu0 %3223, %v1297
          %v3225 = vpop.permute.xlu0 %3224
          %3227 = vset.pattern.permute.xlu0 7
          %3228 = vperm.xlu0 %3227, %v1298
          %v3229 = vpop.permute.xlu0 %3228
          %3231 = vset.pattern.permute.xlu0 7
          %3232 = vperm.xlu0 %3231, %v1299
          %v3233 = vpop.permute.xlu0 %3232
          %3235 = vset.pattern.permute.xlu0 7
          %3236 = vperm.xlu0 %3235, %v1300
          %v3237 = vpop.permute.xlu0 %3236
          %3239 = vset.pattern.permute.xlu0 7
          %3240 = vperm.xlu0 %3239, %v1301
          %v3241 = vpop.permute.xlu0 %3240
          %3243 = vset.pattern.permute.xlu0 7
          %3244 = vperm.xlu0 %3243, %v1302
          %v3245 = vpop.permute.xlu0 %3244
          %v3247 = vperm.slane %v1262, 7
          %v3248 = vmul.f32 %v3185, %v3247
          %v3249 = vmul.f32 %v3189, %v3247
          %v3250 = vmul.f32 %v3193, %v3247
          %v3251 = vmul.f32 %v3197, %v3247
          %v3252 = vmul.f32 %v3201, %v3247
          %v3253 = vmul.f32 %v3205, %v3247
          %v3254 = vmul.f32 %v3209, %v3247
          %v3255 = vmul.f32 %v3213, %v3247
          %v3256 = vmul.f32 %v3217, %v3247
          %v3257 = vmul.f32 %v3221, %v3247
          %v3258 = vmul.f32 %v3225, %v3247
          %v3259 = vmul.f32 %v3229, %v3247
          %v3260 = vmul.f32 %v3233, %v3247
          %v3261 = vmul.f32 %v3237, %v3247
          %v3262 = vmul.f32 %v3241, %v3247
          %v3263 = vmul.f32 %v3245, %v3247
          %v3264 = vperm.slane %v1337, 7
          %v3265 = vsub.f32 %v3248, %v3264
          %v3266 = vsub.f32 %v3249, %v3264
          %v3267 = vsub.f32 %v3250, %v3264
          %v3268 = vsub.f32 %v3251, %v3264
          %v3269 = vsub.f32 %v3252, %v3264
          %v3270 = vsub.f32 %v3253, %v3264
          %v3271 = vsub.f32 %v3254, %v3264
          %v3272 = vsub.f32 %v3255, %v3264
          %v3273 = vsub.f32 %v3256, %v3264
          %v3274 = vsub.f32 %v3257, %v3264
          %v3275 = vsub.f32 %v3258, %v3264
          %v3276 = vsub.f32 %v3259, %v3264
          %v3277 = vsub.f32 %v3260, %v3264
          %v3278 = vsub.f32 %v3261, %v3264
          %v3279 = vsub.f32 %v3262, %v3264
          %v3280 = vsub.f32 %v3263, %v3264
          %v3281 = vmul.f32 %v3265, 1.442695
          %v3282 = vpow.pop %v3281
          %v3283 = vmul.f32 %v3266, 1.442695
          %v3284 = vpow.pop %v3283
          %v3285 = vmul.f32 %v3267, 1.442695
          %v3286 = vpow.pop %v3285
          %v3287 = vmul.f32 %v3268, 1.442695
          %v3288 = vpow.pop %v3287
          %v3289 = vmul.f32 %v3269, 1.442695
          %v3290 = vpow.pop %v3289
          %v3291 = vmul.f32 %v3270, 1.442695
          %v3292 = vpow.pop %v3291
          %v3293 = vmul.f32 %v3271, 1.442695
          %v3294 = vpow.pop %v3293
          %v3295 = vmul.f32 %v3272, 1.442695
          %v3296 = vpow.pop %v3295
          %v3297 = vmul.f32 %v3273, 1.442695
          %v3298 = vpow.pop %v3297
          %v3299 = vmul.f32 %v3274, 1.442695
          %v3300 = vpow.pop %v3299
          %v3301 = vmul.f32 %v3275, 1.442695
          %v3302 = vpow.pop %v3301
          %v3303 = vmul.f32 %v3276, 1.442695
          %v3304 = vpow.pop %v3303
          %v3305 = vmul.f32 %v3277, 1.442695
          %v3306 = vpow.pop %v3305
          %v3307 = vmul.f32 %v3278, 1.442695
          %v3308 = vpow.pop %v3307
          %v3309 = vmul.f32 %v3279, 1.442695
          %v3310 = vpow.pop %v3309
          %v3311 = vmul.f32 %v3280, 1.442695
          %v3312 = vpow.pop %v3311
          %3313 = vset.pattern.permute.xlu0 7
          %3314 = vperm.xlu0 %3313, %v1319
          %v3315 = vpop.permute.xlu0 %3314
          %3317 = vset.pattern.permute.xlu0 7
          %3318 = vperm.xlu0 %3317, %v1320
          %v3319 = vpop.permute.xlu0 %3318
          %3321 = vset.pattern.permute.xlu0 7
          %3322 = vperm.xlu0 %3321, %v1321
          %v3323 = vpop.permute.xlu0 %3322
          %3325 = vset.pattern.permute.xlu0 7
          %3326 = vperm.xlu0 %3325, %v1322
          %v3327 = vpop.permute.xlu0 %3326
          %3329 = vset.pattern.permute.xlu0 7
          %3330 = vperm.xlu0 %3329, %v1323
          %v3331 = vpop.permute.xlu0 %3330
          %3333 = vset.pattern.permute.xlu0 7
          %3334 = vperm.xlu0 %3333, %v1324
          %v3335 = vpop.permute.xlu0 %3334
          %3337 = vset.pattern.permute.xlu0 7
          %3338 = vperm.xlu0 %3337, %v1325
          %v3339 = vpop.permute.xlu0 %3338
          %3341 = vset.pattern.permute.xlu0 7
          %3342 = vperm.xlu0 %3341, %v1326
          %v3343 = vpop.permute.xlu0 %3342
          %3345 = vset.pattern.permute.xlu0 7
          %3346 = vperm.xlu0 %3345, %v1327
          %v3347 = vpop.permute.xlu0 %3346
          %3349 = vset.pattern.permute.xlu0 7
          %3350 = vperm.xlu0 %3349, %v1328
          %v3351 = vpop.permute.xlu0 %3350
          %3353 = vset.pattern.permute.xlu0 7
          %3354 = vperm.xlu0 %3353, %v1329
          %v3355 = vpop.permute.xlu0 %3354
          %3357 = vset.pattern.permute.xlu0 7
          %3358 = vperm.xlu0 %3357, %v1330
          %v3359 = vpop.permute.xlu0 %3358
          %3361 = vset.pattern.permute.xlu0 7
          %3362 = vperm.xlu0 %3361, %v1331
          %v3363 = vpop.permute.xlu0 %3362
          %3365 = vset.pattern.permute.xlu0 7
          %3366 = vperm.xlu0 %3365, %v1332
          %v3367 = vpop.permute.xlu0 %3366
          %3369 = vset.pattern.permute.xlu0 7
          %3370 = vperm.xlu0 %3369, %v1333
          %v3371 = vpop.permute.xlu0 %3370
          %3373 = vset.pattern.permute.xlu0 7
          %3374 = vperm.xlu0 %3373, %v1334
          %v3375 = vpop.permute.xlu0 %3374
          %v3377 = vmul.f32 %v3282, %v3315
          %v3378 = vmul.f32 %v3284, %v3319
          %v3379 = vmul.f32 %v3286, %v3323
          %v3380 = vmul.f32 %v3288, %v3327
          %v3381 = vmul.f32 %v3290, %v3331
          %v3382 = vmul.f32 %v3292, %v3335
          %v3383 = vmul.f32 %v3294, %v3339
          %v3384 = vmul.f32 %v3296, %v3343
          %v3385 = vmul.f32 %v3298, %v3347
          %v3386 = vmul.f32 %v3300, %v3351
          %v3387 = vmul.f32 %v3302, %v3355
          %v3388 = vmul.f32 %v3304, %v3359
          %v3389 = vmul.f32 %v3306, %v3363
          %v3390 = vmul.f32 %v3308, %v3367
          %v3391 = vmul.f32 %v3310, %v3371
          %v3392 = vmul.f32 %v3312, %v3375
          %v3393 = vadd.f32 %v3377, %v3378
          %v3394 = vadd.f32 %v3393, %v3379
          %v3395 = vadd.f32 %v3394, %v3380
          %v3396 = vadd.f32 %v3395, %v3381
          %v3397 = vadd.f32 %v3396, %v3382
          %v3398 = vadd.f32 %v3397, %v3383
          %v3399 = vadd.f32 %v3398, %v3384
          %v3400 = vadd.f32 %v3399, %v3385
          %v3401 = vadd.f32 %v3400, %v3386
          %v3402 = vadd.f32 %v3401, %v3387
          %v3403 = vadd.f32 %v3402, %v3388
          %v3404 = vadd.f32 %v3403, %v3389
          %v3405 = vadd.f32 %v3404, %v3390
          %v3406 = vadd.f32 %v3405, %v3391
          %v3407 = vadd.f32 %v3406, %v3392
          %v3408 = vrot.slane %v3407, 4
          %v3409 = vadd.f32 %v3407, %v3408
          %v3410 = vrot.slane %v3409, 2
          %v3411 = vadd.f32 %v3409, %v3410
          %v3412 = vrot.slane %v3411, 1
          %v3413 = vadd.f32 %v3411, %v3412
          %v3414 = vadd.f32 %v3282, %v3284
          %v3415 = vadd.f32 %v3414, %v3286
          %v3416 = vadd.f32 %v3415, %v3288
          %v3417 = vadd.f32 %v3416, %v3290
          %v3418 = vadd.f32 %v3417, %v3292
          %v3419 = vadd.f32 %v3418, %v3294
          %v3420 = vadd.f32 %v3419, %v3296
          %v3421 = vadd.f32 %v3420, %v3298
          %v3422 = vadd.f32 %v3421, %v3300
          %v3423 = vadd.f32 %v3422, %v3302
          %v3424 = vadd.f32 %v3423, %v3304
          %v3425 = vadd.f32 %v3424, %v3306
          %v3426 = vadd.f32 %v3425, %v3308
          %v3427 = vadd.f32 %v3426, %v3310
          %v3428 = vadd.f32 %v3427, %v3312
          %v3429 = vrot.slane %v3428, 4
          %v3430 = vadd.f32 %v3428, %v3429
          %v3431 = vrot.slane %v3430, 2
          %v3432 = vadd.f32 %v3430, %v3431
          %v3433 = vrot.slane %v3432, 1
          %v3434 = vadd.f32 %v3432, %v3433
          %v3435 = vrcp.pop %v3434
          %v3436 = vmul.f32 %v3413, %v3435
          %vm3437 = vcmp.eq.s32.totalorder %v1253, 7
          %v3438 = vsel %vm3437, 1, 0
          %vm3439 = vcmp.eq.s32.totalorder %v3438, 1
          %v3440 = vsel %vm3439, %v3436, 0.0
          %v3441 = vadd.f32 %v3182, %v3440
          %s3442 = scalar_lea.vmem [#allocation5], %s1260
          %3443 = vst [vmem:[%s3442] sm:$0xff] %v3441
        $region93: #{transformer_encoder_forward.1} parent=87 // loop_footer
          %s1259 = sadd.s32 1, %s1255
        $region94: #{transformer_encoder_forward.1} parent=87 // loop_footer_branch
          %1254 = sbr.rel target = $region90
        $region95: #{transformer_encoder_forward.1} parent=87 // loop_exit
          _
        %v3444 = vld [vmem:[#allocation5] sm:$0xff]
        %v3445 = vld [vmem:[#allocation5 + $0x8] sm:$0xff]
        %v3446 = vld [vmem:[#allocation5 + $0x10] sm:$0xff]
        %v3447 = vld [vmem:[#allocation5 + $0x18] sm:$0xff]
        %v3448 = vld [vmem:[#allocation5 + $0x20] sm:$0xff]
        %v3449 = vld [vmem:[#allocation5 + $0x28] sm:$0xff]
        %v3450 = vld [vmem:[#allocation5 + $0x30] sm:$0xff]
        %v3451 = vld [vmem:[#allocation5 + $0x38] sm:$0xff]
        %v3452 = vld [vmem:[#allocation5 + $0x40] sm:$0xff]
        %v3453 = vld [vmem:[#allocation5 + $0x48] sm:$0xff]
        %v3454 = vld [vmem:[#allocation5 + $0x50] sm:$0xff]
        %v3455 = vld [vmem:[#allocation5 + $0x58] sm:$0xff]
        %v3456 = vld [vmem:[#allocation5 + $0x60] sm:$0xff]
        %v3457 = vld [vmem:[#allocation5 + $0x68] sm:$0xff]
        %v3458 = vld [vmem:[#allocation5 + $0x70] sm:$0xff]
        %v3459 = vld [vmem:[#allocation5 + $0x78] sm:$0xff]
        %v3460 = vadd.f32 %v550, %v3444
        %v3461 = vadd.f32 %v551, %v3445
        %v3462 = vadd.f32 %v552, %v3446
        %v3463 = vadd.f32 %v553, %v3447
        %v3464 = vadd.f32 %v554, %v3448
        %v3465 = vadd.f32 %v555, %v3449
        %v3466 = vadd.f32 %v556, %v3450
        %v3467 = vadd.f32 %v557, %v3451
        %v3468 = vadd.f32 %v558, %v3452
        %v3469 = vadd.f32 %v559, %v3453
        %v3470 = vadd.f32 %v560, %v3454
        %v3471 = vadd.f32 %v561, %v3455
        %v3472 = vadd.f32 %v562, %v3456
        %v3473 = vadd.f32 %v563, %v3457
        %v3474 = vadd.f32 %v564, %v3458
        %v3475 = vadd.f32 %v565, %v3459
        %v3476 = vld [vmem:[%s9] sm:$0x1]
        %v3477 = vld [vmem:[%s10] sm:$0x1]
        %3478 = vadd.xlane.f32.xlu0 %v3460
        %v3479 = vpop.xlane.xlu0 %3478
        %3480 = vadd.xlane.f32.xlu0 %v3461
        %v3481 = vpop.xlane.xlu0 %3480
        %3482 = vadd.xlane.f32.xlu0 %v3462
        %v3483 = vpop.xlane.xlu0 %3482
        %3484 = vadd.xlane.f32.xlu0 %v3463
        %v3485 = vpop.xlane.xlu0 %3484
        %3486 = vadd.xlane.f32.xlu0 %v3464
        %v3487 = vpop.xlane.xlu0 %3486
        %3488 = vadd.xlane.f32.xlu0 %v3465
        %v3489 = vpop.xlane.xlu0 %3488
        %3490 = vadd.xlane.f32.xlu0 %v3466
        %v3491 = vpop.xlane.xlu0 %3490
        %3492 = vadd.xlane.f32.xlu0 %v3467
        %v3493 = vpop.xlane.xlu0 %3492
        %3494 = vadd.xlane.f32.xlu0 %v3468
        %v3495 = vpop.xlane.xlu0 %3494
        %3496 = vadd.xlane.f32.xlu0 %v3469
        %v3497 = vpop.xlane.xlu0 %3496
        %3498 = vadd.xlane.f32.xlu0 %v3470
        %v3499 = vpop.xlane.xlu0 %3498
        %3500 = vadd.xlane.f32.xlu0 %v3471
        %v3501 = vpop.xlane.xlu0 %3500
        %3502 = vadd.xlane.f32.xlu0 %v3472
        %v3503 = vpop.xlane.xlu0 %3502
        %3504 = vadd.xlane.f32.xlu0 %v3473
        %v3505 = vpop.xlane.xlu0 %3504
        %3506 = vadd.xlane.f32.xlu0 %v3474
        %v3507 = vpop.xlane.xlu0 %3506
        %3508 = vadd.xlane.f32.xlu0 %v3475
        %v3509 = vpop.xlane.xlu0 %3508
        %v3510 = vmul.f32 %v3479, %v606
        %v3511 = vmul.f32 %v3481, %v606
        %v3512 = vmul.f32 %v3483, %v606
        %v3513 = vmul.f32 %v3485, %v606
        %v3514 = vmul.f32 %v3487, %v606
        %v3515 = vmul.f32 %v3489, %v606
        %v3516 = vmul.f32 %v3491, %v606
        %v3517 = vmul.f32 %v3493, %v606
        %v3518 = vmul.f32 %v3495, %v606
        %v3519 = vmul.f32 %v3497, %v606
        %v3520 = vmul.f32 %v3499, %v606
        %v3521 = vmul.f32 %v3501, %v606
        %v3522 = vmul.f32 %v3503, %v606
        %v3523 = vmul.f32 %v3505, %v606
        %v3524 = vmul.f32 %v3507, %v606
        %v3525 = vmul.f32 %v3509, %v606
        %v3526 = vsub.f32 %v3460, %v3510
        %v3527 = vsub.f32 %v3461, %v3511
        %v3528 = vsub.f32 %v3462, %v3512
        %v3529 = vsub.f32 %v3463, %v3513
        %v3530 = vsub.f32 %v3464, %v3514
        %v3531 = vsub.f32 %v3465, %v3515
        %v3532 = vsub.f32 %v3466, %v3516
        %v3533 = vsub.f32 %v3467, %v3517
        %v3534 = vsub.f32 %v3468, %v3518
        %v3535 = vsub.f32 %v3469, %v3519
        %v3536 = vsub.f32 %v3470, %v3520
        %v3537 = vsub.f32 %v3471, %v3521
        %v3538 = vsub.f32 %v3472, %v3522
        %v3539 = vsub.f32 %v3473, %v3523
        %v3540 = vsub.f32 %v3474, %v3524
        %v3541 = vsub.f32 %v3475, %v3525
        %v3542 = vmul.f32 %v3526, %v3526
        %v3543 = vmul.f32 %v3527, %v3527
        %v3544 = vmul.f32 %v3528, %v3528
        %v3545 = vmul.f32 %v3529, %v3529
        %v3546 = vmul.f32 %v3530, %v3530
        %v3547 = vmul.f32 %v3531, %v3531
        %v3548 = vmul.f32 %v3532, %v3532
        %v3549 = vmul.f32 %v3533, %v3533
        %v3550 = vmul.f32 %v3534, %v3534
        %v3551 = vmul.f32 %v3535, %v3535
        %v3552 = vmul.f32 %v3536, %v3536
        %v3553 = vmul.f32 %v3537, %v3537
        %v3554 = vmul.f32 %v3538, %v3538
        %v3555 = vmul.f32 %v3539, %v3539
        %v3556 = vmul.f32 %v3540, %v3540
        %v3557 = vmul.f32 %v3541, %v3541
        %3558 = vadd.xlane.f32.xlu0 %v3542
        %v3559 = vpop.xlane.xlu0 %3558
        %3560 = vadd.xlane.f32.xlu0 %v3543
        %v3561 = vpop.xlane.xlu0 %3560
        %3562 = vadd.xlane.f32.xlu0 %v3544
        %v3563 = vpop.xlane.xlu0 %3562
        %3564 = vadd.xlane.f32.xlu0 %v3545
        %v3565 = vpop.xlane.xlu0 %3564
        %3566 = vadd.xlane.f32.xlu0 %v3546
        %v3567 = vpop.xlane.xlu0 %3566
        %3568 = vadd.xlane.f32.xlu0 %v3547
        %v3569 = vpop.xlane.xlu0 %3568
        %3570 = vadd.xlane.f32.xlu0 %v3548
        %v3571 = vpop.xlane.xlu0 %3570
        %3572 = vadd.xlane.f32.xlu0 %v3549
        %v3573 = vpop.xlane.xlu0 %3572
        %3574 = vadd.xlane.f32.xlu0 %v3550
        %v3575 = vpop.xlane.xlu0 %3574
        %3576 = vadd.xlane.f32.xlu0 %v3551
        %v3577 = vpop.xlane.xlu0 %3576
        %3578 = vadd.xlane.f32.xlu0 %v3552
        %v3579 = vpop.xlane.xlu0 %3578
        %3580 = vadd.xlane.f32.xlu0 %v3553
        %v3581 = vpop.xlane.xlu0 %3580
        %3582 = vadd.xlane.f32.xlu0 %v3554
        %v3583 = vpop.xlane.xlu0 %3582
        %3584 = vadd.xlane.f32.xlu0 %v3555
        %v3585 = vpop.xlane.xlu0 %3584
        %3586 = vadd.xlane.f32.xlu0 %v3556
        %v3587 = vpop.xlane.xlu0 %3586
        %3588 = vadd.xlane.f32.xlu0 %v3557
        %v3589 = vpop.xlane.xlu0 %3588
        %v3590 = vmul.f32 %v3559, %v606
        %v3591 = vmul.f32 %v3561, %v606
        %v3592 = vmul.f32 %v3563, %v606
        %v3593 = vmul.f32 %v3565, %v606
        %v3594 = vmul.f32 %v3567, %v606
        %v3595 = vmul.f32 %v3569, %v606
        %v3596 = vmul.f32 %v3571, %v606
        %v3597 = vmul.f32 %v3573, %v606
        %v3598 = vmul.f32 %v3575, %v606
        %v3599 = vmul.f32 %v3577, %v606
        %v3600 = vmul.f32 %v3579, %v606
        %v3601 = vmul.f32 %v3581, %v606
        %v3602 = vmul.f32 %v3583, %v606
        %v3603 = vmul.f32 %v3585, %v606
        %v3604 = vmul.f32 %v3587, %v606
        %v3605 = vmul.f32 %v3589, %v606
        %v3606 = vadd.f32 %v3590, 1e-05
        %v3607 = vadd.f32 %v3591, 1e-05
        %v3608 = vadd.f32 %v3592, 1e-05
        %v3609 = vadd.f32 %v3593, 1e-05
        %v3610 = vadd.f32 %v3594, 1e-05
        %v3611 = vadd.f32 %v3595, 1e-05
        %v3612 = vadd.f32 %v3596, 1e-05
        %v3613 = vadd.f32 %v3597, 1e-05
        %v3614 = vadd.f32 %v3598, 1e-05
        %v3615 = vadd.f32 %v3599, 1e-05
        %v3616 = vadd.f32 %v3600, 1e-05
        %v3617 = vadd.f32 %v3601, 1e-05
        %v3618 = vadd.f32 %v3602, 1e-05
        %v3619 = vadd.f32 %v3603, 1e-05
        %v3620 = vadd.f32 %v3604, 1e-05
        %v3621 = vadd.f32 %v3605, 1e-05
        %v3622 = vrsqrt.pop %v3606
        %v3623 = vmul.f32 %v3622, %v3606
        %v3624 = vmul.f32 %v3623, %v3622
        %v3625 = vmul.f32 0.5, %v3624
        %v3626 = vsub.f32 1.5, %v3625
        %v3627 = vmul.f32 %v3622, %v3626
        %vm3628 = vweird.f32 %v3606
        %vm3629 = vweird.f32 %v3622
        %vm3630 = vmor %vm3628, %vm3629
        %v3631 = vsel %vm3630, %v3622, %v3627
        %v3632 = vrsqrt.pop %v3607
        %v3633 = vmul.f32 %v3632, %v3607
        %v3634 = vmul.f32 %v3633, %v3632
        %v3635 = vmul.f32 0.5, %v3634
        %v3636 = vsub.f32 1.5, %v3635
        %v3637 = vmul.f32 %v3632, %v3636
        %vm3638 = vweird.f32 %v3607
        %vm3639 = vweird.f32 %v3632
        %vm3640 = vmor %vm3638, %vm3639
        %v3641 = vsel %vm3640, %v3632, %v3637
        %v3642 = vrsqrt.pop %v3608
        %v3643 = vmul.f32 %v3642, %v3608
        %v3644 = vmul.f32 %v3643, %v3642
        %v3645 = vmul.f32 0.5, %v3644
        %v3646 = vsub.f32 1.5, %v3645
        %v3647 = vmul.f32 %v3642, %v3646
        %vm3648 = vweird.f32 %v3608
        %vm3649 = vweird.f32 %v3642
        %vm3650 = vmor %vm3648, %vm3649
        %v3651 = vsel %vm3650, %v3642, %v3647
        %v3652 = vrsqrt.pop %v3609
        %v3653 = vmul.f32 %v3652, %v3609
        %v3654 = vmul.f32 %v3653, %v3652
        %v3655 = vmul.f32 0.5, %v3654
        %v3656 = vsub.f32 1.5, %v3655
        %v3657 = vmul.f32 %v3652, %v3656
        %vm3658 = vweird.f32 %v3609
        %vm3659 = vweird.f32 %v3652
        %vm3660 = vmor %vm3658, %vm3659
        %v3661 = vsel %vm3660, %v3652, %v3657
        %v3662 = vrsqrt.pop %v3610
        %v3663 = vmul.f32 %v3662, %v3610
        %v3664 = vmul.f32 %v3663, %v3662
        %v3665 = vmul.f32 0.5, %v3664
        %v3666 = vsub.f32 1.5, %v3665
        %v3667 = vmul.f32 %v3662, %v3666
        %vm3668 = vweird.f32 %v3610
        %vm3669 = vweird.f32 %v3662
        %vm3670 = vmor %vm3668, %vm3669
        %v3671 = vsel %vm3670, %v3662, %v3667
        %v3672 = vrsqrt.pop %v3611
        %v3673 = vmul.f32 %v3672, %v3611
        %v3674 = vmul.f32 %v3673, %v3672
        %v3675 = vmul.f32 0.5, %v3674
        %v3676 = vsub.f32 1.5, %v3675
        %v3677 = vmul.f32 %v3672, %v3676
        %vm3678 = vweird.f32 %v3611
        %vm3679 = vweird.f32 %v3672
        %vm3680 = vmor %vm3678, %vm3679
        %v3681 = vsel %vm3680, %v3672, %v3677
        %v3682 = vrsqrt.pop %v3612
        %v3683 = vmul.f32 %v3682, %v3612
        %v3684 = vmul.f32 %v3683, %v3682
        %v3685 = vmul.f32 0.5, %v3684
        %v3686 = vsub.f32 1.5, %v3685
        %v3687 = vmul.f32 %v3682, %v3686
        %vm3688 = vweird.f32 %v3612
        %vm3689 = vweird.f32 %v3682
        %vm3690 = vmor %vm3688, %vm3689
        %v3691 = vsel %vm3690, %v3682, %v3687
        %v3692 = vrsqrt.pop %v3613
        %v3693 = vmul.f32 %v3692, %v3613
        %v3694 = vmul.f32 %v3693, %v3692
        %v3695 = vmul.f32 0.5, %v3694
        %v3696 = vsub.f32 1.5, %v3695
        %v3697 = vmul.f32 %v3692, %v3696
        %vm3698 = vweird.f32 %v3613
        %vm3699 = vweird.f32 %v3692
        %vm3700 = vmor %vm3698, %vm3699
        %v3701 = vsel %vm3700, %v3692, %v3697
        %v3702 = vrsqrt.pop %v3614
        %v3703 = vmul.f32 %v3702, %v3614
        %v3704 = vmul.f32 %v3703, %v3702
        %v3705 = vmul.f32 0.5, %v3704
        %v3706 = vsub.f32 1.5, %v3705
        %v3707 = vmul.f32 %v3702, %v3706
        %vm3708 = vweird.f32 %v3614
        %vm3709 = vweird.f32 %v3702
        %vm3710 = vmor %vm3708, %vm3709
        %v3711 = vsel %vm3710, %v3702, %v3707
        %v3712 = vrsqrt.pop %v3615
        %v3713 = vmul.f32 %v3712, %v3615
        %v3714 = vmul.f32 %v3713, %v3712
        %v3715 = vmul.f32 0.5, %v3714
        %v3716 = vsub.f32 1.5, %v3715
        %v3717 = vmul.f32 %v3712, %v3716
        %vm3718 = vweird.f32 %v3615
        %vm3719 = vweird.f32 %v3712
        %vm3720 = vmor %vm3718, %vm3719
        %v3721 = vsel %vm3720, %v3712, %v3717
        %v3722 = vrsqrt.pop %v3616
        %v3723 = vmul.f32 %v3722, %v3616
        %v3724 = vmul.f32 %v3723, %v3722
        %v3725 = vmul.f32 0.5, %v3724
        %v3726 = vsub.f32 1.5, %v3725
        %v3727 = vmul.f32 %v3722, %v3726
        %vm3728 = vweird.f32 %v3616
        %vm3729 = vweird.f32 %v3722
        %vm3730 = vmor %vm3728, %vm3729
        %v3731 = vsel %vm3730, %v3722, %v3727
        %v3732 = vrsqrt.pop %v3617
        %v3733 = vmul.f32 %v3732, %v3617
        %v3734 = vmul.f32 %v3733, %v3732
        %v3735 = vmul.f32 0.5, %v3734
        %v3736 = vsub.f32 1.5, %v3735
        %v3737 = vmul.f32 %v3732, %v3736
        %vm3738 = vweird.f32 %v3617
        %vm3739 = vweird.f32 %v3732
        %vm3740 = vmor %vm3738, %vm3739
        %v3741 = vsel %vm3740, %v3732, %v3737
        %v3742 = vrsqrt.pop %v3618
        %v3743 = vmul.f32 %v3742, %v3618
        %v3744 = vmul.f32 %v3743, %v3742
        %v3745 = vmul.f32 0.5, %v3744
        %v3746 = vsub.f32 1.5, %v3745
        %v3747 = vmul.f32 %v3742, %v3746
        %vm3748 = vweird.f32 %v3618
        %vm3749 = vweird.f32 %v3742
        %vm3750 = vmor %vm3748, %vm3749
        %v3751 = vsel %vm3750, %v3742, %v3747
        %v3752 = vrsqrt.pop %v3619
        %v3753 = vmul.f32 %v3752, %v3619
        %v3754 = vmul.f32 %v3753, %v3752
        %v3755 = vmul.f32 0.5, %v3754
        %v3756 = vsub.f32 1.5, %v3755
        %v3757 = vmul.f32 %v3752, %v3756
        %vm3758 = vweird.f32 %v3619
        %vm3759 = vweird.f32 %v3752
        %vm3760 = vmor %vm3758, %vm3759
        %v3761 = vsel %vm3760, %v3752, %v3757
        %v3762 = vrsqrt.pop %v3620
        %v3763 = vmul.f32 %v3762, %v3620
        %v3764 = vmul.f32 %v3763, %v3762
        %v3765 = vmul.f32 0.5, %v3764
        %v3766 = vsub.f32 1.5, %v3765
        %v3767 = vmul.f32 %v3762, %v3766
        %vm3768 = vweird.f32 %v3620
        %vm3769 = vweird.f32 %v3762
        %vm3770 = vmor %vm3768, %vm3769
        %v3771 = vsel %vm3770, %v3762, %v3767
        %v3772 = vrsqrt.pop %v3621
        %v3773 = vmul.f32 %v3772, %v3621
        %v3774 = vmul.f32 %v3773, %v3772
        %v3775 = vmul.f32 0.5, %v3774
        %v3776 = vsub.f32 1.5, %v3775
        %v3777 = vmul.f32 %v3772, %v3776
        %vm3778 = vweird.f32 %v3621
        %vm3779 = vweird.f32 %v3772
        %vm3780 = vmor %vm3778, %vm3779
        %v3781 = vsel %vm3780, %v3772, %v3777
        %v3782 = vmul.f32 %v3526, %v3631
        %v3783 = vmul.f32 %v3527, %v3641
        %v3784 = vmul.f32 %v3528, %v3651
        %v3785 = vmul.f32 %v3529, %v3661
        %v3786 = vmul.f32 %v3530, %v3671
        %v3787 = vmul.f32 %v3531, %v3681
        %v3788 = vmul.f32 %v3532, %v3691
        %v3789 = vmul.f32 %v3533, %v3701
        %v3790 = vmul.f32 %v3534, %v3711
        %v3791 = vmul.f32 %v3535, %v3721
        %v3792 = vmul.f32 %v3536, %v3731
        %v3793 = vmul.f32 %v3537, %v3741
        %v3794 = vmul.f32 %v3538, %v3751
        %v3795 = vmul.f32 %v3539, %v3761
        %v3796 = vmul.f32 %v3540, %v3771
        %v3797 = vmul.f32 %v3541, %v3781
        %v3799 = vperm.slane %v3476, 0
        %v3801 = vmul.f32 %v3782, %v3799
        %v3802 = vmul.f32 %v3783, %v3799
        %v3803 = vmul.f32 %v3784, %v3799
        %v3804 = vmul.f32 %v3785, %v3799
        %v3805 = vmul.f32 %v3786, %v3799
        %v3806 = vmul.f32 %v3787, %v3799
        %v3807 = vmul.f32 %v3788, %v3799
        %v3808 = vmul.f32 %v3789, %v3799
        %v3809 = vmul.f32 %v3790, %v3799
        %v3810 = vmul.f32 %v3791, %v3799
        %v3811 = vmul.f32 %v3792, %v3799
        %v3812 = vmul.f32 %v3793, %v3799
        %v3813 = vmul.f32 %v3794, %v3799
        %v3814 = vmul.f32 %v3795, %v3799
        %v3815 = vmul.f32 %v3796, %v3799
        %v3816 = vmul.f32 %v3797, %v3799
        %v3818 = vperm.slane %v3477, 0
        %v3820 = vadd.f32 %v3801, %v3818
        %v3821 = vadd.f32 %v3802, %v3818
        %v3822 = vadd.f32 %v3803, %v3818
        %v3823 = vadd.f32 %v3804, %v3818
        %v3824 = vadd.f32 %v3805, %v3818
        %v3825 = vadd.f32 %v3806, %v3818
        %v3826 = vadd.f32 %v3807, %v3818
        %v3827 = vadd.f32 %v3808, %v3818
        %v3828 = vadd.f32 %v3809, %v3818
        %v3829 = vadd.f32 %v3810, %v3818
        %v3830 = vadd.f32 %v3811, %v3818
        %v3831 = vadd.f32 %v3812, %v3818
        %v3832 = vadd.f32 %v3813, %v3818
        %v3833 = vadd.f32 %v3814, %v3818
        %v3834 = vadd.f32 %v3815, %v3818
        %v3835 = vadd.f32 %v3816, %v3818
        %v3836 = vld [vmem:[%s11] sm:$0xff]
        %v3837 = vld [vmem:[%s11 + $0x8] sm:$0xff]
        %v3838 = vld [vmem:[%s11 + $0x10] sm:$0xff]
        %v3839 = vld [vmem:[%s11 + $0x18] sm:$0xff]
        %v3840 = vld [vmem:[%s11 + $0x20] sm:$0xff]
        %v3841 = vld [vmem:[%s11 + $0x28] sm:$0xff]
        %v3842 = vld [vmem:[%s11 + $0x30] sm:$0xff]
        %v3843 = vld [vmem:[%s11 + $0x38] sm:$0xff]
        %v3844 = vld [vmem:[%s11 + $0x40] sm:$0xff]
        %v3845 = vld [vmem:[%s11 + $0x48] sm:$0xff]
        %v3846 = vld [vmem:[%s11 + $0x50] sm:$0xff]
        %v3847 = vld [vmem:[%s11 + $0x58] sm:$0xff]
        %v3848 = vld [vmem:[%s11 + $0x60] sm:$0xff]
        %v3849 = vld [vmem:[%s11 + $0x68] sm:$0xff]
        %v3850 = vld [vmem:[%s11 + $0x70] sm:$0xff]
        %v3851 = vld [vmem:[%s11 + $0x78] sm:$0xff]
        %v3852 = vld [vmem:[%s11 + $0x80] sm:$0xff]
        %v3853 = vld [vmem:[%s11 + $0x88] sm:$0xff]
        %v3854 = vld [vmem:[%s11 + $0x90] sm:$0xff]
        %v3855 = vld [vmem:[%s11 + $0x98] sm:$0xff]
        %v3856 = vld [vmem:[%s11 + $0xa0] sm:$0xff]
        %v3857 = vld [vmem:[%s11 + $0xa8] sm:$0xff]
        %v3858 = vld [vmem:[%s11 + $0xb0] sm:$0xff]
        %v3859 = vld [vmem:[%s11 + $0xb8] sm:$0xff]
        %v3860 = vld [vmem:[%s11 + $0xc0] sm:$0xff]
        %v3861 = vld [vmem:[%s11 + $0xc8] sm:$0xff]
        %v3862 = vld [vmem:[%s11 + $0xd0] sm:$0xff]
        %v3863 = vld [vmem:[%s11 + $0xd8] sm:$0xff]
        %v3864 = vld [vmem:[%s11 + $0xe0] sm:$0xff]
        %v3865 = vld [vmem:[%s11 + $0xe8] sm:$0xff]
        %v3866 = vld [vmem:[%s11 + $0xf0] sm:$0xff]
        %v3867 = vld [vmem:[%s11 + $0xf8] sm:$0xff]
        %v3868 = vld [vmem:[%s12] sm:$0x3]
        %v3870 = vperm.slane %v3868, 0
        %v3871 = vperm.slane %v3868, 1
        %3874 = vmatpush.msra.mxu0 %v3866
        %3875 = vmatpush.msra.mxu0 %v3864
        %3876 = vmatpush.msra.mxu0 %v3862
        %3877 = vmatpush.msra.mxu0 %v3860
        %3878 = vmatpush.msra.mxu0 %v3858
        %3879 = vmatpush.msra.mxu0 %v3856
        %3880 = vmatpush.msra.mxu0 %v3854
        %3881 = vmatpush.msra.mxu0 %v3852
        %3882 = vmatpush.msra.mxu0 %v3850
        %3883 = vmatpush.msra.mxu0 %v3848
        %3884 = vmatpush.msra.mxu0 %v3846
        %3885 = vmatpush.msra.mxu0 %v3844
        %3886 = vmatpush.msra.mxu0 %v3842
        %3887 = vmatpush.msra.mxu0 %v3840
        %3888 = vmatpush.msra.mxu0 %v3838
        %3889 = vmatpush.msra.mxu0 %v3836
        %3890 = vmatmul.f32.gmra.mxu0 %v3820
        %v3891 = vpop.f32.mrf.mxu0
        %v3892 = vadd.f32 %v3870, %v3891
        %3893 = vmatmul.f32.gmra.mxu0 %v3821
        %v3894 = vpop.f32.mrf.mxu0
        %v3895 = vadd.f32 %v3870, %v3894
        %3896 = vmatmul.f32.gmra.mxu0 %v3822
        %v3897 = vpop.f32.mrf.mxu0
        %v3898 = vadd.f32 %v3870, %v3897
        %3899 = vmatmul.f32.gmra.mxu0 %v3823
        %v3900 = vpop.f32.mrf.mxu0
        %v3901 = vadd.f32 %v3870, %v3900
        %3902 = vmatmul.f32.gmra.mxu0 %v3824
        %v3903 = vpop.f32.mrf.mxu0
        %v3904 = vadd.f32 %v3870, %v3903
        %3905 = vmatmul.f32.gmra.mxu0 %v3825
        %v3906 = vpop.f32.mrf.mxu0
        %v3907 = vadd.f32 %v3870, %v3906
        %3908 = vmatmul.f32.gmra.mxu0 %v3826
        %v3909 = vpop.f32.mrf.mxu0
        %v3910 = vadd.f32 %v3870, %v3909
        %3911 = vmatmul.f32.gmra.mxu0 %v3827
        %v3912 = vpop.f32.mrf.mxu0
        %v3913 = vadd.f32 %v3870, %v3912
        %3914 = vmatmul.f32.gmra.mxu0 %v3828
        %v3915 = vpop.f32.mrf.mxu0
        %v3916 = vadd.f32 %v3870, %v3915
        %3917 = vmatmul.f32.gmra.mxu0 %v3829
        %v3918 = vpop.f32.mrf.mxu0
        %v3919 = vadd.f32 %v3870, %v3918
        %3920 = vmatmul.f32.gmra.mxu0 %v3830
        %v3921 = vpop.f32.mrf.mxu0
        %v3922 = vadd.f32 %v3870, %v3921
        %3923 = vmatmul.f32.gmra.mxu0 %v3831
        %v3924 = vpop.f32.mrf.mxu0
        %v3925 = vadd.f32 %v3870, %v3924
        %3926 = vmatmul.f32.gmra.mxu0 %v3832
        %v3927 = vpop.f32.mrf.mxu0
        %v3928 = vadd.f32 %v3870, %v3927
        %3929 = vmatmul.f32.gmra.mxu0 %v3833
        %v3930 = vpop.f32.mrf.mxu0
        %v3931 = vadd.f32 %v3870, %v3930
        %3932 = vmatmul.f32.gmra.mxu0 %v3834
        %v3933 = vpop.f32.mrf.mxu0
        %v3934 = vadd.f32 %v3870, %v3933
        %3935 = vmatmul.f32.gmra.mxu0 %v3835
        %v3936 = vpop.f32.mrf.mxu0
        %v3937 = vadd.f32 %v3870, %v3936
        %3938 = vdwg.mxu0
        %3939 = vmatpush.msra.mxu0 %v3867
        %3940 = vmatpush.msra.mxu0 %v3865
        %3941 = vmatpush.msra.mxu0 %v3863
        %3942 = vmatpush.msra.mxu0 %v3861
        %3943 = vmatpush.msra.mxu0 %v3859
        %3944 = vmatpush.msra.mxu0 %v3857
        %3945 = vmatpush.msra.mxu0 %v3855
        %3946 = vmatpush.msra.mxu0 %v3853
        %3947 = vmatpush.msra.mxu0 %v3851
        %3948 = vmatpush.msra.mxu0 %v3849
        %3949 = vmatpush.msra.mxu0 %v3847
        %3950 = vmatpush.msra.mxu0 %v3845
        %3951 = vmatpush.msra.mxu0 %v3843
        %3952 = vmatpush.msra.mxu0 %v3841
        %3953 = vmatpush.msra.mxu0 %v3839
        %3954 = vmatpush.msra.mxu0 %v3837
        %3955 = vmatmul.f32.gmra.mxu0 %v3820
        %v3956 = vpop.f32.mrf.mxu0
        %v3957 = vadd.f32 %v3871, %v3956
        %3958 = vmatmul.f32.gmra.mxu0 %v3821
        %v3959 = vpop.f32.mrf.mxu0
        %v3960 = vadd.f32 %v3871, %v3959
        %3961 = vmatmul.f32.gmra.mxu0 %v3822
        %v3962 = vpop.f32.mrf.mxu0
        %v3963 = vadd.f32 %v3871, %v3962
        %3964 = vmatmul.f32.gmra.mxu0 %v3823
        %v3965 = vpop.f32.mrf.mxu0
        %v3966 = vadd.f32 %v3871, %v3965
        %3967 = vmatmul.f32.gmra.mxu0 %v3824
        %v3968 = vpop.f32.mrf.mxu0
        %v3969 = vadd.f32 %v3871, %v3968
        %3970 = vmatmul.f32.gmra.mxu0 %v3825
        %v3971 = vpop.f32.mrf.mxu0
        %v3972 = vadd.f32 %v3871, %v3971
        %3973 = vmatmul.f32.gmra.mxu0 %v3826
        %v3974 = vpop.f32.mrf.mxu0
        %v3975 = vadd.f32 %v3871, %v3974
        %3976 = vmatmul.f32.gmra.mxu0 %v3827
        %v3977 = vpop.f32.mrf.mxu0
        %v3978 = vadd.f32 %v3871, %v3977
        %3979 = vmatmul.f32.gmra.mxu0 %v3828
        %v3980 = vpop.f32.mrf.mxu0
        %v3981 = vadd.f32 %v3871, %v3980
        %3982 = vmatmul.f32.gmra.mxu0 %v3829
        %v3983 = vpop.f32.mrf.mxu0
        %v3984 = vadd.f32 %v3871, %v3983
        %3985 = vmatmul.f32.gmra.mxu0 %v3830
        %v3986 = vpop.f32.mrf.mxu0
        %v3987 = vadd.f32 %v3871, %v3986
        %3988 = vmatmul.f32.gmra.mxu0 %v3831
        %v3989 = vpop.f32.mrf.mxu0
        %v3990 = vadd.f32 %v3871, %v3989
        %3991 = vmatmul.f32.gmra.mxu0 %v3832
        %v3992 = vpop.f32.mrf.mxu0
        %v3993 = vadd.f32 %v3871, %v3992
        %3994 = vmatmul.f32.gmra.mxu0 %v3833
        %v3995 = vpop.f32.mrf.mxu0
        %v3996 = vadd.f32 %v3871, %v3995
        %3997 = vmatmul.f32.gmra.mxu0 %v3834
        %v3998 = vpop.f32.mrf.mxu0
        %v3999 = vadd.f32 %v3871, %v3998
        %4000 = vmatmul.f32.gmra.mxu0 %v3835
        %v4001 = vpop.f32.mrf.mxu0
        %v4002 = vadd.f32 %v3871, %v4001
        %4003 = vdwg.mxu0
        %v4004 = vmax.f32 %v3892, 0.0
        %v4005 = vmax.f32 %v3957, 0.0
        %v4006 = vmax.f32 %v3895, 0.0
        %v4007 = vmax.f32 %v3960, 0.0
        %v4008 = vmax.f32 %v3898, 0.0
        %v4009 = vmax.f32 %v3963, 0.0
        %v4010 = vmax.f32 %v3901, 0.0
        %v4011 = vmax.f32 %v3966, 0.0
        %v4012 = vmax.f32 %v3904, 0.0
        %v4013 = vmax.f32 %v3969, 0.0
        %v4014 = vmax.f32 %v3907, 0.0
        %v4015 = vmax.f32 %v3972, 0.0
        %v4016 = vmax.f32 %v3910, 0.0
        %v4017 = vmax.f32 %v3975, 0.0
        %v4018 = vmax.f32 %v3913, 0.0
        %v4019 = vmax.f32 %v3978, 0.0
        %v4020 = vmax.f32 %v3916, 0.0
        %v4021 = vmax.f32 %v3981, 0.0
        %v4022 = vmax.f32 %v3919, 0.0
        %v4023 = vmax.f32 %v3984, 0.0
        %v4024 = vmax.f32 %v3922, 0.0
        %v4025 = vmax.f32 %v3987, 0.0
        %v4026 = vmax.f32 %v3925, 0.0
        %v4027 = vmax.f32 %v3990, 0.0
        %v4028 = vmax.f32 %v3928, 0.0
        %v4029 = vmax.f32 %v3993, 0.0
        %v4030 = vmax.f32 %v3931, 0.0
        %v4031 = vmax.f32 %v3996, 0.0
        %v4032 = vmax.f32 %v3934, 0.0
        %v4033 = vmax.f32 %v3999, 0.0
        %v4034 = vmax.f32 %v3937, 0.0
        %v4035 = vmax.f32 %v4002, 0.0
        %v4036 = vld [vmem:[%s13] sm:$0xff]
        %v4037 = vld [vmem:[%s13 + $0x8] sm:$0xff]
        %v4038 = vld [vmem:[%s13 + $0x10] sm:$0xff]
        %v4039 = vld [vmem:[%s13 + $0x18] sm:$0xff]
        %v4040 = vld [vmem:[%s13 + $0x20] sm:$0xff]
        %v4041 = vld [vmem:[%s13 + $0x28] sm:$0xff]
        %v4042 = vld [vmem:[%s13 + $0x30] sm:$0xff]
        %v4043 = vld [vmem:[%s13 + $0x38] sm:$0xff]
        %v4044 = vld [vmem:[%s13 + $0x40] sm:$0xff]
        %v4045 = vld [vmem:[%s13 + $0x48] sm:$0xff]
        %v4046 = vld [vmem:[%s13 + $0x50] sm:$0xff]
        %v4047 = vld [vmem:[%s13 + $0x58] sm:$0xff]
        %v4048 = vld [vmem:[%s13 + $0x60] sm:$0xff]
        %v4049 = vld [vmem:[%s13 + $0x68] sm:$0xff]
        %v4050 = vld [vmem:[%s13 + $0x70] sm:$0xff]
        %v4051 = vld [vmem:[%s13 + $0x78] sm:$0xff]
        %v4052 = vld [vmem:[%s13 + $0x80] sm:$0xff]
        %v4053 = vld [vmem:[%s13 + $0x88] sm:$0xff]
        %v4054 = vld [vmem:[%s13 + $0x90] sm:$0xff]
        %v4055 = vld [vmem:[%s13 + $0x98] sm:$0xff]
        %v4056 = vld [vmem:[%s13 + $0xa0] sm:$0xff]
        %v4057 = vld [vmem:[%s13 + $0xa8] sm:$0xff]
        %v4058 = vld [vmem:[%s13 + $0xb0] sm:$0xff]
        %v4059 = vld [vmem:[%s13 + $0xb8] sm:$0xff]
        %v4060 = vld [vmem:[%s13 + $0xc0] sm:$0xff]
        %v4061 = vld [vmem:[%s13 + $0xc8] sm:$0xff]
        %v4062 = vld [vmem:[%s13 + $0xd0] sm:$0xff]
        %v4063 = vld [vmem:[%s13 + $0xd8] sm:$0xff]
        %v4064 = vld [vmem:[%s13 + $0xe0] sm:$0xff]
        %v4065 = vld [vmem:[%s13 + $0xe8] sm:$0xff]
        %v4066 = vld [vmem:[%s13 + $0xf0] sm:$0xff]
        %v4067 = vld [vmem:[%s13 + $0xf8] sm:$0xff]
        %v4068 = vld [vmem:[%s14] sm:$0x1]
        %v4070 = vperm.slane %v4068, 0
        %4072 = vmatpush.msra.mxu0 %v4051
        %4073 = vmatpush.msra.mxu0 %v4050
        %4074 = vmatpush.msra.mxu0 %v4049
        %4075 = vmatpush.msra.mxu0 %v4048
        %4076 = vmatpush.msra.mxu0 %v4047
        %4077 = vmatpush.msra.mxu0 %v4046
        %4078 = vmatpush.msra.mxu0 %v4045
        %4079 = vmatpush.msra.mxu0 %v4044
        %4080 = vmatpush.msra.mxu0 %v4043
        %4081 = vmatpush.msra.mxu0 %v4042
        %4082 = vmatpush.msra.mxu0 %v4041
        %4083 = vmatpush.msra.mxu0 %v4040
        %4084 = vmatpush.msra.mxu0 %v4039
        %4085 = vmatpush.msra.mxu0 %v4038
        %4086 = vmatpush.msra.mxu0 %v4037
        %4087 = vmatpush.msra.mxu0 %v4036
        %4088 = vmatmul.f32.gmra.mxu0 %v4004
        %v4089 = vpop.f32.mrf.mxu0
        %v4090 = vadd.f32 %v4070, %v4089
        %4091 = vmatmul.f32.gmra.mxu0 %v4006
        %v4092 = vpop.f32.mrf.mxu0
        %v4093 = vadd.f32 %v4070, %v4092
        %4094 = vmatmul.f32.gmra.mxu0 %v4008
        %v4095 = vpop.f32.mrf.mxu0
        %v4096 = vadd.f32 %v4070, %v4095
        %4097 = vmatmul.f32.gmra.mxu0 %v4010
        %v4098 = vpop.f32.mrf.mxu0
        %v4099 = vadd.f32 %v4070, %v4098
        %4100 = vmatmul.f32.gmra.mxu0 %v4012
        %v4101 = vpop.f32.mrf.mxu0
        %v4102 = vadd.f32 %v4070, %v4101
        %4103 = vmatmul.f32.gmra.mxu0 %v4014
        %v4104 = vpop.f32.mrf.mxu0
        %v4105 = vadd.f32 %v4070, %v4104
        %4106 = vmatmul.f32.gmra.mxu0 %v4016
        %v4107 = vpop.f32.mrf.mxu0
        %v4108 = vadd.f32 %v4070, %v4107
        %4109 = vmatmul.f32.gmra.mxu0 %v4018
        %v4110 = vpop.f32.mrf.mxu0
        %v4111 = vadd.f32 %v4070, %v4110
        %4112 = vmatmul.f32.gmra.mxu0 %v4020
        %v4113 = vpop.f32.mrf.mxu0
        %v4114 = vadd.f32 %v4070, %v4113
        %4115 = vmatmul.f32.gmra.mxu0 %v4022
        %v4116 = vpop.f32.mrf.mxu0
        %v4117 = vadd.f32 %v4070, %v4116
        %4118 = vmatmul.f32.gmra.mxu0 %v4024
        %v4119 = vpop.f32.mrf.mxu0
        %v4120 = vadd.f32 %v4070, %v4119
        %4121 = vmatmul.f32.gmra.mxu0 %v4026
        %v4122 = vpop.f32.mrf.mxu0
        %v4123 = vadd.f32 %v4070, %v4122
        %4124 = vmatmul.f32.gmra.mxu0 %v4028
        %v4125 = vpop.f32.mrf.mxu0
        %v4126 = vadd.f32 %v4070, %v4125
        %4127 = vmatmul.f32.gmra.mxu0 %v4030
        %v4128 = vpop.f32.mrf.mxu0
        %v4129 = vadd.f32 %v4070, %v4128
        %4130 = vmatmul.f32.gmra.mxu0 %v4032
        %v4131 = vpop.f32.mrf.mxu0
        %v4132 = vadd.f32 %v4070, %v4131
        %4133 = vmatmul.f32.gmra.mxu0 %v4034
        %v4134 = vpop.f32.mrf.mxu0
        %v4135 = vadd.f32 %v4070, %v4134
        %4136 = vdwg.mxu0
        %4137 = vmatpush.msra.mxu0 %v4067
        %4138 = vmatpush.msra.mxu0 %v4066
        %4139 = vmatpush.msra.mxu0 %v4065
        %4140 = vmatpush.msra.mxu0 %v4064
        %4141 = vmatpush.msra.mxu0 %v4063
        %4142 = vmatpush.msra.mxu0 %v4062
        %4143 = vmatpush.msra.mxu0 %v4061
        %4144 = vmatpush.msra.mxu0 %v4060
        %4145 = vmatpush.msra.mxu0 %v4059
        %4146 = vmatpush.msra.mxu0 %v4058
        %4147 = vmatpush.msra.mxu0 %v4057
        %4148 = vmatpush.msra.mxu0 %v4056
        %4149 = vmatpush.msra.mxu0 %v4055
        %4150 = vmatpush.msra.mxu0 %v4054
        %4151 = vmatpush.msra.mxu0 %v4053
        %4152 = vmatpush.msra.mxu0 %v4052
        %4153 = vmatmul.f32.gmra.mxu0 %v4005
        %v4154 = vpop.f32.mrf.mxu0
        %v4155 = vadd.f32 %v4090, %v4154
        %4156 = vmatmul.f32.gmra.mxu0 %v4007
        %v4157 = vpop.f32.mrf.mxu0
        %v4158 = vadd.f32 %v4093, %v4157
        %4159 = vmatmul.f32.gmra.mxu0 %v4009
        %v4160 = vpop.f32.mrf.mxu0
        %v4161 = vadd.f32 %v4096, %v4160
        %4162 = vmatmul.f32.gmra.mxu0 %v4011
        %v4163 = vpop.f32.mrf.mxu0
        %v4164 = vadd.f32 %v4099, %v4163
        %4165 = vmatmul.f32.gmra.mxu0 %v4013
        %v4166 = vpop.f32.mrf.mxu0
        %v4167 = vadd.f32 %v4102, %v4166
        %4168 = vmatmul.f32.gmra.mxu0 %v4015
        %v4169 = vpop.f32.mrf.mxu0
        %v4170 = vadd.f32 %v4105, %v4169
        %4171 = vmatmul.f32.gmra.mxu0 %v4017
        %v4172 = vpop.f32.mrf.mxu0
        %v4173 = vadd.f32 %v4108, %v4172
        %4174 = vmatmul.f32.gmra.mxu0 %v4019
        %v4175 = vpop.f32.mrf.mxu0
        %v4176 = vadd.f32 %v4111, %v4175
        %4177 = vmatmul.f32.gmra.mxu0 %v4021
        %v4178 = vpop.f32.mrf.mxu0
        %v4179 = vadd.f32 %v4114, %v4178
        %4180 = vmatmul.f32.gmra.mxu0 %v4023
        %v4181 = vpop.f32.mrf.mxu0
        %v4182 = vadd.f32 %v4117, %v4181
        %4183 = vmatmul.f32.gmra.mxu0 %v4025
        %v4184 = vpop.f32.mrf.mxu0
        %v4185 = vadd.f32 %v4120, %v4184
        %4186 = vmatmul.f32.gmra.mxu0 %v4027
        %v4187 = vpop.f32.mrf.mxu0
        %v4188 = vadd.f32 %v4123, %v4187
        %4189 = vmatmul.f32.gmra.mxu0 %v4029
        %v4190 = vpop.f32.mrf.mxu0
        %v4191 = vadd.f32 %v4126, %v4190
        %4192 = vmatmul.f32.gmra.mxu0 %v4031
        %v4193 = vpop.f32.mrf.mxu0
        %v4194 = vadd.f32 %v4129, %v4193
        %4195 = vmatmul.f32.gmra.mxu0 %v4033
        %v4196 = vpop.f32.mrf.mxu0
        %v4197 = vadd.f32 %v4132, %v4196
        %4198 = vmatmul.f32.gmra.mxu0 %v4035
        %v4199 = vpop.f32.mrf.mxu0
        %v4200 = vadd.f32 %v4135, %v4199
        %4201 = vdwg.mxu0
        %v4202 = vadd.f32 %v3460, %v4155
        %v4203 = vadd.f32 %v3461, %v4158
        %v4204 = vadd.f32 %v3462, %v4161
        %v4205 = vadd.f32 %v3463, %v4164
        %v4206 = vadd.f32 %v3464, %v4167
        %v4207 = vadd.f32 %v3465, %v4170
        %v4208 = vadd.f32 %v3466, %v4173
        %v4209 = vadd.f32 %v3467, %v4176
        %v4210 = vadd.f32 %v3468, %v4179
        %v4211 = vadd.f32 %v3469, %v4182
        %v4212 = vadd.f32 %v3470, %v4185
        %v4213 = vadd.f32 %v3471, %v4188
        %v4214 = vadd.f32 %v3472, %v4191
        %v4215 = vadd.f32 %v3473, %v4194
        %v4216 = vadd.f32 %v3474, %v4197
        %v4217 = vadd.f32 %v3475, %v4200
        %v4218 = vld [vmem:[%s15] sm:$0x1]
        %v4219 = vld [vmem:[%s16] sm:$0x1]
        %4220 = vadd.xlane.f32.xlu0 %v4202
        %v4221 = vpop.xlane.xlu0 %4220
        %4222 = vadd.xlane.f32.xlu0 %v4203
        %v4223 = vpop.xlane.xlu0 %4222
        %4224 = vadd.xlane.f32.xlu0 %v4204
        %v4225 = vpop.xlane.xlu0 %4224
        %4226 = vadd.xlane.f32.xlu0 %v4205
        %v4227 = vpop.xlane.xlu0 %4226
        %4228 = vadd.xlane.f32.xlu0 %v4206
        %v4229 = vpop.xlane.xlu0 %4228
        %4230 = vadd.xlane.f32.xlu0 %v4207
        %v4231 = vpop.xlane.xlu0 %4230
        %4232 = vadd.xlane.f32.xlu0 %v4208
        %v4233 = vpop.xlane.xlu0 %4232
        %4234 = vadd.xlane.f32.xlu0 %v4209
        %v4235 = vpop.xlane.xlu0 %4234
        %4236 = vadd.xlane.f32.xlu0 %v4210
        %v4237 = vpop.xlane.xlu0 %4236
        %4238 = vadd.xlane.f32.xlu0 %v4211
        %v4239 = vpop.xlane.xlu0 %4238
        %4240 = vadd.xlane.f32.xlu0 %v4212
        %v4241 = vpop.xlane.xlu0 %4240
        %4242 = vadd.xlane.f32.xlu0 %v4213
        %v4243 = vpop.xlane.xlu0 %4242
        %4244 = vadd.xlane.f32.xlu0 %v4214
        %v4245 = vpop.xlane.xlu0 %4244
        %4246 = vadd.xlane.f32.xlu0 %v4215
        %v4247 = vpop.xlane.xlu0 %4246
        %4248 = vadd.xlane.f32.xlu0 %v4216
        %v4249 = vpop.xlane.xlu0 %4248
        %4250 = vadd.xlane.f32.xlu0 %v4217
        %v4251 = vpop.xlane.xlu0 %4250
        %v4252 = vmul.f32 %v4221, %v606
        %v4253 = vmul.f32 %v4223, %v606
        %v4254 = vmul.f32 %v4225, %v606
        %v4255 = vmul.f32 %v4227, %v606
        %v4256 = vmul.f32 %v4229, %v606
        %v4257 = vmul.f32 %v4231, %v606
        %v4258 = vmul.f32 %v4233, %v606
        %v4259 = vmul.f32 %v4235, %v606
        %v4260 = vmul.f32 %v4237, %v606
        %v4261 = vmul.f32 %v4239, %v606
        %v4262 = vmul.f32 %v4241, %v606
        %v4263 = vmul.f32 %v4243, %v606
        %v4264 = vmul.f32 %v4245, %v606
        %v4265 = vmul.f32 %v4247, %v606
        %v4266 = vmul.f32 %v4249, %v606
        %v4267 = vmul.f32 %v4251, %v606
        %v4268 = vsub.f32 %v4202, %v4252
        %v4269 = vsub.f32 %v4203, %v4253
        %v4270 = vsub.f32 %v4204, %v4254
        %v4271 = vsub.f32 %v4205, %v4255
        %v4272 = vsub.f32 %v4206, %v4256
        %v4273 = vsub.f32 %v4207, %v4257
        %v4274 = vsub.f32 %v4208, %v4258
        %v4275 = vsub.f32 %v4209, %v4259
        %v4276 = vsub.f32 %v4210, %v4260
        %v4277 = vsub.f32 %v4211, %v4261
        %v4278 = vsub.f32 %v4212, %v4262
        %v4279 = vsub.f32 %v4213, %v4263
        %v4280 = vsub.f32 %v4214, %v4264
        %v4281 = vsub.f32 %v4215, %v4265
        %v4282 = vsub.f32 %v4216, %v4266
        %v4283 = vsub.f32 %v4217, %v4267
        %v4284 = vmul.f32 %v4268, %v4268
        %v4285 = vmul.f32 %v4269, %v4269
        %v4286 = vmul.f32 %v4270, %v4270
        %v4287 = vmul.f32 %v4271, %v4271
        %v4288 = vmul.f32 %v4272, %v4272
        %v4289 = vmul.f32 %v4273, %v4273
        %v4290 = vmul.f32 %v4274, %v4274
        %v4291 = vmul.f32 %v4275, %v4275
        %v4292 = vmul.f32 %v4276, %v4276
        %v4293 = vmul.f32 %v4277, %v4277
        %v4294 = vmul.f32 %v4278, %v4278
        %v4295 = vmul.f32 %v4279, %v4279
        %v4296 = vmul.f32 %v4280, %v4280
        %v4297 = vmul.f32 %v4281, %v4281
        %v4298 = vmul.f32 %v4282, %v4282
        %v4299 = vmul.f32 %v4283, %v4283
        %4300 = vadd.xlane.f32.xlu0 %v4284
        %v4301 = vpop.xlane.xlu0 %4300
        %4302 = vadd.xlane.f32.xlu0 %v4285
        %v4303 = vpop.xlane.xlu0 %4302
        %4304 = vadd.xlane.f32.xlu0 %v4286
        %v4305 = vpop.xlane.xlu0 %4304
        %4306 = vadd.xlane.f32.xlu0 %v4287
        %v4307 = vpop.xlane.xlu0 %4306
        %4308 = vadd.xlane.f32.xlu0 %v4288
        %v4309 = vpop.xlane.xlu0 %4308
        %4310 = vadd.xlane.f32.xlu0 %v4289
        %v4311 = vpop.xlane.xlu0 %4310
        %4312 = vadd.xlane.f32.xlu0 %v4290
        %v4313 = vpop.xlane.xlu0 %4312
        %4314 = vadd.xlane.f32.xlu0 %v4291
        %v4315 = vpop.xlane.xlu0 %4314
        %4316 = vadd.xlane.f32.xlu0 %v4292
        %v4317 = vpop.xlane.xlu0 %4316
        %4318 = vadd.xlane.f32.xlu0 %v4293
        %v4319 = vpop.xlane.xlu0 %4318
        %4320 = vadd.xlane.f32.xlu0 %v4294
        %v4321 = vpop.xlane.xlu0 %4320
        %4322 = vadd.xlane.f32.xlu0 %v4295
        %v4323 = vpop.xlane.xlu0 %4322
        %4324 = vadd.xlane.f32.xlu0 %v4296
        %v4325 = vpop.xlane.xlu0 %4324
        %4326 = vadd.xlane.f32.xlu0 %v4297
        %v4327 = vpop.xlane.xlu0 %4326
        %4328 = vadd.xlane.f32.xlu0 %v4298
        %v4329 = vpop.xlane.xlu0 %4328
        %4330 = vadd.xlane.f32.xlu0 %v4299
        %v4331 = vpop.xlane.xlu0 %4330
        %v4332 = vmul.f32 %v4301, %v606
        %v4333 = vmul.f32 %v4303, %v606
        %v4334 = vmul.f32 %v4305, %v606
        %v4335 = vmul.f32 %v4307, %v606
        %v4336 = vmul.f32 %v4309, %v606
        %v4337 = vmul.f32 %v4311, %v606
        %v4338 = vmul.f32 %v4313, %v606
        %v4339 = vmul.f32 %v4315, %v606
        %v4340 = vmul.f32 %v4317, %v606
        %v4341 = vmul.f32 %v4319, %v606
        %v4342 = vmul.f32 %v4321, %v606
        %v4343 = vmul.f32 %v4323, %v606
        %v4344 = vmul.f32 %v4325, %v606
        %v4345 = vmul.f32 %v4327, %v606
        %v4346 = vmul.f32 %v4329, %v606
        %v4347 = vmul.f32 %v4331, %v606
        %v4348 = vadd.f32 %v4332, 1e-05
        %v4349 = vadd.f32 %v4333, 1e-05
        %v4350 = vadd.f32 %v4334, 1e-05
        %v4351 = vadd.f32 %v4335, 1e-05
        %v4352 = vadd.f32 %v4336, 1e-05
        %v4353 = vadd.f32 %v4337, 1e-05
        %v4354 = vadd.f32 %v4338, 1e-05
        %v4355 = vadd.f32 %v4339, 1e-05
        %v4356 = vadd.f32 %v4340, 1e-05
        %v4357 = vadd.f32 %v4341, 1e-05
        %v4358 = vadd.f32 %v4342, 1e-05
        %v4359 = vadd.f32 %v4343, 1e-05
        %v4360 = vadd.f32 %v4344, 1e-05
        %v4361 = vadd.f32 %v4345, 1e-05
        %v4362 = vadd.f32 %v4346, 1e-05
        %v4363 = vadd.f32 %v4347, 1e-05
        %v4364 = vrsqrt.pop %v4348
        %v4365 = vmul.f32 %v4364, %v4348
        %v4366 = vmul.f32 %v4365, %v4364
        %v4367 = vmul.f32 0.5, %v4366
        %v4368 = vsub.f32 1.5, %v4367
        %v4369 = vmul.f32 %v4364, %v4368
        %vm4370 = vweird.f32 %v4348
        %vm4371 = vweird.f32 %v4364
        %vm4372 = vmor %vm4370, %vm4371
        %v4373 = vsel %vm4372, %v4364, %v4369
        %v4374 = vrsqrt.pop %v4349
        %v4375 = vmul.f32 %v4374, %v4349
        %v4376 = vmul.f32 %v4375, %v4374
        %v4377 = vmul.f32 0.5, %v4376
        %v4378 = vsub.f32 1.5, %v4377
        %v4379 = vmul.f32 %v4374, %v4378
        %vm4380 = vweird.f32 %v4349
        %vm4381 = vweird.f32 %v4374
        %vm4382 = vmor %vm4380, %vm4381
        %v4383 = vsel %vm4382, %v4374, %v4379
        %v4384 = vrsqrt.pop %v4350
        %v4385 = vmul.f32 %v4384, %v4350
        %v4386 = vmul.f32 %v4385, %v4384
        %v4387 = vmul.f32 0.5, %v4386
        %v4388 = vsub.f32 1.5, %v4387
        %v4389 = vmul.f32 %v4384, %v4388
        %vm4390 = vweird.f32 %v4350
        %vm4391 = vweird.f32 %v4384
        %vm4392 = vmor %vm4390, %vm4391
        %v4393 = vsel %vm4392, %v4384, %v4389
        %v4394 = vrsqrt.pop %v4351
        %v4395 = vmul.f32 %v4394, %v4351
        %v4396 = vmul.f32 %v4395, %v4394
        %v4397 = vmul.f32 0.5, %v4396
        %v4398 = vsub.f32 1.5, %v4397
        %v4399 = vmul.f32 %v4394, %v4398
        %vm4400 = vweird.f32 %v4351
        %vm4401 = vweird.f32 %v4394
        %vm4402 = vmor %vm4400, %vm4401
        %v4403 = vsel %vm4402, %v4394, %v4399
        %v4404 = vrsqrt.pop %v4352
        %v4405 = vmul.f32 %v4404, %v4352
        %v4406 = vmul.f32 %v4405, %v4404
        %v4407 = vmul.f32 0.5, %v4406
        %v4408 = vsub.f32 1.5, %v4407
        %v4409 = vmul.f32 %v4404, %v4408
        %vm4410 = vweird.f32 %v4352
        %vm4411 = vweird.f32 %v4404
        %vm4412 = vmor %vm4410, %vm4411
        %v4413 = vsel %vm4412, %v4404, %v4409
        %v4414 = vrsqrt.pop %v4353
        %v4415 = vmul.f32 %v4414, %v4353
        %v4416 = vmul.f32 %v4415, %v4414
        %v4417 = vmul.f32 0.5, %v4416
        %v4418 = vsub.f32 1.5, %v4417
        %v4419 = vmul.f32 %v4414, %v4418
        %vm4420 = vweird.f32 %v4353
        %vm4421 = vweird.f32 %v4414
        %vm4422 = vmor %vm4420, %vm4421
        %v4423 = vsel %vm4422, %v4414, %v4419
        %v4424 = vrsqrt.pop %v4354
        %v4425 = vmul.f32 %v4424, %v4354
        %v4426 = vmul.f32 %v4425, %v4424
        %v4427 = vmul.f32 0.5, %v4426
        %v4428 = vsub.f32 1.5, %v4427
        %v4429 = vmul.f32 %v4424, %v4428
        %vm4430 = vweird.f32 %v4354
        %vm4431 = vweird.f32 %v4424
        %vm4432 = vmor %vm4430, %vm4431
        %v4433 = vsel %vm4432, %v4424, %v4429
        %v4434 = vrsqrt.pop %v4355
        %v4435 = vmul.f32 %v4434, %v4355
        %v4436 = vmul.f32 %v4435, %v4434
        %v4437 = vmul.f32 0.5, %v4436
        %v4438 = vsub.f32 1.5, %v4437
        %v4439 = vmul.f32 %v4434, %v4438
        %vm4440 = vweird.f32 %v4355
        %vm4441 = vweird.f32 %v4434
        %vm4442 = vmor %vm4440, %vm4441
        %v4443 = vsel %vm4442, %v4434, %v4439
        %v4444 = vrsqrt.pop %v4356
        %v4445 = vmul.f32 %v4444, %v4356
        %v4446 = vmul.f32 %v4445, %v4444
        %v4447 = vmul.f32 0.5, %v4446
        %v4448 = vsub.f32 1.5, %v4447
        %v4449 = vmul.f32 %v4444, %v4448
        %vm4450 = vweird.f32 %v4356
        %vm4451 = vweird.f32 %v4444
        %vm4452 = vmor %vm4450, %vm4451
        %v4453 = vsel %vm4452, %v4444, %v4449
        %v4454 = vrsqrt.pop %v4357
        %v4455 = vmul.f32 %v4454, %v4357
        %v4456 = vmul.f32 %v4455, %v4454
        %v4457 = vmul.f32 0.5, %v4456
        %v4458 = vsub.f32 1.5, %v4457
        %v4459 = vmul.f32 %v4454, %v4458
        %vm4460 = vweird.f32 %v4357
        %vm4461 = vweird.f32 %v4454
        %vm4462 = vmor %vm4460, %vm4461
        %v4463 = vsel %vm4462, %v4454, %v4459
        %v4464 = vrsqrt.pop %v4358
        %v4465 = vmul.f32 %v4464, %v4358
        %v4466 = vmul.f32 %v4465, %v4464
        %v4467 = vmul.f32 0.5, %v4466
        %v4468 = vsub.f32 1.5, %v4467
        %v4469 = vmul.f32 %v4464, %v4468
        %vm4470 = vweird.f32 %v4358
        %vm4471 = vweird.f32 %v4464
        %vm4472 = vmor %vm4470, %vm4471
        %v4473 = vsel %vm4472, %v4464, %v4469
        %v4474 = vrsqrt.pop %v4359
        %v4475 = vmul.f32 %v4474, %v4359
        %v4476 = vmul.f32 %v4475, %v4474
        %v4477 = vmul.f32 0.5, %v4476
        %v4478 = vsub.f32 1.5, %v4477
        %v4479 = vmul.f32 %v4474, %v4478
        %vm4480 = vweird.f32 %v4359
        %vm4481 = vweird.f32 %v4474
        %vm4482 = vmor %vm4480, %vm4481
        %v4483 = vsel %vm4482, %v4474, %v4479
        %v4484 = vrsqrt.pop %v4360
        %v4485 = vmul.f32 %v4484, %v4360
        %v4486 = vmul.f32 %v4485, %v4484
        %v4487 = vmul.f32 0.5, %v4486
        %v4488 = vsub.f32 1.5, %v4487
        %v4489 = vmul.f32 %v4484, %v4488
        %vm4490 = vweird.f32 %v4360
        %vm4491 = vweird.f32 %v4484
        %vm4492 = vmor %vm4490, %vm4491
        %v4493 = vsel %vm4492, %v4484, %v4489
        %v4494 = vrsqrt.pop %v4361
        %v4495 = vmul.f32 %v4494, %v4361
        %v4496 = vmul.f32 %v4495, %v4494
        %v4497 = vmul.f32 0.5, %v4496
        %v4498 = vsub.f32 1.5, %v4497
        %v4499 = vmul.f32 %v4494, %v4498
        %vm4500 = vweird.f32 %v4361
        %vm4501 = vweird.f32 %v4494
        %vm4502 = vmor %vm4500, %vm4501
        %v4503 = vsel %vm4502, %v4494, %v4499
        %v4504 = vrsqrt.pop %v4362
        %v4505 = vmul.f32 %v4504, %v4362
        %v4506 = vmul.f32 %v4505, %v4504
        %v4507 = vmul.f32 0.5, %v4506
        %v4508 = vsub.f32 1.5, %v4507
        %v4509 = vmul.f32 %v4504, %v4508
        %vm4510 = vweird.f32 %v4362
        %vm4511 = vweird.f32 %v4504
        %vm4512 = vmor %vm4510, %vm4511
        %v4513 = vsel %vm4512, %v4504, %v4509
        %v4514 = vrsqrt.pop %v4363
        %v4515 = vmul.f32 %v4514, %v4363
        %v4516 = vmul.f32 %v4515, %v4514
        %v4517 = vmul.f32 0.5, %v4516
        %v4518 = vsub.f32 1.5, %v4517
        %v4519 = vmul.f32 %v4514, %v4518
        %vm4520 = vweird.f32 %v4363
        %vm4521 = vweird.f32 %v4514
        %vm4522 = vmor %vm4520, %vm4521
        %v4523 = vsel %vm4522, %v4514, %v4519
        %v4524 = vmul.f32 %v4268, %v4373
        %v4525 = vmul.f32 %v4269, %v4383
        %v4526 = vmul.f32 %v4270, %v4393
        %v4527 = vmul.f32 %v4271, %v4403
        %v4528 = vmul.f32 %v4272, %v4413
        %v4529 = vmul.f32 %v4273, %v4423
        %v4530 = vmul.f32 %v4274, %v4433
        %v4531 = vmul.f32 %v4275, %v4443
        %v4532 = vmul.f32 %v4276, %v4453
        %v4533 = vmul.f32 %v4277, %v4463
        %v4534 = vmul.f32 %v4278, %v4473
        %v4535 = vmul.f32 %v4279, %v4483
        %v4536 = vmul.f32 %v4280, %v4493
        %v4537 = vmul.f32 %v4281, %v4503
        %v4538 = vmul.f32 %v4282, %v4513
        %v4539 = vmul.f32 %v4283, %v4523
        %v4541 = vperm.slane %v4218, 0
        %v4543 = vmul.f32 %v4524, %v4541
        %v4544 = vmul.f32 %v4525, %v4541
        %v4545 = vmul.f32 %v4526, %v4541
        %v4546 = vmul.f32 %v4527, %v4541
        %v4547 = vmul.f32 %v4528, %v4541
        %v4548 = vmul.f32 %v4529, %v4541
        %v4549 = vmul.f32 %v4530, %v4541
        %v4550 = vmul.f32 %v4531, %v4541
        %v4551 = vmul.f32 %v4532, %v4541
        %v4552 = vmul.f32 %v4533, %v4541
        %v4553 = vmul.f32 %v4534, %v4541
        %v4554 = vmul.f32 %v4535, %v4541
        %v4555 = vmul.f32 %v4536, %v4541
        %v4556 = vmul.f32 %v4537, %v4541
        %v4557 = vmul.f32 %v4538, %v4541
        %v4558 = vmul.f32 %v4539, %v4541
        %v4560 = vperm.slane %v4219, 0
        %v4562 = vadd.f32 %v4543, %v4560
        %v4563 = vadd.f32 %v4544, %v4560
        %v4564 = vadd.f32 %v4545, %v4560
        %v4565 = vadd.f32 %v4546, %v4560
        %v4566 = vadd.f32 %v4547, %v4560
        %v4567 = vadd.f32 %v4548, %v4560
        %v4568 = vadd.f32 %v4549, %v4560
        %v4569 = vadd.f32 %v4550, %v4560
        %v4570 = vadd.f32 %v4551, %v4560
        %v4571 = vadd.f32 %v4552, %v4560
        %v4572 = vadd.f32 %v4553, %v4560
        %v4573 = vadd.f32 %v4554, %v4560
        %v4574 = vadd.f32 %v4555, %v4560
        %v4575 = vadd.f32 %v4556, %v4560
        %v4576 = vadd.f32 %v4557, %v4560
        %v4577 = vadd.f32 %v4558, %v4560
        %4578 = vst [vmem:[%s542] sm:$0xff] %v4562
        %4579 = vst [vmem:[%s542 + $0x8] sm:$0xff] %v4563
        %4580 = vst [vmem:[%s542 + $0x10] sm:$0xff] %v4564
        %4581 = vst [vmem:[%s542 + $0x18] sm:$0xff] %v4565
        %4582 = vst [vmem:[%s542 + $0x20] sm:$0xff] %v4566
        %4583 = vst [vmem:[%s542 + $0x28] sm:$0xff] %v4567
        %4584 = vst [vmem:[%s542 + $0x30] sm:$0xff] %v4568
        %4585 = vst [vmem:[%s542 + $0x38] sm:$0xff] %v4569
        %4586 = vst [vmem:[%s542 + $0x40] sm:$0xff] %v4570
        %4587 = vst [vmem:[%s542 + $0x48] sm:$0xff] %v4571
        %4588 = vst [vmem:[%s542 + $0x50] sm:$0xff] %v4572
        %4589 = vst [vmem:[%s542 + $0x58] sm:$0xff] %v4573
        %4590 = vst [vmem:[%s542 + $0x60] sm:$0xff] %v4574
        %4591 = vst [vmem:[%s542 + $0x68] sm:$0xff] %v4575
        %4592 = vst [vmem:[%s542 + $0x70] sm:$0xff] %v4576
        %4593 = vst [vmem:[%s542 + $0x78] sm:$0xff] %v4577
        %s4594 = sand.u32 %s401, 1
        %s4595 = scalar_lea.sflag [#allocation7], %s4594
        %s4596 = sand.u32 %s401, 1
        %s4597 = smul.addr %s4596, 128
        %s4598 = scalar_lea.vmem [#allocation6], %s4597
        // Predicated region
        $region96: #{transformer_encoder_forward.1} parent=87 // pred_check
          %p4599 = pneg %p411
        $region97: #{transformer_encoder_forward.1} parent=87 // pred_check_branch
          %4601 = sbr.rel (%p4599) target = $region99
        $region98: #{transformer_encoder_forward.1} parent=87 // pred_region
          %s4602 = smul.u32 16, %s31
          %4604 = vsyncadd %s4595, 0
          %s4605 = smul.addr %s4602, 8
          %s4606 = scalar_lea.hbm %s17, %s4605
          %s4607 = sshll.u32 %s4598, 4
          %s4608 = int_to_ptr.vmem [resolvable:$true] %s4607
          %s4609 = sshll.u32 %s4606, 4
          %s4610 = int_to_ptr.hbm [resolvable:$true] %s4609
          %4615 = dma.vmem_to_hbm [thread:$0]  %s4608, 2048, %s4610, %s4595, 128, 128, 8
        $region99: #{transformer_encoder_forward.1} parent=87 // pred_fallthru
          _
      $region88: #{transformer_encoder_forward.1} parent=5 // pred_fallthru
        _
      %p4616 = scmp.le.s32.totalorder 2, %s26
      // Predicated region
      $region100: #{transformer_encoder_forward.1} parent=5 // pred_check
        %p4617 = pneg %p4616
      $region101: #{transformer_encoder_forward.1} parent=5 // pred_check_branch
        %4619 = sbr.rel (%p4617) target = $region103
      $region102: #{transformer_encoder_forward.1} parent=5 // pred_region
        %s4620 = ssub.s32 %s26, 2
        // Predicated region
        $region104: #{transformer_encoder_forward.1} parent=102 // pred_check
          %p4621 = pneg %p417
        $region105: #{transformer_encoder_forward.1} parent=102 // pred_check_branch
          %4623 = sbr.rel (%p4621) target = $region107
        $region106: #{transformer_encoder_forward.1} parent=102 // pred_region
          %s4624 = sand.u32 %s402, 1
          %s4625 = scalar_lea.sflag [#allocation7], %s4624
          %s4626 = sand.u32 %s402, 1
          %s4627 = smul.addr %s4626, 128
          %s4628 = scalar_lea.vmem [#allocation6], %s4627
          %4630 = dma.done %s4625, 2048
        $region107: #{transformer_encoder_forward.1} parent=102 // pred_fallthru
          _
      $region103: #{transformer_encoder_forward.1} parent=5 // pred_fallthru
        _
    $region6: #{transformer_encoder_forward.1} parent=1 // loop_footer
      %s30 = sadd.s32 1, %s26
    $region7: #{transformer_encoder_forward.1} parent=1 // loop_footer_branch
      %25 = sbr.rel target = $region3
    $region8: #{transformer_encoder_forward.1} parent=1 // loop_exit
      _
    %4631 = vsyncpa [#allocation7], 1
    %s4632 = scalar_lea.sflag [#allocation7], 1
    %4633 = vsyncpa %s4632, 1

</llo_original>
